<compile_context>
chip_gen: v7x
topology: tpu7x:2x2x1
jax: 0.10.0
libtpu: 0.0.40
codegen_flags: <defaults>
</compile_context>

<pallas_src>
import functools

import jax
import jax.numpy as jnp
from jax.experimental import pallas as pl
from jax.experimental.pallas import tpu as pltpu

MATMUL_DTYPE = jnp.float32   # set to jnp.bfloat16 on v6e/v7x for 2x MXU throughput


def _dot(a, b):
    """MXU matmul with f32 accumulation; weights arrive pre-cast, activations cast if needed."""
    if a.dtype != MATMUL_DTYPE:
        a = a.astype(MATMUL_DTYPE)
    if b.dtype != MATMUL_DTYPE:
        b = b.astype(MATMUL_DTYPE)
    return jnp.dot(a, b, preferred_element_type=jnp.float32)


def _layernorm(z, gamma, beta):
    """Single-pass LayerNorm: var = E[z^2] - E[z]^2 (one reduction sweep less)."""
    mu = jnp.mean(z, axis=-1, keepdims=True)
    var = jnp.mean(z * z, axis=-1, keepdims=True) - mu * mu
    return (z - mu) * jax.lax.rsqrt(var + 1e-5) * gamma + beta


def _attend_project_norm(q, k, v, res, wo, slab, attn_sc, nhead):
    """softmax(q k^T) v per head -> lane-dense scratch -> out proj -> +res -> LayerNorm.

    slab rows: 3 = out-proj bias, 4 = LN gamma, 5 = LN beta.  q is already scaled by 1/sqrt(hd).
    """
    D = q.shape[-1]
    hd = D // nhead
    kT = jnp.transpose(k)                                   # (D, S): ONE transpose, hoisted
    for h in range(nhead):                                  # static unroll over heads
        sl = slice(h * hd, (h + 1) * hd)
        s = _dot(q[:, sl], kT[sl, :])                       # (L, S)
        s = s - jnp.max(s, axis=-1, keepdims=True)
        p = jnp.exp(s)
        p = p * pl.reciprocal(jnp.sum(p, axis=-1, keepdims=True), approx=True)
        attn_sc[:, sl] = _dot(p, v[:, sl])                  # write head into its lane slice
    y = _dot(attn_sc[...], wo) + slab[3:4, :]               # out proj
    return _layernorm(res + y, slab[4:5, :], slab[5:6, :])


# ----------------------------------------------------------------------------
# Fused kernel bodies
# ----------------------------------------------------------------------------

def _self_attn_kernel(*refs, nhead, has_qpos):
    it = iter(refs)
    tgt_ref = next(it)
    qp_ref = next(it) if has_qpos else None
    wqk_ref = next(it)          # (D, 2D) packed q|k weights (shared input)
    wv_ref = next(it)           # (D, D)
    wo_ref = next(it)           # (D, D)
    slab_ref = next(it)         # (6, D): bq, bk, bv, bo, gamma, beta
    o_ref = next(it)
    attn_sc = next(it)          # (L, D) VMEM scratch

    x = tgt_ref[0]                                           # (L, D): residual AND value input
    xqk = x if qp_ref is None else x + qp_ref[0]             # fused positional add
    D = x.shape[-1]
    hd = D // nhead
    scale = 1.0 / float(hd) ** 0.5
    slab = slab_ref[...]

    qk = _dot(xqk, wqk_ref[...])                             # (L, 2D), one packed matmul
    q = (qk[:, :D] + slab[0:1, :]) * scale                   # scale folded into q (L*D elems)
    k = qk[:, D:] + slab[1:2, :]
    v = _dot(x, wv_ref[...]) + slab[2:3, :]
    o_ref[0] = _attend_project_norm(q, k, v, x, wo_ref[...], slab, attn_sc, nhead)


def _cross_attn_kernel(*refs, nhead, has_qpos, has_pos):
    it = iter(refs)
    tgt_ref = next(it)
    qp_ref = next(it) if has_qpos else None
    mem_ref = next(it)
    pp_ref = next(it) if has_pos else None
    wq_ref = next(it)
    wk_ref = next(it)
    wv_ref = next(it)
    wo_ref = next(it)
    slab_ref = next(it)         # (6, D): bq, bk, bv, bo, gamma, beta
    o_ref = next(it)
    attn_sc = next(it)          # (L, D) VMEM scratch

    x = tgt_ref[0]                                           # (L, D): residual
    xq = x if qp_ref is None else x + qp_ref[0]              # query input = tgt + query_pos
    m = mem_ref[0]                                           # (S, D): value input
    xk = m if pp_ref is None else m + pp_ref[0]              # key input = memory + pos
    D = x.shape[-1]
    hd = D // nhead
    scale = 1.0 / float(hd) ** 0.5
    slab = slab_ref[...]

    q = (_dot(xq, wq_ref[...]) + slab[0:1, :]) * scale
    k = _dot(xk, wk_ref[...]) + slab[1:2, :]
    v = _dot(m, wv_ref[...]) + slab[2:3, :]
    o_ref[0] = _attend_project_norm(q, k, v, x, wo_ref[...], slab, attn_sc, nhead)


def _ffn_kernel(x_ref, w1_ref, b1_ref, w2_ref, slab_ref, o_ref):
    x = x_ref[0]                                             # (L, D)
    slab = slab_ref[...]                                     # (3, D): b2, gamma, beta
    h = jnp.maximum(_dot(x, w1_ref[...]) + b1_ref[...], 0.0)  # relu in f32 on VPU
    y = _dot(h, w2_ref[...]) + slab[0:1, :]
    o_ref[0] = _layernorm(x + y, slab[1:2, :], slab[2:3, :])


# ----------------------------------------------------------------------------
# pallas_call wrappers
# ----------------------------------------------------------------------------

def _const_spec(shape):
    return pl.BlockSpec(shape, lambda b: (0,) * len(shape))


def _compiler_params():
    # Explicit VMEM budget (64 MiB is within physical VMEM on v5e/v6e/v7x); batch axis is
    # parallel so megacore/v7x shards it when B >= 2.
    return pltpu.CompilerParams(dimension_semantics=("parallel",),
                                vmem_limit_bytes=64 * 1024 * 1024)


def self_attn_block(t, qp, prepared, nhead):
    B, L, D = t.shape
    has_qpos = qp is not None
    seq_spec = pl.BlockSpec((1, L, D), lambda b: (b, 0, 0))
    in_specs = [seq_spec]
    args = [t]
    if has_qpos:
        in_specs.append(seq_spec)
        args.append(qp)
    in_specs += [_const_spec((D, 2 * D)), _const_spec((D, D)), _const_spec((D, D)),
                 _const_spec((6, D))]
    args += [prepared["sa_wqk"], prepared["sa_wv"], prepared["sa_wo"], prepared["sa_slab"]]
    return pl.pallas_call(
        functools.partial(_self_attn_kernel, nhead=nhead, has_qpos=has_qpos),
        out_shape=jax.ShapeDtypeStruct((B, L, D), jnp.float32),
        grid=(B,),
        in_specs=in_specs,
        out_specs=seq_spec,
        scratch_shapes=[pltpu.VMEM((L, D), jnp.float32)],
        compiler_params=_compiler_params(),
    )(*args)


def cross_attn_block(t, qp, m, pp, prepared, nhead):
    B, L, D = t.shape
    S = m.shape[1]
    has_qpos = qp is not None
    has_pos = pp is not None
    l_spec = pl.BlockSpec((1, L, D), lambda b: (b, 0, 0))
    s_spec = pl.BlockSpec((1, S, D), lambda b: (b, 0, 0))
    in_specs = [l_spec]
    args = [t]
    if has_qpos:
        in_specs.append(l_spec)
        args.append(qp)
    in_specs.append(s_spec)
    args.append(m)
    if has_pos:
        in_specs.append(s_spec)
        args.append(pp)
    in_specs += [_const_spec((D, D)), _const_spec((D, D)), _const_spec((D, D)),
                 _const_spec((D, D)), _const_spec((6, D))]
    args += [prepared["ca_wq"], prepared["ca_wk"], prepared["ca_wv"],
             prepared["ca_wo"], prepared["ca_slab"]]
    return pl.pallas_call(
        functools.partial(_cross_attn_kernel, nhead=nhead, has_qpos=has_qpos, has_pos=has_pos),
        out_shape=jax.ShapeDtypeStruct((B, L, D), jnp.float32),
        grid=(B,),
        in_specs=in_specs,
        out_specs=l_spec,
        scratch_shapes=[pltpu.VMEM((L, D), jnp.float32)],
        compiler_params=_compiler_params(),
    )(*args)


def ffn_block(t, prepared):
    B, L, D = t.shape
    F_ = prepared["w1"].shape[1]
    l_spec = pl.BlockSpec((1, L, D), lambda b: (b, 0, 0))
    return pl.pallas_call(
        _ffn_kernel,
        out_shape=jax.ShapeDtypeStruct((B, L, D), jnp.float32),
        grid=(B,),
        in_specs=[l_spec,
                  _const_spec((D, F_)), _const_spec((1, F_)),
                  _const_spec((F_, D)), _const_spec((3, D))],
        out_specs=l_spec,
        scratch_shapes=[],
        compiler_params=_compiler_params(),
    )(t, prepared["w1"], prepared["b1"], prepared["w2"], prepared["ffn_slab"])


# ----------------------------------------------------------------------------
# Layer forward (forward_post semantics, dropouts = identity in eval mode)
# ----------------------------------------------------------------------------

def prepare_params(params, matmul_dtype=MATMUL_DTYPE):
    """One-time weight preprocessing: slice + transpose + cast to MATMUL_DTYPE, pack bias slabs."""
    D = params["self_attn"]["out_proj_weight"].shape[0]

    def mha_parts(m):
        W, bias = m["in_proj_weight"], m["in_proj_bias"]
        return (W[:D], W[D:2 * D], W[2 * D:], bias[:D], bias[D:2 * D], bias[2 * D:],
                m["out_proj_weight"], m["out_proj_bias"])

    sa_wq, sa_wk, sa_wv, sa_bq, sa_bk, sa_bv, sa_wo, sa_bo = mha_parts(params["self_attn"])
    ca_wq, ca_wk, ca_wv, ca_bq, ca_bk, ca_bv, ca_wo, ca_bo = mha_parts(params["cross_attn"])

    return {
        # self-attn: q and k share the input (tgt + query_pos) -> packed (D, 2D) weight
        "sa_wqk": jnp.concatenate([sa_wq.T, sa_wk.T], axis=1).astype(matmul_dtype),
        "sa_wv": jnp.asarray(sa_wv.T, matmul_dtype),
        "sa_wo": jnp.asarray(sa_wo.T, matmul_dtype),
        "sa_slab": jnp.stack([sa_bq, sa_bk, sa_bv, sa_bo,
                              params["norm1_w"], params["norm1_b"]]).astype(jnp.float32),
        # cross-attn: q/k/v inputs all differ (tgt+qpos, mem+pos, mem) -> no packing
        "ca_wq": jnp.asarray(ca_wq.T, matmul_dtype),
        "ca_wk": jnp.asarray(ca_wk.T, matmul_dtype),
        "ca_wv": jnp.asarray(ca_wv.T, matmul_dtype),
        "ca_wo": jnp.asarray(ca_wo.T, matmul_dtype),
        "ca_slab": jnp.stack([ca_bq, ca_bk, ca_bv, ca_bo,
                              params["norm2_w"], params["norm2_b"]]).astype(jnp.float32),
        # FFN
        "w1": jnp.asarray(params["linear1_w"].T, matmul_dtype),      # (D, F)
        "b1": params["linear1_b"][None, :].astype(jnp.float32),      # (1, F)
        "w2": jnp.asarray(params["linear2_w"].T, matmul_dtype),      # (F, D)
        "ffn_slab": jnp.stack([params["linear2_b"],
                               params["norm3_w"], params["norm3_b"]]).astype(jnp.float32),
    }


def transformer_decoder_layer(tgt, memory, prepared, nhead, pos=None, query_pos=None):
    """tgt: (L, B, D), memory: (S, B, D) -> (L, B, D).  forward_post / normalize_before=False.

    Internally batch-major (B, L, D); positional adds are fused into the attention kernels so
    no (tgt+query_pos)/(memory+pos) intermediates hit HBM.
    """
    t = jnp.transpose(tgt, (1, 0, 2))
    m = jnp.transpose(memory, (1, 0, 2))
    qp = None if query_pos is None else jnp.transpose(query_pos, (1, 0, 2))
    pp = None if pos is None else jnp.transpose(pos, (1, 0, 2))

    t = self_attn_block(t, qp, prepared, nhead)            # self-attn + add + LN (fused)
    t = cross_attn_block(t, qp, m, pp, prepared, nhead)    # cross-attn + add + LN (fused)
    t = ffn_block(t, prepared)                             # FFN + add + LN (fused)
    return jnp.transpose(t, (1, 0, 2))


# ----------------------------------------------------------------------------
# Pure-JAX reference (correctness check)
# ----------------------------------------------------------------------------

def _ref_mha(query, key, value, p, nhead):
    L, B, D = query.shape
    S = key.shape[0]
    hd = D // nhead
    W, bias = p["in_proj_weight"], p["in_proj_bias"]
    q = query @ W[:D].T + bias[:D]
    k = key @ W[D:2 * D].T + bias[D:2 * D]
    v = value @ W[2 * D:].T + bias[2 * D:]
    q = q.reshape(L, B * nhead, hd).transpose(1, 0, 2) * (float(hd) ** -0.5)
    k = k.reshape(S, B * nhead, hd).transpose(1, 0, 2)
    v = v.reshape(S, B * nhead, hd).transpose(1, 0, 2)
    a = jax.nn.softmax(jnp.einsum("bld,bsd->bls", q, k), axis=-1)
    o = jnp.einsum("bls,bsd->bld", a, v).transpose(1, 0, 2).reshape(L, B, D)
    return o @ p["out_proj_weight"].T + p["out_proj_bias"]


def _ref_ln(x, g, b):
    mu = jnp.mean(x, axis=-1, keepdims=True)
    var = jnp.mean((x - mu) ** 2, axis=-1, keepdims=True)
    return (x - mu) * jax.lax.rsqrt(var + 1e-5) * g + b


def _ref_layer(tgt, memory, params, nhead, pos=None, query_pos=None):
    wp = lambda t, p: t if p is None else t + p
    q = k = wp(tgt, query_pos)
    tgt = _ref_ln(tgt + _ref_mha(q, k, tgt, params["self_attn"], nhead),
                  params["norm1_w"], params["norm1_b"])
    tgt = _ref_ln(tgt + _ref_mha(wp(tgt, query_pos), wp(memory, pos), memory,
                                 params["cross_attn"], nhead),
                  params["norm2_w"], params["norm2_b"])
    h = jnp.maximum(tgt @ params["linear1_w"].T + params["linear1_b"], 0.0)
    tgt2 = h @ params["linear2_w"].T + params["linear2_b"]
    return _ref_ln(tgt + tgt2, params["norm3_w"], params["norm3_b"])


# ----------------------------------------------------------------------------
# Parameter init + demo
# ----------------------------------------------------------------------------

def init_params(key, d_model, nhead, dim_ff):
    ks = jax.random.split(key, 12)

    def mha_params(k0, k1, k2, k3):
        return {
            "in_proj_weight": 0.05 * jax.random.normal(k0, (3 * d_model, d_model), jnp.float32),
            "in_proj_bias": 0.05 * jax.random.normal(k1, (3 * d_model,), jnp.float32),
            "out_proj_weight": 0.05 * jax.random.normal(k2, (d_model, d_model), jnp.float32),
            "out_proj_bias": 0.05 * jax.random.normal(k3, (d_model,), jnp.float32),
        }

    return {
        "self_attn": mha_params(ks[0], ks[1], ks[2], ks[3]),
        "cross_attn": mha_params(ks[4], ks[5], ks[6], ks[7]),
        "linear1_w": 0.05 * jax.random.normal(ks[8], (dim_ff, d_model), jnp.float32),
        "linear1_b": 0.05 * jax.random.normal(ks[9], (dim_ff,), jnp.float32),
        "linear2_w": 0.05 * jax.random.normal(ks[10], (d_model, dim_ff), jnp.float32),
        "linear2_b": 0.05 * jax.random.normal(ks[11], (d_model,), jnp.float32),
        "norm1_w": jnp.ones((d_model,), jnp.float32),
        "norm1_b": jnp.zeros((d_model,), jnp.float32),
        "norm2_w": jnp.ones((d_model,), jnp.float32),
        "norm2_b": jnp.zeros((d_model,), jnp.float32),
        "norm3_w": jnp.ones((d_model,), jnp.float32),
        "norm3_b": jnp.zeros((d_model,), jnp.float32),
    }


if __name__ == "__main__":
    d_model, nhead, dim_ff = 32, 4, 64
    L, S, B = 8, 12, 2

    key = jax.random.PRNGKey(0)
    kp, kt, km, kqp, kpp = jax.random.split(key, 5)

    params = init_params(kp, d_model, nhead, dim_ff)
    prepared = prepare_params(params)   # one-time slice / transpose / cast, outside the jit

    tgt = jax.random.normal(kt, (L, B, d_model), jnp.float32)
    memory = jax.random.normal(km, (S, B, d_model), jnp.float32)
    query_pos = 0.1 * jax.random.normal(kqp, (L, B, d_model), jnp.float32)
    pos = 0.1 * jax.random.normal(kpp, (S, B, d_model), jnp.float32)

    fwd = jax.jit(functools.partial(transformer_decoder_layer, nhead=nhead))
    out = fwd(tgt, memory, prepared, pos=pos, query_pos=query_pos)
    out = jax.block_until_ready(out)

    ref = _ref_layer(tgt, memory, params, nhead, pos=pos, query_pos=query_pos)
    assert out.shape == (L, B, d_model)
    # tolerance 1e-3: covers the approx (EUP) softmax reciprocal; with MATMUL_DTYPE=bfloat16
    # loosen to ~2e-2.
    assert jnp.allclose(out, ref, rtol=1e-3, atol=1e-3), "mismatch vs JAX reference"

    print("KERNEL_OK")
</pallas_src>

<mosaic_0001>
module attributes {stable_mosaic.version = 11 : i64} {
  func.func @_self_attn_kernel(%arg0: i32, %arg1: memref<1x8x32xf32, #tpu.memory_space<vmem>>, %arg2: memref<1x8x32xf32, #tpu.memory_space<vmem>>, %arg3: memref<32x64xf32, #tpu.memory_space<vmem>>, %arg4: memref<32x32xf32, #tpu.memory_space<vmem>>, %arg5: memref<32x32xf32, #tpu.memory_space<vmem>>, %arg6: memref<6x32xf32, #tpu.memory_space<vmem>>, %arg7: memref<1x8x32xf32, #tpu.memory_space<vmem>>, %arg8: memref<8x32xf32, #tpu.memory_space<vmem>>) attributes {dimension_semantics = [#tpu.dimension_semantics<parallel>], iteration_bounds = array<i64: 2>, scalar_prefetch = 0 : i64, scratch_operands = 1 : i64, tpu.core_type = #tpu.core_type<tc>, window_params = [{transform_indices = @transform_0, window_bounds = array<i64: 1, 8, 32>}, {transform_indices = @transform_1, window_bounds = array<i64: 1, 8, 32>}, {pipeline_mode = #tpu.pipeline_mode<synchronous>, transform_indices = @transform_2, window_bounds = array<i64: 32, 64>}, {pipeline_mode = #tpu.pipeline_mode<synchronous>, transform_indices = @transform_3, window_bounds = array<i64: 32, 32>}, {pipeline_mode = #tpu.pipeline_mode<synchronous>, transform_indices = @transform_4, window_bounds = array<i64: 32, 32>}, {pipeline_mode = #tpu.pipeline_mode<synchronous>, transform_indices = @transform_5, window_bounds = array<i64: 6, 32>}, {transform_indices = @transform_6, window_bounds = array<i64: 1, 8, 32>}]} {
    %c0 = arith.constant 0 : index
    %c0_0 = arith.constant 0 : index
    %c0_1 = arith.constant 0 : index
    %0 = vector.load %arg1[%c0, %c0_0, %c0_1] : memref<1x8x32xf32, #tpu.memory_space<vmem>>, vector<1x8x32xf32>
    %1 = vector.shape_cast %0 : vector<1x8x32xf32> to vector<8x32xf32>
    %c0_2 = arith.constant 0 : index
    %c0_3 = arith.constant 0 : index
    %c0_4 = arith.constant 0 : index
    %2 = vector.load %arg2[%c0_2, %c0_3, %c0_4] : memref<1x8x32xf32, #tpu.memory_space<vmem>>, vector<1x8x32xf32>
    %3 = vector.shape_cast %2 : vector<1x8x32xf32> to vector<8x32xf32>
    %4 = arith.addf %1, %3 : vector<8x32xf32>
    %c0_5 = arith.constant 0 : index
    %c0_6 = arith.constant 0 : index
    %5 = vector.load %arg6[%c0_5, %c0_6] : memref<6x32xf32, #tpu.memory_space<vmem>>, vector<6x32xf32>
    %c0_7 = arith.constant 0 : index
    %c0_8 = arith.constant 0 : index
    %6 = vector.load %arg3[%c0_7, %c0_8] : memref<32x64xf32, #tpu.memory_space<vmem>>, vector<32x64xf32>
    %cst = arith.constant dense<0.000000e+00> : vector<8x64xf32>
    %7 = tpu.matmul %4, %6, %cst {dimension_numbers = #tpu.dot_dimension_numbers<[1], [0], [0], [1], [0, 0, 1, 1], [], []>} : vector<8x32xf32>, vector<32x64xf32>, vector<8x64xf32> -> vector<8x64xf32>
    %8 = vector.extract_strided_slice %7 {offsets = [0, 0], sizes = [8, 32], strides = [1, 1]} : vector<8x64xf32> to vector<8x32xf32>
    %9 = vector.extract_strided_slice %5 {offsets = [0, 0], sizes = [1, 32], strides = [1, 1]} : vector<6x32xf32> to vector<1x32xf32>
    %10 = vector.broadcast %9 : vector<1x32xf32> to vector<8x32xf32>
    %11 = arith.addf %8, %10 : vector<8x32xf32>
    %cst_9 = arith.constant 0.353553385 : f32
    %12 = vector.broadcast %cst_9 : f32 to vector<8x32xf32>
    %13 = arith.mulf %11, %12 : vector<8x32xf32>
    %14 = vector.extract_strided_slice %7 {offsets = [0, 32], sizes = [8, 32], strides = [1, 1]} : vector<8x64xf32> to vector<8x32xf32>
    %15 = vector.extract_strided_slice %5 {offsets = [1, 0], sizes = [1, 32], strides = [1, 1]} : vector<6x32xf32> to vector<1x32xf32>
    %16 = vector.broadcast %15 : vector<1x32xf32> to vector<8x32xf32>
    %17 = arith.addf %14, %16 : vector<8x32xf32>
    %c0_10 = arith.constant 0 : index
    %c0_11 = arith.constant 0 : index
    %18 = vector.load %arg4[%c0_10, %c0_11] : memref<32x32xf32, #tpu.memory_space<vmem>>, vector<32x32xf32>
    %cst_12 = arith.constant dense<0.000000e+00> : vector<8x32xf32>
    %19 = tpu.matmul %1, %18, %cst_12 {dimension_numbers = #tpu.dot_dimension_numbers<[1], [0], [0], [1], [0, 0, 1, 1], [], []>} : vector<8x32xf32>, vector<32x32xf32>, vector<8x32xf32> -> vector<8x32xf32>
    %20 = vector.extract_strided_slice %5 {offsets = [2, 0], sizes = [1, 32], strides = [1, 1]} : vector<6x32xf32> to vector<1x32xf32>
    %21 = vector.broadcast %20 : vector<1x32xf32> to vector<8x32xf32>
    %22 = arith.addf %19, %21 : vector<8x32xf32>
    %c0_13 = arith.constant 0 : index
    %c0_14 = arith.constant 0 : index
    %23 = vector.load %arg5[%c0_13, %c0_14] : memref<32x32xf32, #tpu.memory_space<vmem>>, vector<32x32xf32>
    %24 = tpu.transpose %17, [1, 0] : vector<8x32xf32> -> vector<32x8xf32>
    %25 = vector.extract_strided_slice %13 {offsets = [0, 0], sizes = [8, 8], strides = [1, 1]} : vector<8x32xf32> to vector<8x8xf32>
    %26 = vector.extract_strided_slice %24 {offsets = [0, 0], sizes = [8, 8], strides = [1, 1]} : vector<32x8xf32> to vector<8x8xf32>
    %cst_15 = arith.constant dense<0.000000e+00> : vector<8x8xf32>
    %27 = tpu.matmul %25, %26, %cst_15 {dimension_numbers = #tpu.dot_dimension_numbers<[1], [0], [0], [1], [0, 0, 1, 1], [], []>} : vector<8x8xf32>, vector<8x8xf32>, vector<8x8xf32> -> vector<8x8xf32>
    %cst_16 = arith.constant dense<0xFF800000> : vector<8xf32>
    %28 = vector.multi_reduction <maximumf>, %27, %cst_16 [1] : vector<8x8xf32> to vector<8xf32>
    %29 = vector.shape_cast %28 : vector<8xf32> to vector<8x1xf32>
    %30 = vector.broadcast %29 : vector<8x1xf32> to vector<8x8xf32>
    %31 = arith.subf %27, %30 : vector<8x8xf32>
    %32 = math.exp %31 : vector<8x8xf32>
    %cst_17 = arith.constant dense<0.000000e+00> : vector<8xf32>
    %33 = vector.multi_reduction <add>, %32, %cst_17 [1] : vector<8x8xf32> to vector<8xf32>
    %34 = vector.shape_cast %33 : vector<8xf32> to vector<8x1xf32>
    %35 = tpu.reciprocal %34 {approx = true} : vector<8x1xf32> -> vector<8x1xf32>
    %36 = vector.broadcast %35 : vector<8x1xf32> to vector<8x8xf32>
    %37 = arith.mulf %32, %36 : vector<8x8xf32>
    %38 = vector.extract_strided_slice %22 {offsets = [0, 0], sizes = [8, 8], strides = [1, 1]} : vector<8x32xf32> to vector<8x8xf32>
    %cst_18 = arith.constant dense<0.000000e+00> : vector<8x8xf32>
    %39 = tpu.matmul %37, %38, %cst_18 {dimension_numbers = #tpu.dot_dimension_numbers<[1], [0], [0], [1], [0, 0, 1, 1], [], []>} : vector<8x8xf32>, vector<8x8xf32>, vector<8x8xf32> -> vector<8x8xf32>
    %c0_19 = arith.constant 0 : index
    %c0_20 = arith.constant 0 : index
    %40 = vector.load %arg8[%c0_19, %c0_20] : memref<8x32xf32, #tpu.memory_space<vmem>>, vector<8x8xf32>
    tpu.vector_store %arg8[%c0_19, %c0_20], %39 {strides = array<i32>} : memref<8x32xf32, #tpu.memory_space<vmem>>, vector<8x8xf32>,
    %41 = vector.extract_strided_slice %13 {offsets = [0, 8], sizes = [8, 8], strides = [1, 1]} : vector<8x32xf32> to vector<8x8xf32>
    %42 = vector.extract_strided_slice %24 {offsets = [8, 0], sizes = [8, 8], strides = [1, 1]} : vector<32x8xf32> to vector<8x8xf32>
    %cst_21 = arith.constant dense<0.000000e+00> : vector<8x8xf32>
    %43 = tpu.matmul %41, %42, %cst_21 {dimension_numbers = #tpu.dot_dimension_numbers<[1], [0], [0], [1], [0, 0, 1, 1], [], []>} : vector<8x8xf32>, vector<8x8xf32>, vector<8x8xf32> -> vector<8x8xf32>
    %cst_22 = arith.constant dense<0xFF800000> : vector<8xf32>
    %44 = vector.multi_reduction <maximumf>, %43, %cst_22 [1] : vector<8x8xf32> to vector<8xf32>
    %45 = vector.shape_cast %44 : vector<8xf32> to vector<8x1xf32>
    %46 = vector.broadcast %45 : vector<8x1xf32> to vector<8x8xf32>
    %47 = arith.subf %43, %46 : vector<8x8xf32>
    %48 = math.exp %47 : vector<8x8xf32>
    %cst_23 = arith.constant dense<0.000000e+00> : vector<8xf32>
    %49 = vector.multi_reduction <add>, %48, %cst_23 [1] : vector<8x8xf32> to vector<8xf32>
    %50 = vector.shape_cast %49 : vector<8xf32> to vector<8x1xf32>
    %51 = tpu.reciprocal %50 {approx = true} : vector<8x1xf32> -> vector<8x1xf32>
    %52 = vector.broadcast %51 : vector<8x1xf32> to vector<8x8xf32>
    %53 = arith.mulf %48, %52 : vector<8x8xf32>
    %54 = vector.extract_strided_slice %22 {offsets = [0, 8], sizes = [8, 8], strides = [1, 1]} : vector<8x32xf32> to vector<8x8xf32>
    %cst_24 = arith.constant dense<0.000000e+00> : vector<8x8xf32>
    %55 = tpu.matmul %53, %54, %cst_24 {dimension_numbers = #tpu.dot_dimension_numbers<[1], [0], [0], [1], [0, 0, 1, 1], [], []>} : vector<8x8xf32>, vector<8x8xf32>, vector<8x8xf32> -> vector<8x8xf32>
    %c0_25 = arith.constant 0 : index
    %c8 = arith.constant 8 : index
    %56 = vector.load %arg8[%c0_25, %c8] : memref<8x32xf32, #tpu.memory_space<vmem>>, vector<8x8xf32>
    tpu.vector_store %arg8[%c0_25, %c8], %55 {strides = array<i32>} : memref<8x32xf32, #tpu.memory_space<vmem>>, vector<8x8xf32>,
    %57 = vector.extract_strided_slice %13 {offsets = [0, 16], sizes = [8, 8], strides = [1, 1]} : vector<8x32xf32> to vector<8x8xf32>
    %58 = vector.extract_strided_slice %24 {offsets = [16, 0], sizes = [8, 8], strides = [1, 1]} : vector<32x8xf32> to vector<8x8xf32>
    %cst_26 = arith.constant dense<0.000000e+00> : vector<8x8xf32>
    %59 = tpu.matmul %57, %58, %cst_26 {dimension_numbers = #tpu.dot_dimension_numbers<[1], [0], [0], [1], [0, 0, 1, 1], [], []>} : vector<8x8xf32>, vector<8x8xf32>, vector<8x8xf32> -> vector<8x8xf32>
    %cst_27 = arith.constant dense<0xFF800000> : vector<8xf32>
    %60 = vector.multi_reduction <maximumf>, %59, %cst_27 [1] : vector<8x8xf32> to vector<8xf32>
    %61 = vector.shape_cast %60 : vector<8xf32> to vector<8x1xf32>
    %62 = vector.broadcast %61 : vector<8x1xf32> to vector<8x8xf32>
    %63 = arith.subf %59, %62 : vector<8x8xf32>
    %64 = math.exp %63 : vector<8x8xf32>
    %cst_28 = arith.constant dense<0.000000e+00> : vector<8xf32>
    %65 = vector.multi_reduction <add>, %64, %cst_28 [1] : vector<8x8xf32> to vector<8xf32>
    %66 = vector.shape_cast %65 : vector<8xf32> to vector<8x1xf32>
    %67 = tpu.reciprocal %66 {approx = true} : vector<8x1xf32> -> vector<8x1xf32>
    %68 = vector.broadcast %67 : vector<8x1xf32> to vector<8x8xf32>
    %69 = arith.mulf %64, %68 : vector<8x8xf32>
    %70 = vector.extract_strided_slice %22 {offsets = [0, 16], sizes = [8, 8], strides = [1, 1]} : vector<8x32xf32> to vector<8x8xf32>
    %cst_29 = arith.constant dense<0.000000e+00> : vector<8x8xf32>
    %71 = tpu.matmul %69, %70, %cst_29 {dimension_numbers = #tpu.dot_dimension_numbers<[1], [0], [0], [1], [0, 0, 1, 1], [], []>} : vector<8x8xf32>, vector<8x8xf32>, vector<8x8xf32> -> vector<8x8xf32>
    %c0_30 = arith.constant 0 : index
    %c16 = arith.constant 16 : index
    %72 = vector.load %arg8[%c0_30, %c16] : memref<8x32xf32, #tpu.memory_space<vmem>>, vector<8x8xf32>
    tpu.vector_store %arg8[%c0_30, %c16], %71 {strides = array<i32>} : memref<8x32xf32, #tpu.memory_space<vmem>>, vector<8x8xf32>,
    %73 = vector.extract_strided_slice %13 {offsets = [0, 24], sizes = [8, 8], strides = [1, 1]} : vector<8x32xf32> to vector<8x8xf32>
    %74 = vector.extract_strided_slice %24 {offsets = [24, 0], sizes = [8, 8], strides = [1, 1]} : vector<32x8xf32> to vector<8x8xf32>
    %cst_31 = arith.constant dense<0.000000e+00> : vector<8x8xf32>
    %75 = tpu.matmul %73, %74, %cst_31 {dimension_numbers = #tpu.dot_dimension_numbers<[1], [0], [0], [1], [0, 0, 1, 1], [], []>} : vector<8x8xf32>, vector<8x8xf32>, vector<8x8xf32> -> vector<8x8xf32>
    %cst_32 = arith.constant dense<0xFF800000> : vector<8xf32>
    %76 = vector.multi_reduction <maximumf>, %75, %cst_32 [1] : vector<8x8xf32> to vector<8xf32>
    %77 = vector.shape_cast %76 : vector<8xf32> to vector<8x1xf32>
    %78 = vector.broadcast %77 : vector<8x1xf32> to vector<8x8xf32>
    %79 = arith.subf %75, %78 : vector<8x8xf32>
    %80 = math.exp %79 : vector<8x8xf32>
    %cst_33 = arith.constant dense<0.000000e+00> : vector<8xf32>
    %81 = vector.multi_reduction <add>, %80, %cst_33 [1] : vector<8x8xf32> to vector<8xf32>
    %82 = vector.shape_cast %81 : vector<8xf32> to vector<8x1xf32>
    %83 = tpu.reciprocal %82 {approx = true} : vector<8x1xf32> -> vector<8x1xf32>
    %84 = vector.broadcast %83 : vector<8x1xf32> to vector<8x8xf32>
    %85 = arith.mulf %80, %84 : vector<8x8xf32>
    %86 = vector.extract_strided_slice %22 {offsets = [0, 24], sizes = [8, 8], strides = [1, 1]} : vector<8x32xf32> to vector<8x8xf32>
    %cst_34 = arith.constant dense<0.000000e+00> : vector<8x8xf32>
    %87 = tpu.matmul %85, %86, %cst_34 {dimension_numbers = #tpu.dot_dimension_numbers<[1], [0], [0], [1], [0, 0, 1, 1], [], []>} : vector<8x8xf32>, vector<8x8xf32>, vector<8x8xf32> -> vector<8x8xf32>
    %c0_35 = arith.constant 0 : index
    %c24 = arith.constant 24 : index
    %88 = vector.load %arg8[%c0_35, %c24] : memref<8x32xf32, #tpu.memory_space<vmem>>, vector<8x8xf32>
    tpu.vector_store %arg8[%c0_35, %c24], %87 {strides = array<i32>} : memref<8x32xf32, #tpu.memory_space<vmem>>, vector<8x8xf32>,
    %c0_36 = arith.constant 0 : index
    %c0_37 = arith.constant 0 : index
    %89 = vector.load %arg8[%c0_36, %c0_37] : memref<8x32xf32, #tpu.memory_space<vmem>>, vector<8x32xf32>
    %cst_38 = arith.constant dense<0.000000e+00> : vector<8x32xf32>
    %90 = tpu.matmul %89, %23, %cst_38 {dimension_numbers = #tpu.dot_dimension_numbers<[1], [0], [0], [1], [0, 0, 1, 1], [], []>} : vector<8x32xf32>, vector<32x32xf32>, vector<8x32xf32> -> vector<8x32xf32>
    %91 = vector.extract_strided_slice %5 {offsets = [3, 0], sizes = [1, 32], strides = [1, 1]} : vector<6x32xf32> to vector<1x32xf32>
    %92 = vector.broadcast %91 : vector<1x32xf32> to vector<8x32xf32>
    %93 = arith.addf %90, %92 : vector<8x32xf32>
    %94 = arith.addf %1, %93 : vector<8x32xf32>
    %95 = vector.extract_strided_slice %5 {offsets = [4, 0], sizes = [1, 32], strides = [1, 1]} : vector<6x32xf32> to vector<1x32xf32>
    %96 = vector.extract_strided_slice %5 {offsets = [5, 0], sizes = [1, 32], strides = [1, 1]} : vector<6x32xf32> to vector<1x32xf32>
    %cst_39 = arith.constant dense<0.000000e+00> : vector<8xf32>
    %97 = vector.multi_reduction <add>, %94, %cst_39 [1] : vector<8x32xf32> to vector<8xf32>
    %98 = vector.shape_cast %97 : vector<8xf32> to vector<8x1xf32>
    %cst_40 = arith.constant 3.200000e+01 : f32
    %99 = vector.broadcast %cst_40 : f32 to vector<8x1xf32>
    %100 = arith.divf %98, %99 : vector<8x1xf32>
    %101 = arith.mulf %94, %94 : vector<8x32xf32>
    %cst_41 = arith.constant dense<0.000000e+00> : vector<8xf32>
    %102 = vector.multi_reduction <add>, %101, %cst_41 [1] : vector<8x32xf32> to vector<8xf32>
    %103 = vector.shape_cast %102 : vector<8xf32> to vector<8x1xf32>
    %cst_42 = arith.constant 3.200000e+01 : f32
    %104 = vector.broadcast %cst_42 : f32 to vector<8x1xf32>
    %105 = arith.divf %103, %104 : vector<8x1xf32>
    %106 = arith.mulf %100, %100 : vector<8x1xf32>
    %107 = arith.subf %105, %106 : vector<8x1xf32>
    %108 = vector.broadcast %100 : vector<8x1xf32> to vector<8x32xf32>
    %109 = arith.subf %94, %108 : vector<8x32xf32>
    %cst_43 = arith.constant 9.99999974E-6 : f32
    %110 = vector.broadcast %cst_43 : f32 to vector<8x1xf32>
    %111 = arith.addf %107, %110 : vector<8x1xf32>
    %112 = math.rsqrt %111 : vector<8x1xf32>
    %113 = vector.broadcast %112 : vector<8x1xf32> to vector<8x32xf32>
    %114 = arith.mulf %109, %113 : vector<8x32xf32>
    %115 = vector.broadcast %95 : vector<1x32xf32> to vector<8x32xf32>
    %116 = arith.mulf %114, %115 : vector<8x32xf32>
    %117 = vector.broadcast %96 : vector<1x32xf32> to vector<8x32xf32>
    %118 = arith.addf %116, %117 : vector<8x32xf32>
    %c0_44 = arith.constant 0 : index
    %c0_45 = arith.constant 0 : index
    %c0_46 = arith.constant 0 : index
    %119 = vector.load %arg7[%c0_44, %c0_45, %c0_46] : memref<1x8x32xf32, #tpu.memory_space<vmem>>, vector<1x8x32xf32>
    %120 = vector.shape_cast %119 : vector<1x8x32xf32> to vector<8x32xf32>
    %121 = vector.shape_cast %118 : vector<8x32xf32> to vector<1x8x32xf32>
    tpu.vector_store %arg7[%c0_44, %c0_45, %c0_46], %121 {strides = array<i32>} : memref<1x8x32xf32, #tpu.memory_space<vmem>>, vector<1x8x32xf32>,
    return
  }
  func.func @transform_0(%arg0: i32) -> (i32, i32, i32) {
    %c0_i32 = arith.constant 0 : i32
    %c0_i32_0 = arith.constant 0 : i32
    %c0_i32_1 = arith.constant 0 : i32
    return %arg0, %c0_i32, %c0_i32_0 : i32, i32, i32
  }
  func.func @transform_1(%arg0: i32) -> (i32, i32, i32) {
    %c0_i32 = arith.constant 0 : i32
    %c0_i32_0 = arith.constant 0 : i32
    %c0_i32_1 = arith.constant 0 : i32
    return %arg0, %c0_i32, %c0_i32_0 : i32, i32, i32
  }
  func.func @transform_2(%arg0: i32) -> (i32, i32) {
    %c0_i32 = arith.constant 0 : i32
    %c0_i32_0 = arith.constant 0 : i32
    %c0_i32_1 = arith.constant 0 : i32
    return %c0_i32, %c0_i32_0 : i32, i32
  }
  func.func @transform_3(%arg0: i32) -> (i32, i32) {
    %c0_i32 = arith.constant 0 : i32
    %c0_i32_0 = arith.constant 0 : i32
    %c0_i32_1 = arith.constant 0 : i32
    return %c0_i32, %c0_i32_0 : i32, i32
  }
  func.func @transform_4(%arg0: i32) -> (i32, i32) {
    %c0_i32 = arith.constant 0 : i32
    %c0_i32_0 = arith.constant 0 : i32
    %c0_i32_1 = arith.constant 0 : i32
    return %c0_i32, %c0_i32_0 : i32, i32
  }
  func.func @transform_5(%arg0: i32) -> (i32, i32) {
    %c0_i32 = arith.constant 0 : i32
    %c0_i32_0 = arith.constant 0 : i32
    %c0_i32_1 = arith.constant 0 : i32
    return %c0_i32, %c0_i32_0 : i32, i32
  }
  func.func @transform_6(%arg0: i32) -> (i32, i32, i32) {
    %c0_i32 = arith.constant 0 : i32
    %c0_i32_0 = arith.constant 0 : i32
    %c0_i32_1 = arith.constant 0 : i32
    return %arg0, %c0_i32, %c0_i32_0 : i32, i32, i32
  }
}

module attributes {stable_mosaic.version = 11 : i64} {
  func.func @_cross_attn_kernel(%arg0: i32, %arg1: memref<1x8x32xf32, #tpu.memory_space<vmem>>, %arg2: memref<1x8x32xf32, #tpu.memory_space<vmem>>, %arg3: memref<1x12x32xf32, #tpu.memory_space<vmem>>, %arg4: memref<1x12x32xf32, #tpu.memory_space<vmem>>, %arg5: memref<32x32xf32, #tpu.memory_space<vmem>>, %arg6: memref<32x32xf32, #tpu.memory_space<vmem>>, %arg7: memref<32x32xf32, #tpu.memory_space<vmem>>, %arg8: memref<32x32xf32, #tpu.memory_space<vmem>>, %arg9: memref<6x32xf32, #tpu.memory_space<vmem>>, %arg10: memref<1x8x32xf32, #tpu.memory_space<vmem>>, %arg11: memref<8x32xf32, #tpu.memory_space<vmem>>) attributes {dimension_semantics = [#tpu.dimension_semantics<parallel>], iteration_bounds = array<i64: 2>, scalar_prefetch = 0 : i64, scratch_operands = 1 : i64, tpu.core_type = #tpu.core_type<tc>, window_params = [{transform_indices = @transform_0, window_bounds = array<i64: 1, 8, 32>}, {transform_indices = @transform_1, window_bounds = array<i64: 1, 8, 32>}, {transform_indices = @transform_2, window_bounds = array<i64: 1, 12, 32>}, {transform_indices = @transform_3, window_bounds = array<i64: 1, 12, 32>}, {pipeline_mode = #tpu.pipeline_mode<synchronous>, transform_indices = @transform_4, window_bounds = array<i64: 32, 32>}, {pipeline_mode = #tpu.pipeline_mode<synchronous>, transform_indices = @transform_5, window_bounds = array<i64: 32, 32>}, {pipeline_mode = #tpu.pipeline_mode<synchronous>, transform_indices = @transform_6, window_bounds = array<i64: 32, 32>}, {pipeline_mode = #tpu.pipeline_mode<synchronous>, transform_indices = @transform_7, window_bounds = array<i64: 32, 32>}, {pipeline_mode = #tpu.pipeline_mode<synchronous>, transform_indices = @transform_8, window_bounds = array<i64: 6, 32>}, {transform_indices = @transform_9, window_bounds = array<i64: 1, 8, 32>}]} {
    %c0 = arith.constant 0 : index
    %c0_0 = arith.constant 0 : index
    %c0_1 = arith.constant 0 : index
    %0 = vector.load %arg1[%c0, %c0_0, %c0_1] : memref<1x8x32xf32, #tpu.memory_space<vmem>>, vector<1x8x32xf32>
    %1 = vector.shape_cast %0 : vector<1x8x32xf32> to vector<8x32xf32>
    %c0_2 = arith.constant 0 : index
    %c0_3 = arith.constant 0 : index
    %c0_4 = arith.constant 0 : index
    %2 = vector.load %arg2[%c0_2, %c0_3, %c0_4] : memref<1x8x32xf32, #tpu.memory_space<vmem>>, vector<1x8x32xf32>
    %3 = vector.shape_cast %2 : vector<1x8x32xf32> to vector<8x32xf32>
    %4 = arith.addf %1, %3 : vector<8x32xf32>
    %c0_5 = arith.constant 0 : index
    %c0_6 = arith.constant 0 : index
    %c0_7 = arith.constant 0 : index
    %5 = vector.load %arg3[%c0_5, %c0_6, %c0_7] : memref<1x12x32xf32, #tpu.memory_space<vmem>>, vector<1x12x32xf32>
    %6 = vector.shape_cast %5 : vector<1x12x32xf32> to vector<12x32xf32>
    %c0_8 = arith.constant 0 : index
    %c0_9 = arith.constant 0 : index
    %c0_10 = arith.constant 0 : index
    %7 = vector.load %arg4[%c0_8, %c0_9, %c0_10] : memref<1x12x32xf32, #tpu.memory_space<vmem>>, vector<1x12x32xf32>
    %8 = vector.shape_cast %7 : vector<1x12x32xf32> to vector<12x32xf32>
    %9 = arith.addf %6, %8 : vector<12x32xf32>
    %c0_11 = arith.constant 0 : index
    %c0_12 = arith.constant 0 : index
    %10 = vector.load %arg9[%c0_11, %c0_12] : memref<6x32xf32, #tpu.memory_space<vmem>>, vector<6x32xf32>
    %c0_13 = arith.constant 0 : index
    %c0_14 = arith.constant 0 : index
    %11 = vector.load %arg5[%c0_13, %c0_14] : memref<32x32xf32, #tpu.memory_space<vmem>>, vector<32x32xf32>
    %cst = arith.constant dense<0.000000e+00> : vector<8x32xf32>
    %12 = tpu.matmul %4, %11, %cst {dimension_numbers = #tpu.dot_dimension_numbers<[1], [0], [0], [1], [0, 0, 1, 1], [], []>} : vector<8x32xf32>, vector<32x32xf32>, vector<8x32xf32> -> vector<8x32xf32>
    %13 = vector.extract_strided_slice %10 {offsets = [0, 0], sizes = [1, 32], strides = [1, 1]} : vector<6x32xf32> to vector<1x32xf32>
    %14 = vector.broadcast %13 : vector<1x32xf32> to vector<8x32xf32>
    %15 = arith.addf %12, %14 : vector<8x32xf32>
    %cst_15 = arith.constant 0.353553385 : f32
    %16 = vector.broadcast %cst_15 : f32 to vector<8x32xf32>
    %17 = arith.mulf %15, %16 : vector<8x32xf32>
    %c0_16 = arith.constant 0 : index
    %c0_17 = arith.constant 0 : index
    %18 = vector.load %arg6[%c0_16, %c0_17] : memref<32x32xf32, #tpu.memory_space<vmem>>, vector<32x32xf32>
    %cst_18 = arith.constant dense<0.000000e+00> : vector<12x32xf32>
    %19 = tpu.matmul %9, %18, %cst_18 {dimension_numbers = #tpu.dot_dimension_numbers<[1], [0], [0], [1], [0, 0, 1, 1], [], []>} : vector<12x32xf32>, vector<32x32xf32>, vector<12x32xf32> -> vector<12x32xf32>
    %20 = vector.extract_strided_slice %10 {offsets = [1, 0], sizes = [1, 32], strides = [1, 1]} : vector<6x32xf32> to vector<1x32xf32>
    %21 = vector.broadcast %20 : vector<1x32xf32> to vector<12x32xf32>
    %22 = arith.addf %19, %21 : vector<12x32xf32>
    %c0_19 = arith.constant 0 : index
    %c0_20 = arith.constant 0 : index
    %23 = vector.load %arg7[%c0_19, %c0_20] : memref<32x32xf32, #tpu.memory_space<vmem>>, vector<32x32xf32>
    %cst_21 = arith.constant dense<0.000000e+00> : vector<12x32xf32>
    %24 = tpu.matmul %6, %23, %cst_21 {dimension_numbers = #tpu.dot_dimension_numbers<[1], [0], [0], [1], [0, 0, 1, 1], [], []>} : vector<12x32xf32>, vector<32x32xf32>, vector<12x32xf32> -> vector<12x32xf32>
    %25 = vector.extract_strided_slice %10 {offsets = [2, 0], sizes = [1, 32], strides = [1, 1]} : vector<6x32xf32> to vector<1x32xf32>
    %26 = vector.broadcast %25 : vector<1x32xf32> to vector<12x32xf32>
    %27 = arith.addf %24, %26 : vector<12x32xf32>
    %c0_22 = arith.constant 0 : index
    %c0_23 = arith.constant 0 : index
    %28 = vector.load %arg8[%c0_22, %c0_23] : memref<32x32xf32, #tpu.memory_space<vmem>>, vector<32x32xf32>
    %29 = tpu.transpose %22, [1, 0] : vector<12x32xf32> -> vector<32x12xf32>
    %30 = vector.extract_strided_slice %17 {offsets = [0, 0], sizes = [8, 8], strides = [1, 1]} : vector<8x32xf32> to vector<8x8xf32>
    %31 = vector.extract_strided_slice %29 {offsets = [0, 0], sizes = [8, 12], strides = [1, 1]} : vector<32x12xf32> to vector<8x12xf32>
    %cst_24 = arith.constant dense<0.000000e+00> : vector<8x12xf32>
    %32 = tpu.matmul %30, %31, %cst_24 {dimension_numbers = #tpu.dot_dimension_numbers<[1], [0], [0], [1], [0, 0, 1, 1], [], []>} : vector<8x8xf32>, vector<8x12xf32>, vector<8x12xf32> -> vector<8x12xf32>
    %cst_25 = arith.constant dense<0xFF800000> : vector<8xf32>
    %33 = vector.multi_reduction <maximumf>, %32, %cst_25 [1] : vector<8x12xf32> to vector<8xf32>
    %34 = vector.shape_cast %33 : vector<8xf32> to vector<8x1xf32>
    %35 = vector.broadcast %34 : vector<8x1xf32> to vector<8x12xf32>
    %36 = arith.subf %32, %35 : vector<8x12xf32>
    %37 = math.exp %36 : vector<8x12xf32>
    %cst_26 = arith.constant dense<0.000000e+00> : vector<8xf32>
    %38 = vector.multi_reduction <add>, %37, %cst_26 [1] : vector<8x12xf32> to vector<8xf32>
    %39 = vector.shape_cast %38 : vector<8xf32> to vector<8x1xf32>
    %40 = tpu.reciprocal %39 {approx = true} : vector<8x1xf32> -> vector<8x1xf32>
    %41 = vector.broadcast %40 : vector<8x1xf32> to vector<8x12xf32>
    %42 = arith.mulf %37, %41 : vector<8x12xf32>
    %43 = vector.extract_strided_slice %27 {offsets = [0, 0], sizes = [12, 8], strides = [1, 1]} : vector<12x32xf32> to vector<12x8xf32>
    %cst_27 = arith.constant dense<0.000000e+00> : vector<8x8xf32>
    %44 = tpu.matmul %42, %43, %cst_27 {dimension_numbers = #tpu.dot_dimension_numbers<[1], [0], [0], [1], [0, 0, 1, 1], [], []>} : vector<8x12xf32>, vector<12x8xf32>, vector<8x8xf32> -> vector<8x8xf32>
    %c0_28 = arith.constant 0 : index
    %c0_29 = arith.constant 0 : index
    %45 = vector.load %arg11[%c0_28, %c0_29] : memref<8x32xf32, #tpu.memory_space<vmem>>, vector<8x8xf32>
    tpu.vector_store %arg11[%c0_28, %c0_29], %44 {strides = array<i32>} : memref<8x32xf32, #tpu.memory_space<vmem>>, vector<8x8xf32>,
    %46 = vector.extract_strided_slice %17 {offsets = [0, 8], sizes = [8, 8], strides = [1, 1]} : vector<8x32xf32> to vector<8x8xf32>
    %47 = vector.extract_strided_slice %29 {offsets = [8, 0], sizes = [8, 12], strides = [1, 1]} : vector<32x12xf32> to vector<8x12xf32>
    %cst_30 = arith.constant dense<0.000000e+00> : vector<8x12xf32>
    %48 = tpu.matmul %46, %47, %cst_30 {dimension_numbers = #tpu.dot_dimension_numbers<[1], [0], [0], [1], [0, 0, 1, 1], [], []>} : vector<8x8xf32>, vector<8x12xf32>, vector<8x12xf32> -> vector<8x12xf32>
    %cst_31 = arith.constant dense<0xFF800000> : vector<8xf32>
    %49 = vector.multi_reduction <maximumf>, %48, %cst_31 [1] : vector<8x12xf32> to vector<8xf32>
    %50 = vector.shape_cast %49 : vector<8xf32> to vector<8x1xf32>
    %51 = vector.broadcast %50 : vector<8x1xf32> to vector<8x12xf32>
    %52 = arith.subf %48, %51 : vector<8x12xf32>
    %53 = math.exp %52 : vector<8x12xf32>
    %cst_32 = arith.constant dense<0.000000e+00> : vector<8xf32>
    %54 = vector.multi_reduction <add>, %53, %cst_32 [1] : vector<8x12xf32> to vector<8xf32>
    %55 = vector.shape_cast %54 : vector<8xf32> to vector<8x1xf32>
    %56 = tpu.reciprocal %55 {approx = true} : vector<8x1xf32> -> vector<8x1xf32>
    %57 = vector.broadcast %56 : vector<8x1xf32> to vector<8x12xf32>
    %58 = arith.mulf %53, %57 : vector<8x12xf32>
    %59 = vector.extract_strided_slice %27 {offsets = [0, 8], sizes = [12, 8], strides = [1, 1]} : vector<12x32xf32> to vector<12x8xf32>
    %cst_33 = arith.constant dense<0.000000e+00> : vector<8x8xf32>
    %60 = tpu.matmul %58, %59, %cst_33 {dimension_numbers = #tpu.dot_dimension_numbers<[1], [0], [0], [1], [0, 0, 1, 1], [], []>} : vector<8x12xf32>, vector<12x8xf32>, vector<8x8xf32> -> vector<8x8xf32>
    %c0_34 = arith.constant 0 : index
    %c8 = arith.constant 8 : index
    %61 = vector.load %arg11[%c0_34, %c8] : memref<8x32xf32, #tpu.memory_space<vmem>>, vector<8x8xf32>
    tpu.vector_store %arg11[%c0_34, %c8], %60 {strides = array<i32>} : memref<8x32xf32, #tpu.memory_space<vmem>>, vector<8x8xf32>,
    %62 = vector.extract_strided_slice %17 {offsets = [0, 16], sizes = [8, 8], strides = [1, 1]} : vector<8x32xf32> to vector<8x8xf32>
    %63 = vector.extract_strided_slice %29 {offsets = [16, 0], sizes = [8, 12], strides = [1, 1]} : vector<32x12xf32> to vector<8x12xf32>
    %cst_35 = arith.constant dense<0.000000e+00> : vector<8x12xf32>
    %64 = tpu.matmul %62, %63, %cst_35 {dimension_numbers = #tpu.dot_dimension_numbers<[1], [0], [0], [1], [0, 0, 1, 1], [], []>} : vector<8x8xf32>, vector<8x12xf32>, vector<8x12xf32> -> vector<8x12xf32>
    %cst_36 = arith.constant dense<0xFF800000> : vector<8xf32>
    %65 = vector.multi_reduction <maximumf>, %64, %cst_36 [1] : vector<8x12xf32> to vector<8xf32>
    %66 = vector.shape_cast %65 : vector<8xf32> to vector<8x1xf32>
    %67 = vector.broadcast %66 : vector<8x1xf32> to vector<8x12xf32>
    %68 = arith.subf %64, %67 : vector<8x12xf32>
    %69 = math.exp %68 : vector<8x12xf32>
    %cst_37 = arith.constant dense<0.000000e+00> : vector<8xf32>
    %70 = vector.multi_reduction <add>, %69, %cst_37 [1] : vector<8x12xf32> to vector<8xf32>
    %71 = vector.shape_cast %70 : vector<8xf32> to vector<8x1xf32>
    %72 = tpu.reciprocal %71 {approx = true} : vector<8x1xf32> -> vector<8x1xf32>
    %73 = vector.broadcast %72 : vector<8x1xf32> to vector<8x12xf32>
    %74 = arith.mulf %69, %73 : vector<8x12xf32>
    %75 = vector.extract_strided_slice %27 {offsets = [0, 16], sizes = [12, 8], strides = [1, 1]} : vector<12x32xf32> to vector<12x8xf32>
    %cst_38 = arith.constant dense<0.000000e+00> : vector<8x8xf32>
    %76 = tpu.matmul %74, %75, %cst_38 {dimension_numbers = #tpu.dot_dimension_numbers<[1], [0], [0], [1], [0, 0, 1, 1], [], []>} : vector<8x12xf32>, vector<12x8xf32>, vector<8x8xf32> -> vector<8x8xf32>
    %c0_39 = arith.constant 0 : index
    %c16 = arith.constant 16 : index
    %77 = vector.load %arg11[%c0_39, %c16] : memref<8x32xf32, #tpu.memory_space<vmem>>, vector<8x8xf32>
    tpu.vector_store %arg11[%c0_39, %c16], %76 {strides = array<i32>} : memref<8x32xf32, #tpu.memory_space<vmem>>, vector<8x8xf32>,
    %78 = vector.extract_strided_slice %17 {offsets = [0, 24], sizes = [8, 8], strides = [1, 1]} : vector<8x32xf32> to vector<8x8xf32>
    %79 = vector.extract_strided_slice %29 {offsets = [24, 0], sizes = [8, 12], strides = [1, 1]} : vector<32x12xf32> to vector<8x12xf32>
    %cst_40 = arith.constant dense<0.000000e+00> : vector<8x12xf32>
    %80 = tpu.matmul %78, %79, %cst_40 {dimension_numbers = #tpu.dot_dimension_numbers<[1], [0], [0], [1], [0, 0, 1, 1], [], []>} : vector<8x8xf32>, vector<8x12xf32>, vector<8x12xf32> -> vector<8x12xf32>
    %cst_41 = arith.constant dense<0xFF800000> : vector<8xf32>
    %81 = vector.multi_reduction <maximumf>, %80, %cst_41 [1] : vector<8x12xf32> to vector<8xf32>
    %82 = vector.shape_cast %81 : vector<8xf32> to vector<8x1xf32>
    %83 = vector.broadcast %82 : vector<8x1xf32> to vector<8x12xf32>
    %84 = arith.subf %80, %83 : vector<8x12xf32>
    %85 = math.exp %84 : vector<8x12xf32>
    %cst_42 = arith.constant dense<0.000000e+00> : vector<8xf32>
    %86 = vector.multi_reduction <add>, %85, %cst_42 [1] : vector<8x12xf32> to vector<8xf32>
    %87 = vector.shape_cast %86 : vector<8xf32> to vector<8x1xf32>
    %88 = tpu.reciprocal %87 {approx = true} : vector<8x1xf32> -> vector<8x1xf32>
    %89 = vector.broadcast %88 : vector<8x1xf32> to vector<8x12xf32>
    %90 = arith.mulf %85, %89 : vector<8x12xf32>
    %91 = vector.extract_strided_slice %27 {offsets = [0, 24], sizes = [12, 8], strides = [1, 1]} : vector<12x32xf32> to vector<12x8xf32>
    %cst_43 = arith.constant dense<0.000000e+00> : vector<8x8xf32>
    %92 = tpu.matmul %90, %91, %cst_43 {dimension_numbers = #tpu.dot_dimension_numbers<[1], [0], [0], [1], [0, 0, 1, 1], [], []>} : vector<8x12xf32>, vector<12x8xf32>, vector<8x8xf32> -> vector<8x8xf32>
    %c0_44 = arith.constant 0 : index
    %c24 = arith.constant 24 : index
    %93 = vector.load %arg11[%c0_44, %c24] : memref<8x32xf32, #tpu.memory_space<vmem>>, vector<8x8xf32>
    tpu.vector_store %arg11[%c0_44, %c24], %92 {strides = array<i32>} : memref<8x32xf32, #tpu.memory_space<vmem>>, vector<8x8xf32>,
    %c0_45 = arith.constant 0 : index
    %c0_46 = arith.constant 0 : index
    %94 = vector.load %arg11[%c0_45, %c0_46] : memref<8x32xf32, #tpu.memory_space<vmem>>, vector<8x32xf32>
    %cst_47 = arith.constant dense<0.000000e+00> : vector<8x32xf32>
    %95 = tpu.matmul %94, %28, %cst_47 {dimension_numbers = #tpu.dot_dimension_numbers<[1], [0], [0], [1], [0, 0, 1, 1], [], []>} : vector<8x32xf32>, vector<32x32xf32>, vector<8x32xf32> -> vector<8x32xf32>
    %96 = vector.extract_strided_slice %10 {offsets = [3, 0], sizes = [1, 32], strides = [1, 1]} : vector<6x32xf32> to vector<1x32xf32>
    %97 = vector.broadcast %96 : vector<1x32xf32> to vector<8x32xf32>
    %98 = arith.addf %95, %97 : vector<8x32xf32>
    %99 = arith.addf %1, %98 : vector<8x32xf32>
    %100 = vector.extract_strided_slice %10 {offsets = [4, 0], sizes = [1, 32], strides = [1, 1]} : vector<6x32xf32> to vector<1x32xf32>
    %101 = vector.extract_strided_slice %10 {offsets = [5, 0], sizes = [1, 32], strides = [1, 1]} : vector<6x32xf32> to vector<1x32xf32>
    %cst_48 = arith.constant dense<0.000000e+00> : vector<8xf32>
    %102 = vector.multi_reduction <add>, %99, %cst_48 [1] : vector<8x32xf32> to vector<8xf32>
    %103 = vector.shape_cast %102 : vector<8xf32> to vector<8x1xf32>
    %cst_49 = arith.constant 3.200000e+01 : f32
    %104 = vector.broadcast %cst_49 : f32 to vector<8x1xf32>
    %105 = arith.divf %103, %104 : vector<8x1xf32>
    %106 = arith.mulf %99, %99 : vector<8x32xf32>
    %cst_50 = arith.constant dense<0.000000e+00> : vector<8xf32>
    %107 = vector.multi_reduction <add>, %106, %cst_50 [1] : vector<8x32xf32> to vector<8xf32>
    %108 = vector.shape_cast %107 : vector<8xf32> to vector<8x1xf32>
    %cst_51 = arith.constant 3.200000e+01 : f32
    %109 = vector.broadcast %cst_51 : f32 to vector<8x1xf32>
    %110 = arith.divf %108, %109 : vector<8x1xf32>
    %111 = arith.mulf %105, %105 : vector<8x1xf32>
    %112 = arith.subf %110, %111 : vector<8x1xf32>
    %113 = vector.broadcast %105 : vector<8x1xf32> to vector<8x32xf32>
    %114 = arith.subf %99, %113 : vector<8x32xf32>
    %cst_52 = arith.constant 9.99999974E-6 : f32
    %115 = vector.broadcast %cst_52 : f32 to vector<8x1xf32>
    %116 = arith.addf %112, %115 : vector<8x1xf32>
    %117 = math.rsqrt %116 : vector<8x1xf32>
    %118 = vector.broadcast %117 : vector<8x1xf32> to vector<8x32xf32>
    %119 = arith.mulf %114, %118 : vector<8x32xf32>
    %120 = vector.broadcast %100 : vector<1x32xf32> to vector<8x32xf32>
    %121 = arith.mulf %119, %120 : vector<8x32xf32>
    %122 = vector.broadcast %101 : vector<1x32xf32> to vector<8x32xf32>
    %123 = arith.addf %121, %122 : vector<8x32xf32>
    %c0_53 = arith.constant 0 : index
    %c0_54 = arith.constant 0 : index
    %c0_55 = arith.constant 0 : index
    %124 = vector.load %arg10[%c0_53, %c0_54, %c0_55] : memref<1x8x32xf32, #tpu.memory_space<vmem>>, vector<1x8x32xf32>
    %125 = vector.shape_cast %124 : vector<1x8x32xf32> to vector<8x32xf32>
    %126 = vector.shape_cast %123 : vector<8x32xf32> to vector<1x8x32xf32>
    tpu.vector_store %arg10[%c0_53, %c0_54, %c0_55], %126 {strides = array<i32>} : memref<1x8x32xf32, #tpu.memory_space<vmem>>, vector<1x8x32xf32>,
    return
  }
  func.func @transform_0(%arg0: i32) -> (i32, i32, i32) {
    %c0_i32 = arith.constant 0 : i32
    %c0_i32_0 = arith.constant 0 : i32
    %c0_i32_1 = arith.constant 0 : i32
    return %arg0, %c0_i32, %c0_i32_0 : i32, i32, i32
  }
  func.func @transform_1(%arg0: i32) -> (i32, i32, i32) {
    %c0_i32 = arith.constant 0 : i32
    %c0_i32_0 = arith.constant 0 : i32
    %c0_i32_1 = arith.constant 0 : i32
    return %arg0, %c0_i32, %c0_i32_0 : i32, i32, i32
  }
  func.func @transform_2(%arg0: i32) -> (i32, i32, i32) {
    %c0_i32 = arith.constant 0 : i32
    %c0_i32_0 = arith.constant 0 : i32
    %c0_i32_1 = arith.constant 0 : i32
    return %arg0, %c0_i32, %c0_i32_0 : i32, i32, i32
  }
  func.func @transform_3(%arg0: i32) -> (i32, i32, i32) {
    %c0_i32 = arith.constant 0 : i32
    %c0_i32_0 = arith.constant 0 : i32
    %c0_i32_1 = arith.constant 0 : i32
    return %arg0, %c0_i32, %c0_i32_0 : i32, i32, i32
  }
  func.func @transform_4(%arg0: i32) -> (i32, i32) {
    %c0_i32 = arith.constant 0 : i32
    %c0_i32_0 = arith.constant 0 : i32
    %c0_i32_1 = arith.constant 0 : i32
    return %c0_i32, %c0_i32_0 : i32, i32
  }
  func.func @transform_5(%arg0: i32) -> (i32, i32) {
    %c0_i32 = arith.constant 0 : i32
    %c0_i32_0 = arith.constant 0 : i32
    %c0_i32_1 = arith.constant 0 : i32
    return %c0_i32, %c0_i32_0 : i32, i32
  }
  func.func @transform_6(%arg0: i32) -> (i32, i32) {
    %c0_i32 = arith.constant 0 : i32
    %c0_i32_0 = arith.constant 0 : i32
    %c0_i32_1 = arith.constant 0 : i32
    return %c0_i32, %c0_i32_0 : i32, i32
  }
  func.func @transform_7(%arg0: i32) -> (i32, i32) {
    %c0_i32 = arith.constant 0 : i32
    %c0_i32_0 = arith.constant 0 : i32
    %c0_i32_1 = arith.constant 0 : i32
    return %c0_i32, %c0_i32_0 : i32, i32
  }
  func.func @transform_8(%arg0: i32) -> (i32, i32) {
    %c0_i32 = arith.constant 0 : i32
    %c0_i32_0 = arith.constant 0 : i32
    %c0_i32_1 = arith.constant 0 : i32
    return %c0_i32, %c0_i32_0 : i32, i32
  }
  func.func @transform_9(%arg0: i32) -> (i32, i32, i32) {
    %c0_i32 = arith.constant 0 : i32
    %c0_i32_0 = arith.constant 0 : i32
    %c0_i32_1 = arith.constant 0 : i32
    return %arg0, %c0_i32, %c0_i32_0 : i32, i32, i32
  }
}

module attributes {stable_mosaic.version = 11 : i64} {
  func.func @_ffn_kernel(%arg0: i32, %arg1: memref<1x8x32xf32, #tpu.memory_space<vmem>>, %arg2: memref<32x64xf32, #tpu.memory_space<vmem>>, %arg3: memref<1x64xf32, #tpu.memory_space<vmem>>, %arg4: memref<64x32xf32, #tpu.memory_space<vmem>>, %arg5: memref<3x32xf32, #tpu.memory_space<vmem>>, %arg6: memref<1x8x32xf32, #tpu.memory_space<vmem>>) attributes {dimension_semantics = [#tpu.dimension_semantics<parallel>], iteration_bounds = array<i64: 2>, scalar_prefetch = 0 : i64, scratch_operands = 0 : i64, tpu.core_type = #tpu.core_type<tc>, window_params = [{transform_indices = @transform_0, window_bounds = array<i64: 1, 8, 32>}, {pipeline_mode = #tpu.pipeline_mode<synchronous>, transform_indices = @transform_1, window_bounds = array<i64: 32, 64>}, {pipeline_mode = #tpu.pipeline_mode<synchronous>, transform_indices = @transform_2, window_bounds = array<i64: 1, 64>}, {pipeline_mode = #tpu.pipeline_mode<synchronous>, transform_indices = @transform_3, window_bounds = array<i64: 64, 32>}, {pipeline_mode = #tpu.pipeline_mode<synchronous>, transform_indices = @transform_4, window_bounds = array<i64: 3, 32>}, {transform_indices = @transform_5, window_bounds = array<i64: 1, 8, 32>}]} {
    %c0 = arith.constant 0 : index
    %c0_0 = arith.constant 0 : index
    %c0_1 = arith.constant 0 : index
    %0 = vector.load %arg1[%c0, %c0_0, %c0_1] : memref<1x8x32xf32, #tpu.memory_space<vmem>>, vector<1x8x32xf32>
    %1 = vector.shape_cast %0 : vector<1x8x32xf32> to vector<8x32xf32>
    %c0_2 = arith.constant 0 : index
    %c0_3 = arith.constant 0 : index
    %2 = vector.load %arg5[%c0_2, %c0_3] : memref<3x32xf32, #tpu.memory_space<vmem>>, vector<3x32xf32>
    %c0_4 = arith.constant 0 : index
    %c0_5 = arith.constant 0 : index
    %3 = vector.load %arg2[%c0_4, %c0_5] : memref<32x64xf32, #tpu.memory_space<vmem>>, vector<32x64xf32>
    %cst = arith.constant dense<0.000000e+00> : vector<8x64xf32>
    %4 = tpu.matmul %1, %3, %cst {dimension_numbers = #tpu.dot_dimension_numbers<[1], [0], [0], [1], [0, 0, 1, 1], [], []>} : vector<8x32xf32>, vector<32x64xf32>, vector<8x64xf32> -> vector<8x64xf32>
    %c0_6 = arith.constant 0 : index
    %c0_7 = arith.constant 0 : index
    %5 = vector.load %arg3[%c0_6, %c0_7] : memref<1x64xf32, #tpu.memory_space<vmem>>, vector<1x64xf32>
    %6 = vector.broadcast %5 : vector<1x64xf32> to vector<8x64xf32>
    %7 = arith.addf %4, %6 : vector<8x64xf32>
    %cst_8 = arith.constant 0.000000e+00 : f32
    %8 = vector.broadcast %cst_8 : f32 to vector<8x64xf32>
    %9 = arith.maximumf %7, %8 : vector<8x64xf32>
    %c0_9 = arith.constant 0 : index
    %c0_10 = arith.constant 0 : index
    %10 = vector.load %arg4[%c0_9, %c0_10] : memref<64x32xf32, #tpu.memory_space<vmem>>, vector<64x32xf32>
    %cst_11 = arith.constant dense<0.000000e+00> : vector<8x32xf32>
    %11 = tpu.matmul %9, %10, %cst_11 {dimension_numbers = #tpu.dot_dimension_numbers<[1], [0], [0], [1], [0, 0, 1, 1], [], []>} : vector<8x64xf32>, vector<64x32xf32>, vector<8x32xf32> -> vector<8x32xf32>
    %12 = vector.extract_strided_slice %2 {offsets = [0, 0], sizes = [1, 32], strides = [1, 1]} : vector<3x32xf32> to vector<1x32xf32>
    %13 = vector.broadcast %12 : vector<1x32xf32> to vector<8x32xf32>
    %14 = arith.addf %11, %13 : vector<8x32xf32>
    %15 = arith.addf %1, %14 : vector<8x32xf32>
    %16 = vector.extract_strided_slice %2 {offsets = [1, 0], sizes = [1, 32], strides = [1, 1]} : vector<3x32xf32> to vector<1x32xf32>
    %17 = vector.extract_strided_slice %2 {offsets = [2, 0], sizes = [1, 32], strides = [1, 1]} : vector<3x32xf32> to vector<1x32xf32>
    %cst_12 = arith.constant dense<0.000000e+00> : vector<8xf32>
    %18 = vector.multi_reduction <add>, %15, %cst_12 [1] : vector<8x32xf32> to vector<8xf32>
    %19 = vector.shape_cast %18 : vector<8xf32> to vector<8x1xf32>
    %cst_13 = arith.constant 3.200000e+01 : f32
    %20 = vector.broadcast %cst_13 : f32 to vector<8x1xf32>
    %21 = arith.divf %19, %20 : vector<8x1xf32>
    %22 = arith.mulf %15, %15 : vector<8x32xf32>
    %cst_14 = arith.constant dense<0.000000e+00> : vector<8xf32>
    %23 = vector.multi_reduction <add>, %22, %cst_14 [1] : vector<8x32xf32> to vector<8xf32>
    %24 = vector.shape_cast %23 : vector<8xf32> to vector<8x1xf32>
    %cst_15 = arith.constant 3.200000e+01 : f32
    %25 = vector.broadcast %cst_15 : f32 to vector<8x1xf32>
    %26 = arith.divf %24, %25 : vector<8x1xf32>
    %27 = arith.mulf %21, %21 : vector<8x1xf32>
    %28 = arith.subf %26, %27 : vector<8x1xf32>
    %29 = vector.broadcast %21 : vector<8x1xf32> to vector<8x32xf32>
    %30 = arith.subf %15, %29 : vector<8x32xf32>
    %cst_16 = arith.constant 9.99999974E-6 : f32
    %31 = vector.broadcast %cst_16 : f32 to vector<8x1xf32>
    %32 = arith.addf %28, %31 : vector<8x1xf32>
    %33 = math.rsqrt %32 : vector<8x1xf32>
    %34 = vector.broadcast %33 : vector<8x1xf32> to vector<8x32xf32>
    %35 = arith.mulf %30, %34 : vector<8x32xf32>
    %36 = vector.broadcast %16 : vector<1x32xf32> to vector<8x32xf32>
    %37 = arith.mulf %35, %36 : vector<8x32xf32>
    %38 = vector.broadcast %17 : vector<1x32xf32> to vector<8x32xf32>
    %39 = arith.addf %37, %38 : vector<8x32xf32>
    %c0_17 = arith.constant 0 : index
    %c0_18 = arith.constant 0 : index
    %c0_19 = arith.constant 0 : index
    %40 = vector.load %arg6[%c0_17, %c0_18, %c0_19] : memref<1x8x32xf32, #tpu.memory_space<vmem>>, vector<1x8x32xf32>
    %41 = vector.shape_cast %40 : vector<1x8x32xf32> to vector<8x32xf32>
    %42 = vector.shape_cast %39 : vector<8x32xf32> to vector<1x8x32xf32>
    tpu.vector_store %arg6[%c0_17, %c0_18, %c0_19], %42 {strides = array<i32>} : memref<1x8x32xf32, #tpu.memory_space<vmem>>, vector<1x8x32xf32>,
    return
  }
  func.func @transform_0(%arg0: i32) -> (i32, i32, i32) {
    %c0_i32 = arith.constant 0 : i32
    %c0_i32_0 = arith.constant 0 : i32
    %c0_i32_1 = arith.constant 0 : i32
    return %arg0, %c0_i32, %c0_i32_0 : i32, i32, i32
  }
  func.func @transform_1(%arg0: i32) -> (i32, i32) {
    %c0_i32 = arith.constant 0 : i32
    %c0_i32_0 = arith.constant 0 : i32
    %c0_i32_1 = arith.constant 0 : i32
    return %c0_i32, %c0_i32_0 : i32, i32
  }
  func.func @transform_2(%arg0: i32) -> (i32, i32) {
    %c0_i32 = arith.constant 0 : i32
    %c0_i32_0 = arith.constant 0 : i32
    %c0_i32_1 = arith.constant 0 : i32
    return %c0_i32, %c0_i32_0 : i32, i32
  }
  func.func @transform_3(%arg0: i32) -> (i32, i32) {
    %c0_i32 = arith.constant 0 : i32
    %c0_i32_0 = arith.constant 0 : i32
    %c0_i32_1 = arith.constant 0 : i32
    return %c0_i32, %c0_i32_0 : i32, i32
  }
  func.func @transform_4(%arg0: i32) -> (i32, i32) {
    %c0_i32 = arith.constant 0 : i32
    %c0_i32_0 = arith.constant 0 : i32
    %c0_i32_1 = arith.constant 0 : i32
    return %c0_i32, %c0_i32_0 : i32, i32
  }
  func.func @transform_5(%arg0: i32) -> (i32, i32, i32) {
    %c0_i32 = arith.constant 0 : i32
    %c0_i32_0 = arith.constant 0 : i32
    %c0_i32_1 = arith.constant 0 : i32
    return %arg0, %c0_i32, %c0_i32_0 : i32, i32, i32
  }
}

</mosaic_0001>

<llo_original>
// kernel: transformer_decoder_layer.5
$region0: #{transformer_decoder_layer.5}
  #allocation0 [shape = 'u32[]', space=smem, size = 0x4, offset = 0x4, fixed_abs, tag = 'smem constant byte address 0x4 - core index']
  #allocation1 [shape = 'u32[144,128]{1,0:T(1,128)}', space=vmem, size = 0x12000, scoped, tag = 'internal scratch']
  %s0 = inlined_call_operand.hbm [shape: f32[2,8,32], index: 0, kind: input, shape index: {}]
  %s1 = inlined_call_operand.hbm [shape: f32[32,64], index: 1, kind: input, shape index: {}]
  %s2 = inlined_call_operand.hbm [shape: f32[1,64], index: 2, kind: input, shape index: {}]
  %s3 = inlined_call_operand.hbm [shape: f32[64,32], index: 3, kind: input, shape index: {}]
  %s4 = inlined_call_operand.hbm [shape: f32[3,32], index: 4, kind: input, shape index: {}]
  %s5 = inlined_call_operand.hbm [shape: f32[2,8,32], index: 5, kind: output, shape index: {}]
  %s6 = sld [smem:[#allocation0]]
  $region73: #{transformer_decoder_layer.5} parent=0
    _
  %s8 = ssub.s32 1, %s6
  %s9 = scalar_select 0, %s8, %s6
  $region1: #{transformer_decoder_layer.5} parent=0
    #allocation2 [shape = 'u8[8192]{0}', space=vmem, size = 0x2000, scoped, tag = 'input window, operand 0']
    #allocation3 [shape = 's32[2]{0}', space=sflag, size = 0x8, scoped, tag = 'scoped memory for transformer_decoder_layer.5']
    #allocation4 [shape = 's32[2]{0}', space=sflag, size = 0x8, scoped, tag = 'scoped memory for transformer_decoder_layer.5']
    #allocation5 [shape = 'u8[16384]{0}', space=vmem, size = 0x4000, scoped, tag = 'input window, operand 1, single buffered']
    #allocation6 [shape = 's32[1]{0}', space=sflag, size = 0x4, scoped, tag = 'scoped memory for transformer_decoder_layer.5']
    #allocation7 [shape = 'u8[512]{0}', space=vmem, size = 0x400, scoped, tag = 'input window, operand 2, single buffered']
    #allocation8 [shape = 'u8[32768]{0}', space=vmem, size = 0x8000, scoped, tag = 'input window, operand 3, single buffered']
    #allocation9 [shape = 's32[1]{0}', space=sflag, size = 0x4, scoped, tag = 'scoped memory for transformer_decoder_layer.5']
    #allocation10 [shape = 'u8[2048]{0}', space=vmem, size = 0x800, scoped, tag = 'input window, operand 4, single buffered']
    #allocation11 [shape = 'u8[8192]{0}', space=vmem, size = 0x2000, scoped, tag = 'output window, operand 0']
    %10 = vsyncpa [#allocation3], 0
    %s11 = scalar_lea.sflag [#allocation3], 1
    %12 = vsyncpa %s11, 0
    %13 = vsyncpa [#allocation6], 0
    %14 = vsyncpa [#allocation9], 0
    %15 = vsyncpa [#allocation4], 0
    %s16 = scalar_lea.sflag [#allocation4], 1
    %17 = vsyncpa %s16, 0
    loop: start=0, step=1, limit=4
    $region2: #{transformer_decoder_layer.5} parent=1 // loop_pre_header
      _
    $region3: #{transformer_decoder_layer.5} parent=1 // loop_header
      %s19 = sphi 0, %s23
      %p20 = scmp.ge.s32.totalorder %s19, 4
      %s29 = sphi 0, %s31
      %s32 = sphi 0, %s29
      %s33 = sphi 0, %s32
      %s49 = sphi 0, %s33
      %s53 = sphi 0, %s53
      %s55 = sphi 0, %s53
      %s56 = sphi 0, %s55
      %s70 = sphi 0, %s56
      %s74 = sphi 0, %s74
      %s76 = sphi 0, %s74
      %s77 = sphi 0, %s76
      %s91 = sphi 0, %s77
      %s95 = sphi 0, %s95
      %s97 = sphi 0, %s95
      %s98 = sphi 0, %s97
      %s112 = sphi 0, %s98
      %s116 = sphi 0, %s116
      %s118 = sphi 0, %s116
      %s119 = sphi 0, %s118
      %s133 = sphi 0, %s119
      %s139 = sphi 0, %s141
      %s142 = sphi 0, %s139
      %s143 = sphi 0, %s142
      %s159 = sphi 0, %s143
    $region4: #{transformer_decoder_layer.5} parent=1 // loop_header_branch
      %22 = sbr.rel (%p20) target = $region8
    $region5: #{transformer_decoder_layer.5} parent=1 // loop_body
      %s24 = ssub.s32 %s19, 1
      %s25 = ssub.s32 %s19, 2
      %s26 = sadd.s32 %s19, 1
      %s27 = ssub.s32 %s19, %s26
      %p28 = scmp.eq.s32.totalorder %s27, 0
      %s30 = sadd.s32 %s29, 1
      %s31 = scalar_select %p28, %s29, %s30
      %p34 = pneg %p28
      %p35 = scmp.eq.s32.totalorder %s19, 1
      %p36 = por %p34, %p35
      %p37 = scmp.ne.s32.totalorder %s29, %s32
      %p38 = scmp.eq.s32.totalorder %s19, 0
      %p39 = por %p37, %p38
      %p40 = scmp.ne.s32.totalorder %s29, %s32
      %p41 = scmp.eq.s32.totalorder %s24, 1
      %p42 = por %p40, %p41
      %p43 = scmp.ne.s32.totalorder %s32, %s33
      %p44 = scmp.eq.s32.totalorder %s24, 0
      %p45 = por %p43, %p44
      %p46 = scmp.ne.s32.totalorder %s32, %s33
      %p47 = scmp.eq.s32.totalorder %s25, 1
      %p48 = por %p46, %p47
      %p50 = scmp.ne.s32.totalorder %s33, %s49
      %p51 = scmp.eq.s32.totalorder %s25, 0
      %p52 = por %p50, %p51
      %s54 = sadd.s32 %s53, 1
      %p57 = scmp.eq.s32.totalorder %s19, 1
      %p58 = scmp.ne.s32.totalorder %s53, %s55
      %p59 = scmp.eq.s32.totalorder %s19, 0
      %p60 = por %p58, %p59
      %p61 = scmp.ne.s32.totalorder %s53, %s55
      %p62 = scmp.eq.s32.totalorder %s24, 1
      %p63 = por %p61, %p62
      %p64 = scmp.ne.s32.totalorder %s55, %s56
      %p65 = scmp.eq.s32.totalorder %s24, 0
      %p66 = por %p64, %p65
      %p67 = scmp.ne.s32.totalorder %s55, %s56
      %p68 = scmp.eq.s32.totalorder %s25, 1
      %p69 = por %p67, %p68
      %p71 = scmp.ne.s32.totalorder %s56, %s70
      %p72 = scmp.eq.s32.totalorder %s25, 0
      %p73 = por %p71, %p72
      %s75 = sadd.s32 %s74, 1
      %p78 = scmp.eq.s32.totalorder %s19, 1
      %p79 = scmp.ne.s32.totalorder %s74, %s76
      %p80 = scmp.eq.s32.totalorder %s19, 0
      %p81 = por %p79, %p80
      %p82 = scmp.ne.s32.totalorder %s74, %s76
      %p83 = scmp.eq.s32.totalorder %s24, 1
      %p84 = por %p82, %p83
      %p85 = scmp.ne.s32.totalorder %s76, %s77
      %p86 = scmp.eq.s32.totalorder %s24, 0
      %p87 = por %p85, %p86
      %p88 = scmp.ne.s32.totalorder %s76, %s77
      %p89 = scmp.eq.s32.totalorder %s25, 1
      %p90 = por %p88, %p89
      %p92 = scmp.ne.s32.totalorder %s77, %s91
      %p93 = scmp.eq.s32.totalorder %s25, 0
      %p94 = por %p92, %p93
      %s96 = sadd.s32 %s95, 1
      %p99 = scmp.eq.s32.totalorder %s19, 1
      %p100 = scmp.ne.s32.totalorder %s95, %s97
      %p101 = scmp.eq.s32.totalorder %s19, 0
      %p102 = por %p100, %p101
      %p103 = scmp.ne.s32.totalorder %s95, %s97
      %p104 = scmp.eq.s32.totalorder %s24, 1
      %p105 = por %p103, %p104
      %p106 = scmp.ne.s32.totalorder %s97, %s98
      %p107 = scmp.eq.s32.totalorder %s24, 0
      %p108 = por %p106, %p107
      %p109 = scmp.ne.s32.totalorder %s97, %s98
      %p110 = scmp.eq.s32.totalorder %s25, 1
      %p111 = por %p109, %p110
      %p113 = scmp.ne.s32.totalorder %s98, %s112
      %p114 = scmp.eq.s32.totalorder %s25, 0
      %p115 = por %p113, %p114
      %s117 = sadd.s32 %s116, 1
      %p120 = scmp.eq.s32.totalorder %s19, 1
      %p121 = scmp.ne.s32.totalorder %s116, %s118
      %p122 = scmp.eq.s32.totalorder %s19, 0
      %p123 = por %p121, %p122
      %p124 = scmp.ne.s32.totalorder %s116, %s118
      %p125 = scmp.eq.s32.totalorder %s24, 1
      %p126 = por %p124, %p125
      %p127 = scmp.ne.s32.totalorder %s118, %s119
      %p128 = scmp.eq.s32.totalorder %s24, 0
      %p129 = por %p127, %p128
      %p130 = scmp.ne.s32.totalorder %s118, %s119
      %p131 = scmp.eq.s32.totalorder %s25, 1
      %p132 = por %p130, %p131
      %p134 = scmp.ne.s32.totalorder %s119, %s133
      %p135 = scmp.eq.s32.totalorder %s25, 0
      %p136 = por %p134, %p135
      %s137 = ssub.s32 %s19, %s26
      %p138 = scmp.eq.s32.totalorder %s137, 0
      %s140 = sadd.s32 %s139, 1
      %s141 = scalar_select %p138, %s139, %s140
      %p144 = pneg %p138
      %p145 = scmp.eq.s32.totalorder %s19, 1
      %p146 = por %p144, %p145
      %p147 = scmp.ne.s32.totalorder %s139, %s142
      %p148 = scmp.eq.s32.totalorder %s19, 0
      %p149 = por %p147, %p148
      %p150 = scmp.ne.s32.totalorder %s139, %s142
      %p151 = scmp.eq.s32.totalorder %s24, 1
      %p152 = por %p150, %p151
      %p153 = scmp.ne.s32.totalorder %s142, %s143
      %p154 = scmp.eq.s32.totalorder %s24, 0
      %p155 = por %p153, %p154
      %p156 = scmp.ne.s32.totalorder %s142, %s143
      %p157 = scmp.eq.s32.totalorder %s25, 1
      %p158 = por %p156, %p157
      %p160 = scmp.ne.s32.totalorder %s143, %s159
      %p161 = scmp.eq.s32.totalorder %s25, 0
      %p162 = por %p160, %p161
      %p163 = scmp.le.s32.totalorder 1, %s19
      %p164 = scmp.lt.s32.totalorder %s19, 3
      %p165 = pnand %p163, %p164
      %p166 = pneg %p165
      // Predicated region
      $region9: #{transformer_decoder_layer.5} parent=5 // pred_check
        _
      $region10: #{transformer_decoder_layer.5} parent=5 // pred_check_branch
        %168 = sbr.rel (%p165) target = $region12
      $region11: #{transformer_decoder_layer.5} parent=5 // pred_region
        %s169 = ssub.s32 %s19, 1
        // Predicated region
        $region13: #{transformer_decoder_layer.5} parent=11 // pred_check
          %p170 = pneg %p66
        $region14: #{transformer_decoder_layer.5} parent=11 // pred_check_branch
          %172 = sbr.rel (%p170) target = $region16
        $region15: #{transformer_decoder_layer.5} parent=11 // pred_region
          %s174 = ssub.s32 512, 512
          %175 = vsyncadd [#allocation6], %s174
          %s176 = sshll.u32 [#allocation5], 4
          %s177 = int_to_ptr.vmem [resolvable:$true] %s176
          %182 = dma.hbm_to_vmem [thread:$0]  %s1, 512, %s177, [#allocation6], 128, 128, 8
        $region16: #{transformer_decoder_layer.5} parent=11 // pred_fallthru
          _
        // Predicated region
        $region17: #{transformer_decoder_layer.5} parent=11 // pred_check
          %p183 = pneg %p87
        $region18: #{transformer_decoder_layer.5} parent=11 // pred_check_branch
          %185 = sbr.rel (%p183) target = $region20
        $region19: #{transformer_decoder_layer.5} parent=11 // pred_region
          %s187 = ssub.s32 16, 16
          %188 = vsyncadd [#allocation6], %s187
          %s190 = sshll.u32 [#allocation7], 4
          %s191 = int_to_ptr.vmem [resolvable:$true] %s190
          %193 = dma.hbm_to_vmem [thread:$0]  %s2, 16, %s191, [#allocation6]
        $region20: #{transformer_decoder_layer.5} parent=11 // pred_fallthru
          _
        // Predicated region
        $region21: #{transformer_decoder_layer.5} parent=11 // pred_check
          %p194 = pneg %p108
        $region22: #{transformer_decoder_layer.5} parent=11 // pred_check_branch
          %196 = sbr.rel (%p194) target = $region24
        $region23: #{transformer_decoder_layer.5} parent=11 // pred_region
          %s198 = ssub.s32 1024, 1024
          %199 = vsyncadd [#allocation9], %s198
          %s200 = sshll.u32 [#allocation8], 4
          %s201 = int_to_ptr.vmem [resolvable:$true] %s200
          %206 = dma.hbm_to_vmem [thread:$0]  %s3, 1024, %s201, [#allocation9], 128, 128, 8
        $region24: #{transformer_decoder_layer.5} parent=11 // pred_fallthru
          _
        // Predicated region
        $region25: #{transformer_decoder_layer.5} parent=11 // pred_check
          %p207 = pneg %p129
        $region26: #{transformer_decoder_layer.5} parent=11 // pred_check_branch
          %209 = sbr.rel (%p207) target = $region28
        $region27: #{transformer_decoder_layer.5} parent=11 // pred_region
          %s211 = ssub.s32 64, 64
          %212 = vsyncadd [#allocation9], %s211
          %s214 = sshll.u32 [#allocation10], 4
          %s215 = int_to_ptr.vmem [resolvable:$true] %s214
          %217 = dma.hbm_to_vmem [thread:$0]  %s4, 64, %s215, [#allocation9]
        $region28: #{transformer_decoder_layer.5} parent=11 // pred_fallthru
          _
      $region12: #{transformer_decoder_layer.5} parent=5 // pred_fallthru
        _
      %p218 = scmp.lt.s32.totalorder %s19, 2
      // Predicated region
      $region29: #{transformer_decoder_layer.5} parent=5 // pred_check
        %p219 = pneg %p218
      $region30: #{transformer_decoder_layer.5} parent=5 // pred_check_branch
        %221 = sbr.rel (%p219) target = $region32
      $region31: #{transformer_decoder_layer.5} parent=5 // pred_region
        // Predicated region
        $region33: #{transformer_decoder_layer.5} parent=31 // pred_check
          %p222 = pneg %p39
        $region34: #{transformer_decoder_layer.5} parent=31 // pred_check_branch
          %224 = sbr.rel (%p222) target = $region36
        $region35: #{transformer_decoder_layer.5} parent=31 // pred_region
          %s225 = sand.u32 %s29, 1
          %s226 = scalar_lea.sflag [#allocation3], %s225
          %s227 = sand.u32 %s29, 1
          %s228 = smul.addr %s227, 8
          %s229 = scalar_lea.vmem [#allocation2], %s228
          %s231 = ssub.s32 128, 128
          %232 = vsyncadd %s226, %s231
          %s233 = smul.addr %s19, 128
          %s234 = scalar_lea.hbm %s0, %s233
          %s236 = sshll.u32 %s229, 4
          %s237 = int_to_ptr.vmem [resolvable:$true] %s236
          %239 = dma.hbm_to_vmem [thread:$0]  %s234, 128, %s237, %s226
        $region36: #{transformer_decoder_layer.5} parent=31 // pred_fallthru
          _
      $region32: #{transformer_decoder_layer.5} parent=5 // pred_fallthru
        _
      %p240 = scmp.le.s32.totalorder 1, %s19
      %p241 = scmp.lt.s32.totalorder %s19, 3
      %p242 = pnand %p240, %p241
      %p243 = pneg %p242
      // Predicated region
      $region37: #{transformer_decoder_layer.5} parent=5 // pred_check
        _
      $region38: #{transformer_decoder_layer.5} parent=5 // pred_check_branch
        %245 = sbr.rel (%p242) target = $region40
      $region39: #{transformer_decoder_layer.5} parent=5 // pred_region
        %s246 = ssub.s32 %s19, 1
        %s247 = sand.u32 %s32, 1
        %s248 = scalar_lea.sflag [#allocation3], %s247
        %s249 = sand.u32 %s32, 1
        %s250 = smul.addr %s249, 8
        %s251 = scalar_lea.vmem [#allocation2], %s250
        // Predicated region
        $region41: #{transformer_decoder_layer.5} parent=39 // pred_check
          %p252 = pneg %p45
        $region42: #{transformer_decoder_layer.5} parent=39 // pred_check_branch
          %254 = sbr.rel (%p252) target = $region44
        $region43: #{transformer_decoder_layer.5} parent=39 // pred_region
          %255 = dma.done %s248, 128
        $region44: #{transformer_decoder_layer.5} parent=39 // pred_fallthru
          _
        // Predicated region
        $region45: #{transformer_decoder_layer.5} parent=39 // pred_check
          %p256 = pneg %p66
        $region46: #{transformer_decoder_layer.5} parent=39 // pred_check_branch
          %258 = sbr.rel (%p256) target = $region48
        $region47: #{transformer_decoder_layer.5} parent=39 // pred_region
          %259 = dma.done [#allocation6], 512
        $region48: #{transformer_decoder_layer.5} parent=39 // pred_fallthru
          _
        // Predicated region
        $region49: #{transformer_decoder_layer.5} parent=39 // pred_check
          %p260 = pneg %p87
        $region50: #{transformer_decoder_layer.5} parent=39 // pred_check_branch
          %262 = sbr.rel (%p260) target = $region52
        $region51: #{transformer_decoder_layer.5} parent=39 // pred_region
          %263 = dma.done [#allocation6], 16
        $region52: #{transformer_decoder_layer.5} parent=39 // pred_fallthru
          _
        // Predicated region
        $region53: #{transformer_decoder_layer.5} parent=39 // pred_check
          %p264 = pneg %p108
        $region54: #{transformer_decoder_layer.5} parent=39 // pred_check_branch
          %266 = sbr.rel (%p264) target = $region56
        $region55: #{transformer_decoder_layer.5} parent=39 // pred_region
          %267 = dma.done [#allocation9], 1024
        $region56: #{transformer_decoder_layer.5} parent=39 // pred_fallthru
          _
        // Predicated region
        $region57: #{transformer_decoder_layer.5} parent=39 // pred_check
          %p268 = pneg %p129
        $region58: #{transformer_decoder_layer.5} parent=39 // pred_check_branch
          %270 = sbr.rel (%p268) target = $region60
        $region59: #{transformer_decoder_layer.5} parent=39 // pred_region
          %271 = dma.done [#allocation9], 64
        $region60: #{transformer_decoder_layer.5} parent=39 // pred_fallthru
          _
        %s272 = sand.u32 %s32, 1
        %s273 = scalar_lea.sflag [#allocation3], %s272
        %s274 = sand.u32 %s32, 1
        %s275 = smul.addr %s274, 8
        %s276 = scalar_lea.vmem [#allocation2], %s275
        %p277 = pneg %p45
        %p278 = pneg %p42
        %p279 = pneg %p66
        %p280 = pneg %p63
        %p281 = pneg %p87
        %p282 = pneg %p84
        %p283 = pneg %p108
        %p284 = pneg %p105
        %p285 = pneg %p129
        %p286 = pneg %p126
        %p287 = pneg %p155
        %p288 = pneg %p152
        %s289 = sand.u32 %s142, 1
        %s290 = scalar_lea.sflag [#allocation4], %s289
        %s291 = sand.u32 %s142, 1
        %s292 = smul.addr %s291, 8
        %s293 = scalar_lea.vmem [#allocation11], %s292
        %v294 = vld [vmem:[%s251] sm:$0xff]
        %v295 = vld [vmem:[#allocation10] sm:$0x7]
        %v296 = vld [vmem:[#allocation5] sm:$0xff]
        %v297 = vld [vmem:[#allocation5 + $0x8] sm:$0xff]
        %v298 = vld [vmem:[#allocation5 + $0x10] sm:$0xff]
        %v299 = vld [vmem:[#allocation5 + $0x18] sm:$0xff]
        %v300 = vld [vmem:[#allocation7] sm:$0x1]
        %v302 = vlaneseq
        %v303 = vshrl.u32 %v302, 7
        %v304 = vsub.s32 0, %v303
        %v305 = vrot.slane %v300, %v304
        %vm307 = vcmask 261120
        %v309 = vsel %vm307, %v294, 0
        %311 = vmatprep.subr.mxu0 0.0
        %312 = vmatpush1.msra.mxu0 %v296
        %313 = vmatprep.subr.mxu0 0.0
        %314 = vmatpush1.msra.mxu0 %v297
        %315 = vmatprep.subr.mxu0 0.0
        %316 = vmatpush1.msra.mxu0 %v298
        %317 = vmatprep.subr.mxu0 0.0
        %318 = vmatpush1.msra.mxu0 %v299
        %319 = vmatprep.subr.mxu0 0.0
        %320 = vmatpush1.msra.mxu0 0.0
        %321 = vmatprep.subr.mxu0 0.0
        %322 = vmatpush1.msra.mxu0 0.0
        %323 = vmatprep.subr.mxu0 0.0
        %324 = vmatpush1.msra.mxu0 0.0
        %325 = vmatprep.subr.mxu0 0.0
        %326 = vmatpush1.msra.mxu0 0.0
        %327 = vmatprep.subr.mxu0 0.0
        %328 = vmatpush1.msra.mxu0 0.0
        %329 = vmatprep.subr.mxu0 0.0
        %330 = vmatpush1.msra.mxu0 0.0
        %331 = vmatprep.subr.mxu0 0.0
        %332 = vmatpush1.msra.mxu0 0.0
        %333 = vmatprep.subr.mxu0 0.0
        %334 = vmatpush1.msra.mxu0 0.0
        %335 = vmatprep.subr.mxu0 0.0
        %336 = vmatpush1.msra.mxu0 0.0
        %337 = vmatprep.subr.mxu0 0.0
        %338 = vmatpush1.msra.mxu0 0.0
        %339 = vmatprep.subr.mxu0 0.0
        %340 = vmatpush1.msra.mxu0 0.0
        %341 = vmatprep.subr.mxu0 0.0
        %342 = vmatpush1.msra.mxu0 0.0
        %343 = vmatprep.subr.mxu0 0.0
        %344 = vmatpush1.msra.mxu0 0.0
        %345 = vmatprep.subr.mxu0 0.0
        %346 = vmatpush1.msra.mxu0 0.0
        %347 = vmatprep.subr.mxu0 0.0
        %348 = vmatpush1.msra.mxu0 0.0
        %349 = vmatprep.subr.mxu0 0.0
        %350 = vmatpush1.msra.mxu0 0.0
        %351 = vmatprep.subr.mxu0 0.0
        %352 = vmatpush1.msra.mxu0 0.0
        %353 = vmatprep.subr.mxu0 0.0
        %354 = vmatpush1.msra.mxu0 0.0
        %355 = vmatprep.subr.mxu0 0.0
        %356 = vmatpush1.msra.mxu0 0.0
        %357 = vmatprep.subr.mxu0 0.0
        %358 = vmatpush1.msra.mxu0 0.0
        %359 = vmatprep.subr.mxu0 0.0
        %360 = vmatpush1.msra.mxu0 0.0
        %361 = vmatprep.subr.mxu0 0.0
        %362 = vmatpush1.msra.mxu0 0.0
        %363 = vmatprep.subr.mxu0 0.0
        %364 = vmatpush1.msra.mxu0 0.0
        %365 = vmatprep.subr.mxu0 0.0
        %366 = vmatpush1.msra.mxu0 0.0
        %367 = vmatprep.subr.mxu0 0.0
        %368 = vmatpush1.msra.mxu0 0.0
        %369 = vmatprep.subr.mxu0 0.0
        %370 = vmatpush1.msra.mxu0 0.0
        %371 = vmatprep.subr.mxu0 0.0
        %372 = vmatpush1.msra.mxu0 0.0
        %373 = vmatprep.subr.mxu0 0.0
        %374 = vmatpush1.msra.mxu0 0.0
        %375 = vmatprep.mubr.f32.mxu0 0.0
        %376 = vmatmul.mubr.f32.gmra.mrb[0].mxu0 %v309
        %v377 = vpop.f32.mrb[0].mxu0
        %v378 = vadd.f32 %v305, %v377
        %v379 = vpop.f32.mrb[0].mxu0
        %380 = vdwg.mxu0
        %v381 = vmax.f32 %v378, 0.0
        %v382 = vld [vmem:[#allocation8] sm:$0xff]
        %v383 = vld [vmem:[#allocation8 + $0x8] sm:$0xff]
        %v384 = vld [vmem:[#allocation8 + $0x10] sm:$0xff]
        %v385 = vld [vmem:[#allocation8 + $0x18] sm:$0xff]
        %v386 = vld [vmem:[#allocation8 + $0x20] sm:$0xff]
        %v387 = vld [vmem:[#allocation8 + $0x28] sm:$0xff]
        %v388 = vld [vmem:[#allocation8 + $0x30] sm:$0xff]
        %v389 = vld [vmem:[#allocation8 + $0x38] sm:$0xff]
        %v390 = vlaneseq
        %v391 = vshrl.u32 %v390, 7
        %v392 = vsub.s32 0, %v391
        %v393 = vrot.slane %v295, %v392
        %vm394 = vcmask 523264
        %v396 = vsel %vm394, %v381, 0
        %398 = vmatprep.subr.mxu0 0.0
        %399 = vmatpush1.msra.mxu0 %v382
        %400 = vmatprep.subr.mxu0 0.0
        %401 = vmatpush1.msra.mxu0 %v383
        %402 = vmatprep.subr.mxu0 0.0
        %403 = vmatpush1.msra.mxu0 %v384
        %404 = vmatprep.subr.mxu0 0.0
        %405 = vmatpush1.msra.mxu0 %v385
        %406 = vmatprep.subr.mxu0 0.0
        %407 = vmatpush1.msra.mxu0 %v386
        %408 = vmatprep.subr.mxu0 0.0
        %409 = vmatpush1.msra.mxu0 %v387
        %410 = vmatprep.subr.mxu0 0.0
        %411 = vmatpush1.msra.mxu0 %v388
        %412 = vmatprep.subr.mxu0 0.0
        %413 = vmatpush1.msra.mxu0 %v389
        %414 = vmatprep.subr.mxu0 0.0
        %415 = vmatpush1.msra.mxu0 0.0
        %416 = vmatprep.subr.mxu0 0.0
        %417 = vmatpush1.msra.mxu0 0.0
        %418 = vmatprep.subr.mxu0 0.0
        %419 = vmatpush1.msra.mxu0 0.0
        %420 = vmatprep.subr.mxu0 0.0
        %421 = vmatpush1.msra.mxu0 0.0
        %422 = vmatprep.subr.mxu0 0.0
        %423 = vmatpush1.msra.mxu0 0.0
        %424 = vmatprep.subr.mxu0 0.0
        %425 = vmatpush1.msra.mxu0 0.0
        %426 = vmatprep.subr.mxu0 0.0
        %427 = vmatpush1.msra.mxu0 0.0
        %428 = vmatprep.subr.mxu0 0.0
        %429 = vmatpush1.msra.mxu0 0.0
        %430 = vmatprep.subr.mxu0 0.0
        %431 = vmatpush1.msra.mxu0 0.0
        %432 = vmatprep.subr.mxu0 0.0
        %433 = vmatpush1.msra.mxu0 0.0
        %434 = vmatprep.subr.mxu0 0.0
        %435 = vmatpush1.msra.mxu0 0.0
        %436 = vmatprep.subr.mxu0 0.0
        %437 = vmatpush1.msra.mxu0 0.0
        %438 = vmatprep.subr.mxu0 0.0
        %439 = vmatpush1.msra.mxu0 0.0
        %440 = vmatprep.subr.mxu0 0.0
        %441 = vmatpush1.msra.mxu0 0.0
        %442 = vmatprep.subr.mxu0 0.0
        %443 = vmatpush1.msra.mxu0 0.0
        %444 = vmatprep.subr.mxu0 0.0
        %445 = vmatpush1.msra.mxu0 0.0
        %446 = vmatprep.subr.mxu0 0.0
        %447 = vmatpush1.msra.mxu0 0.0
        %448 = vmatprep.subr.mxu0 0.0
        %449 = vmatpush1.msra.mxu0 0.0
        %450 = vmatprep.subr.mxu0 0.0
        %451 = vmatpush1.msra.mxu0 0.0
        %452 = vmatprep.subr.mxu0 0.0
        %453 = vmatpush1.msra.mxu0 0.0
        %454 = vmatprep.subr.mxu0 0.0
        %455 = vmatpush1.msra.mxu0 0.0
        %456 = vmatprep.subr.mxu0 0.0
        %457 = vmatpush1.msra.mxu0 0.0
        %458 = vmatprep.subr.mxu0 0.0
        %459 = vmatpush1.msra.mxu0 0.0
        %460 = vmatprep.subr.mxu0 0.0
        %461 = vmatpush1.msra.mxu0 0.0
        %462 = vmatprep.mubr.f32.mxu0 0.0
        %463 = vmatmul.mubr.f32.gmra.mrb[0].mxu0 %v396
        %v464 = vpop.f32.mrb[0].mxu0
        %v465 = vadd.f32 %v393, %v464
        %v466 = vpop.f32.mrb[0].mxu0
        %467 = vdwg.mxu0
        %v468 = vadd.f32 %v294, %v465
        %v469 = vsel %vm307, %v468, 0.0
        %470 = vadd.xlane.f32.xlu0 %v469
        %v471 = vpop.xlane.xlu0 %470
        %v472 = vrcp.pop 32.0
        %v473 = vmul.f32 %v471, %v472
        %v474 = vmul.f32 %v468, %v468
        %v475 = vsel %vm307, %v474, 0.0
        %476 = vadd.xlane.f32.xlu0 %v475
        %v477 = vpop.xlane.xlu0 %476
        %v478 = vmul.f32 %v477, %v472
        %v479 = vmul.f32 %v473, %v473
        %v480 = vsub.f32 %v478, %v479
        %v481 = vsub.f32 %v468, %v473
        %v482 = vadd.f32 %v480, 1e-05
        %v483 = vrsqrt.pop %v482
        %v484 = vmul.f32 %v481, %v483
        %v485 = vlaneseq
        %v486 = vshrl.u32 %v485, 7
        %v487 = vsub.s32 1, %v486
        %v488 = vrot.slane %v295, %v487
        %v489 = vmul.f32 %v484, %v488
        %v490 = vlaneseq
        %v491 = vshrl.u32 %v490, 7
        %v492 = vsub.s32 2, %v491
        %v493 = vrot.slane %v295, %v492
        %v494 = vadd.f32 %v489, %v493
        %495 = vst.msk [vmem:[%s293] sm:$0xff] %vm307, %v494
        %s496 = sand.u32 %s142, 1
        %s497 = scalar_lea.sflag [#allocation4], %s496
        %s498 = sand.u32 %s142, 1
        %s499 = smul.addr %s498, 8
        %s500 = scalar_lea.vmem [#allocation11], %s499
        // Predicated region
        $region61: #{transformer_decoder_layer.5} parent=39 // pred_check
          %p501 = pneg %p152
        $region62: #{transformer_decoder_layer.5} parent=39 // pred_check_branch
          %503 = sbr.rel (%p501) target = $region64
        $region63: #{transformer_decoder_layer.5} parent=39 // pred_region
          %s505 = ssub.s32 128, 128
          %506 = vsyncadd %s497, %s505
          %s507 = smul.addr %s24, 128
          %s508 = scalar_lea.hbm %s5, %s507
          %s510 = sshll.u32 %s500, 4
          %s511 = int_to_ptr.vmem [resolvable:$true] %s510
          %513 = dma.vmem_to_hbm [thread:$0]  %s511, 128, %s508, %s497
        $region64: #{transformer_decoder_layer.5} parent=39 // pred_fallthru
          _
      $region40: #{transformer_decoder_layer.5} parent=5 // pred_fallthru
        _
      %p514 = scmp.le.s32.totalorder 2, %s19
      // Predicated region
      $region65: #{transformer_decoder_layer.5} parent=5 // pred_check
        %p515 = pneg %p514
      $region66: #{transformer_decoder_layer.5} parent=5 // pred_check_branch
        %517 = sbr.rel (%p515) target = $region68
      $region67: #{transformer_decoder_layer.5} parent=5 // pred_region
        %s518 = ssub.s32 %s19, 2
        // Predicated region
        $region69: #{transformer_decoder_layer.5} parent=67 // pred_check
          %p519 = pneg %p158
        $region70: #{transformer_decoder_layer.5} parent=67 // pred_check_branch
          %521 = sbr.rel (%p519) target = $region72
        $region71: #{transformer_decoder_layer.5} parent=67 // pred_region
          %s522 = sand.u32 %s143, 1
          %s523 = scalar_lea.sflag [#allocation4], %s522
          %s524 = sand.u32 %s143, 1
          %s525 = smul.addr %s524, 8
          %s526 = scalar_lea.vmem [#allocation11], %s525
          %527 = dma.done %s523, 128
        $region72: #{transformer_decoder_layer.5} parent=67 // pred_fallthru
          _
      $region68: #{transformer_decoder_layer.5} parent=5 // pred_fallthru
        _
    $region6: #{transformer_decoder_layer.5} parent=1 // loop_footer
      %s23 = sadd.s32 1, %s19
    $region7: #{transformer_decoder_layer.5} parent=1 // loop_footer_branch
      %18 = sbr.rel target = $region3
    $region8: #{transformer_decoder_layer.5} parent=1 // loop_exit
      _
    %528 = vsyncpa [#allocation3], 1
    %s529 = scalar_lea.sflag [#allocation3], 1
    %530 = vsyncpa %s529, 1
    %531 = vsyncpa [#allocation6], 1
    %532 = vsyncpa [#allocation9], 1
    %533 = vsyncpa [#allocation4], 1
    %s534 = scalar_lea.sflag [#allocation4], 1
    %535 = vsyncpa %s534, 1

// kernel: transformer_decoder_layer.4
$region0: #{transformer_decoder_layer.4}
  #allocation0 [shape = 'u32[]', space=smem, size = 0x4, offset = 0x4, fixed_abs, tag = 'smem constant byte address 0x4 - core index']
  #allocation1 [shape = 'u32[144,128]{1,0:T(1,128)}', space=vmem, size = 0x12000, scoped, tag = 'internal scratch']
  #allocation2 [shape = 'f32[8,32]{1,0:T(8,128)}', space=vmem, size = 0x1000, scoped, tag = 'scratch operand']
  %s0 = inlined_call_operand.hbm [shape: f32[2,8,32], index: 0, kind: input, shape index: {}]
  %s1 = inlined_call_operand.hbm [shape: f32[2,8,32], index: 1, kind: input, shape index: {}]
  %s2 = inlined_call_operand.hbm [shape: f32[2,12,32], index: 2, kind: input, shape index: {}]
  %s3 = inlined_call_operand.hbm [shape: f32[2,12,32], index: 3, kind: input, shape index: {}]
  %s4 = inlined_call_operand.hbm [shape: f32[32,32], index: 4, kind: input, shape index: {}]
  %s5 = inlined_call_operand.hbm [shape: f32[32,32], index: 5, kind: input, shape index: {}]
  %s6 = inlined_call_operand.hbm [shape: f32[32,32], index: 6, kind: input, shape index: {}]
  %s7 = inlined_call_operand.hbm [shape: f32[32,32], index: 7, kind: input, shape index: {}]
  %s8 = inlined_call_operand.hbm [shape: f32[6,32], index: 8, kind: input, shape index: {}]
  %s9 = inlined_call_operand.hbm [shape: f32[2,8,32], index: 9, kind: output, shape index: {}]
  %s10 = sld [smem:[#allocation0]]
  $region105: #{transformer_decoder_layer.4} parent=0
    _
  %s12 = ssub.s32 1, %s10
  %s13 = scalar_select 0, %s12, %s10
  $region1: #{transformer_decoder_layer.4} parent=0
    #allocation3 [shape = 'u8[8192]{0}', space=vmem, size = 0x2000, scoped, tag = 'input window, operand 0']
    #allocation4 [shape = 's32[2]{0}', space=sflag, size = 0x8, scoped, tag = 'scoped memory for transformer_decoder_layer.4']
    #allocation5 [shape = 's32[2]{0}', space=sflag, size = 0x8, scoped, tag = 'scoped memory for transformer_decoder_layer.4']
    #allocation6 [shape = 'u8[8192]{0}', space=vmem, size = 0x2000, scoped, tag = 'input window, operand 1']
    #allocation7 [shape = 's32[2]{0}', space=sflag, size = 0x8, scoped, tag = 'scoped memory for transformer_decoder_layer.4']
    #allocation8 [shape = 'u8[16384]{0}', space=vmem, size = 0x4000, scoped, tag = 'input window, operand 2']
    #allocation9 [shape = 'u8[16384]{0}', space=vmem, size = 0x4000, scoped, tag = 'input window, operand 3']
    #allocation10 [shape = 's32[2]{0}', space=sflag, size = 0x8, scoped, tag = 'scoped memory for transformer_decoder_layer.4']
    #allocation11 [shape = 'u8[16384]{0}', space=vmem, size = 0x4000, scoped, tag = 'input window, operand 4, single buffered']
    #allocation12 [shape = 'u8[16384]{0}', space=vmem, size = 0x4000, scoped, tag = 'input window, operand 5, single buffered']
    #allocation13 [shape = 's32[1]{0}', space=sflag, size = 0x4, scoped, tag = 'scoped memory for transformer_decoder_layer.4']
    #allocation14 [shape = 'u8[16384]{0}', space=vmem, size = 0x4000, scoped, tag = 'input window, operand 6, single buffered']
    #allocation15 [shape = 'u8[16384]{0}', space=vmem, size = 0x4000, scoped, tag = 'input window, operand 7, single buffered']
    #allocation16 [shape = 's32[1]{0}', space=sflag, size = 0x4, scoped, tag = 'scoped memory for transformer_decoder_layer.4']
    #allocation17 [shape = 'u8[4096]{0}', space=vmem, size = 0x1000, scoped, tag = 'input window, operand 8, single buffered']
    #allocation18 [shape = 'u8[8192]{0}', space=vmem, size = 0x2000, scoped, tag = 'output window, operand 0']
    %14 = vsyncpa [#allocation4], 0
    %s15 = scalar_lea.sflag [#allocation4], 1
    %16 = vsyncpa %s15, 0
    %17 = vsyncpa [#allocation7], 0
    %s18 = scalar_lea.sflag [#allocation7], 1
    %19 = vsyncpa %s18, 0
    %20 = vsyncpa [#allocation10], 0
    %s21 = scalar_lea.sflag [#allocation10], 1
    %22 = vsyncpa %s21, 0
    %23 = vsyncpa [#allocation13], 0
    %24 = vsyncpa [#allocation16], 0
    %25 = vsyncpa [#allocation5], 0
    %s26 = scalar_lea.sflag [#allocation5], 1
    %27 = vsyncpa %s26, 0
    loop: start=0, step=1, limit=4
    $region2: #{transformer_decoder_layer.4} parent=1 // loop_pre_header
      _
    $region3: #{transformer_decoder_layer.4} parent=1 // loop_header
      %s29 = sphi 0, %s33
      %p30 = scmp.ge.s32.totalorder %s29, 4
      %s39 = sphi 0, %s41
      %s42 = sphi 0, %s39
      %s43 = sphi 0, %s42
      %s59 = sphi 0, %s43
      %s65 = sphi 0, %s67
      %s68 = sphi 0, %s65
      %s69 = sphi 0, %s68
      %s85 = sphi 0, %s69
      %s91 = sphi 0, %s93
      %s94 = sphi 0, %s91
      %s95 = sphi 0, %s94
      %s111 = sphi 0, %s95
      %s117 = sphi 0, %s119
      %s120 = sphi 0, %s117
      %s121 = sphi 0, %s120
      %s137 = sphi 0, %s121
      %s141 = sphi 0, %s141
      %s143 = sphi 0, %s141
      %s144 = sphi 0, %s143
      %s158 = sphi 0, %s144
      %s162 = sphi 0, %s162
      %s164 = sphi 0, %s162
      %s165 = sphi 0, %s164
      %s179 = sphi 0, %s165
      %s183 = sphi 0, %s183
      %s185 = sphi 0, %s183
      %s186 = sphi 0, %s185
      %s200 = sphi 0, %s186
      %s204 = sphi 0, %s204
      %s206 = sphi 0, %s204
      %s207 = sphi 0, %s206
      %s221 = sphi 0, %s207
      %s225 = sphi 0, %s225
      %s227 = sphi 0, %s225
      %s228 = sphi 0, %s227
      %s242 = sphi 0, %s228
      %s248 = sphi 0, %s250
      %s251 = sphi 0, %s248
      %s252 = sphi 0, %s251
      %s268 = sphi 0, %s252
    $region4: #{transformer_decoder_layer.4} parent=1 // loop_header_branch
      %32 = sbr.rel (%p30) target = $region8
    $region5: #{transformer_decoder_layer.4} parent=1 // loop_body
      %s34 = ssub.s32 %s29, 1
      %s35 = ssub.s32 %s29, 2
      %s36 = sadd.s32 %s29, 1
      %s37 = ssub.s32 %s29, %s36
      %p38 = scmp.eq.s32.totalorder %s37, 0
      %s40 = sadd.s32 %s39, 1
      %s41 = scalar_select %p38, %s39, %s40
      %p44 = pneg %p38
      %p45 = scmp.eq.s32.totalorder %s29, 1
      %p46 = por %p44, %p45
      %p47 = scmp.ne.s32.totalorder %s39, %s42
      %p48 = scmp.eq.s32.totalorder %s29, 0
      %p49 = por %p47, %p48
      %p50 = scmp.ne.s32.totalorder %s39, %s42
      %p51 = scmp.eq.s32.totalorder %s34, 1
      %p52 = por %p50, %p51
      %p53 = scmp.ne.s32.totalorder %s42, %s43
      %p54 = scmp.eq.s32.totalorder %s34, 0
      %p55 = por %p53, %p54
      %p56 = scmp.ne.s32.totalorder %s42, %s43
      %p57 = scmp.eq.s32.totalorder %s35, 1
      %p58 = por %p56, %p57
      %p60 = scmp.ne.s32.totalorder %s43, %s59
      %p61 = scmp.eq.s32.totalorder %s35, 0
      %p62 = por %p60, %p61
      %s63 = ssub.s32 %s29, %s36
      %p64 = scmp.eq.s32.totalorder %s63, 0
      %s66 = sadd.s32 %s65, 1
      %s67 = scalar_select %p64, %s65, %s66
      %p70 = pneg %p64
      %p71 = scmp.eq.s32.totalorder %s29, 1
      %p72 = por %p70, %p71
      %p73 = scmp.ne.s32.totalorder %s65, %s68
      %p74 = scmp.eq.s32.totalorder %s29, 0
      %p75 = por %p73, %p74
      %p76 = scmp.ne.s32.totalorder %s65, %s68
      %p77 = scmp.eq.s32.totalorder %s34, 1
      %p78 = por %p76, %p77
      %p79 = scmp.ne.s32.totalorder %s68, %s69
      %p80 = scmp.eq.s32.totalorder %s34, 0
      %p81 = por %p79, %p80
      %p82 = scmp.ne.s32.totalorder %s68, %s69
      %p83 = scmp.eq.s32.totalorder %s35, 1
      %p84 = por %p82, %p83
      %p86 = scmp.ne.s32.totalorder %s69, %s85
      %p87 = scmp.eq.s32.totalorder %s35, 0
      %p88 = por %p86, %p87
      %s89 = ssub.s32 %s29, %s36
      %p90 = scmp.eq.s32.totalorder %s89, 0
      %s92 = sadd.s32 %s91, 1
      %s93 = scalar_select %p90, %s91, %s92
      %p96 = pneg %p90
      %p97 = scmp.eq.s32.totalorder %s29, 1
      %p98 = por %p96, %p97
      %p99 = scmp.ne.s32.totalorder %s91, %s94
      %p100 = scmp.eq.s32.totalorder %s29, 0
      %p101 = por %p99, %p100
      %p102 = scmp.ne.s32.totalorder %s91, %s94
      %p103 = scmp.eq.s32.totalorder %s34, 1
      %p104 = por %p102, %p103
      %p105 = scmp.ne.s32.totalorder %s94, %s95
      %p106 = scmp.eq.s32.totalorder %s34, 0
      %p107 = por %p105, %p106
      %p108 = scmp.ne.s32.totalorder %s94, %s95
      %p109 = scmp.eq.s32.totalorder %s35, 1
      %p110 = por %p108, %p109
      %p112 = scmp.ne.s32.totalorder %s95, %s111
      %p113 = scmp.eq.s32.totalorder %s35, 0
      %p114 = por %p112, %p113
      %s115 = ssub.s32 %s29, %s36
      %p116 = scmp.eq.s32.totalorder %s115, 0
      %s118 = sadd.s32 %s117, 1
      %s119 = scalar_select %p116, %s117, %s118
      %p122 = pneg %p116
      %p123 = scmp.eq.s32.totalorder %s29, 1
      %p124 = por %p122, %p123
      %p125 = scmp.ne.s32.totalorder %s117, %s120
      %p126 = scmp.eq.s32.totalorder %s29, 0
      %p127 = por %p125, %p126
      %p128 = scmp.ne.s32.totalorder %s117, %s120
      %p129 = scmp.eq.s32.totalorder %s34, 1
      %p130 = por %p128, %p129
      %p131 = scmp.ne.s32.totalorder %s120, %s121
      %p132 = scmp.eq.s32.totalorder %s34, 0
      %p133 = por %p131, %p132
      %p134 = scmp.ne.s32.totalorder %s120, %s121
      %p135 = scmp.eq.s32.totalorder %s35, 1
      %p136 = por %p134, %p135
      %p138 = scmp.ne.s32.totalorder %s121, %s137
      %p139 = scmp.eq.s32.totalorder %s35, 0
      %p140 = por %p138, %p139
      %s142 = sadd.s32 %s141, 1
      %p145 = scmp.eq.s32.totalorder %s29, 1
      %p146 = scmp.ne.s32.totalorder %s141, %s143
      %p147 = scmp.eq.s32.totalorder %s29, 0
      %p148 = por %p146, %p147
      %p149 = scmp.ne.s32.totalorder %s141, %s143
      %p150 = scmp.eq.s32.totalorder %s34, 1
      %p151 = por %p149, %p150
      %p152 = scmp.ne.s32.totalorder %s143, %s144
      %p153 = scmp.eq.s32.totalorder %s34, 0
      %p154 = por %p152, %p153
      %p155 = scmp.ne.s32.totalorder %s143, %s144
      %p156 = scmp.eq.s32.totalorder %s35, 1
      %p157 = por %p155, %p156
      %p159 = scmp.ne.s32.totalorder %s144, %s158
      %p160 = scmp.eq.s32.totalorder %s35, 0
      %p161 = por %p159, %p160
      %s163 = sadd.s32 %s162, 1
      %p166 = scmp.eq.s32.totalorder %s29, 1
      %p167 = scmp.ne.s32.totalorder %s162, %s164
      %p168 = scmp.eq.s32.totalorder %s29, 0
      %p169 = por %p167, %p168
      %p170 = scmp.ne.s32.totalorder %s162, %s164
      %p171 = scmp.eq.s32.totalorder %s34, 1
      %p172 = por %p170, %p171
      %p173 = scmp.ne.s32.totalorder %s164, %s165
      %p174 = scmp.eq.s32.totalorder %s34, 0
      %p175 = por %p173, %p174
      %p176 = scmp.ne.s32.totalorder %s164, %s165
      %p177 = scmp.eq.s32.totalorder %s35, 1
      %p178 = por %p176, %p177
      %p180 = scmp.ne.s32.totalorder %s165, %s179
      %p181 = scmp.eq.s32.totalorder %s35, 0
      %p182 = por %p180, %p181
      %s184 = sadd.s32 %s183, 1
      %p187 = scmp.eq.s32.totalorder %s29, 1
      %p188 = scmp.ne.s32.totalorder %s183, %s185
      %p189 = scmp.eq.s32.totalorder %s29, 0
      %p190 = por %p188, %p189
      %p191 = scmp.ne.s32.totalorder %s183, %s185
      %p192 = scmp.eq.s32.totalorder %s34, 1
      %p193 = por %p191, %p192
      %p194 = scmp.ne.s32.totalorder %s185, %s186
      %p195 = scmp.eq.s32.totalorder %s34, 0
      %p196 = por %p194, %p195
      %p197 = scmp.ne.s32.totalorder %s185, %s186
      %p198 = scmp.eq.s32.totalorder %s35, 1
      %p199 = por %p197, %p198
      %p201 = scmp.ne.s32.totalorder %s186, %s200
      %p202 = scmp.eq.s32.totalorder %s35, 0
      %p203 = por %p201, %p202
      %s205 = sadd.s32 %s204, 1
      %p208 = scmp.eq.s32.totalorder %s29, 1
      %p209 = scmp.ne.s32.totalorder %s204, %s206
      %p210 = scmp.eq.s32.totalorder %s29, 0
      %p211 = por %p209, %p210
      %p212 = scmp.ne.s32.totalorder %s204, %s206
      %p213 = scmp.eq.s32.totalorder %s34, 1
      %p214 = por %p212, %p213
      %p215 = scmp.ne.s32.totalorder %s206, %s207
      %p216 = scmp.eq.s32.totalorder %s34, 0
      %p217 = por %p215, %p216
      %p218 = scmp.ne.s32.totalorder %s206, %s207
      %p219 = scmp.eq.s32.totalorder %s35, 1
      %p220 = por %p218, %p219
      %p222 = scmp.ne.s32.totalorder %s207, %s221
      %p223 = scmp.eq.s32.totalorder %s35, 0
      %p224 = por %p222, %p223
      %s226 = sadd.s32 %s225, 1
      %p229 = scmp.eq.s32.totalorder %s29, 1
      %p230 = scmp.ne.s32.totalorder %s225, %s227
      %p231 = scmp.eq.s32.totalorder %s29, 0
      %p232 = por %p230, %p231
      %p233 = scmp.ne.s32.totalorder %s225, %s227
      %p234 = scmp.eq.s32.totalorder %s34, 1
      %p235 = por %p233, %p234
      %p236 = scmp.ne.s32.totalorder %s227, %s228
      %p237 = scmp.eq.s32.totalorder %s34, 0
      %p238 = por %p236, %p237
      %p239 = scmp.ne.s32.totalorder %s227, %s228
      %p240 = scmp.eq.s32.totalorder %s35, 1
      %p241 = por %p239, %p240
      %p243 = scmp.ne.s32.totalorder %s228, %s242
      %p244 = scmp.eq.s32.totalorder %s35, 0
      %p245 = por %p243, %p244
      %s246 = ssub.s32 %s29, %s36
      %p247 = scmp.eq.s32.totalorder %s246, 0
      %s249 = sadd.s32 %s248, 1
      %s250 = scalar_select %p247, %s248, %s249
      %p253 = pneg %p247
      %p254 = scmp.eq.s32.totalorder %s29, 1
      %p255 = por %p253, %p254
      %p256 = scmp.ne.s32.totalorder %s248, %s251
      %p257 = scmp.eq.s32.totalorder %s29, 0
      %p258 = por %p256, %p257
      %p259 = scmp.ne.s32.totalorder %s248, %s251
      %p260 = scmp.eq.s32.totalorder %s34, 1
      %p261 = por %p259, %p260
      %p262 = scmp.ne.s32.totalorder %s251, %s252
      %p263 = scmp.eq.s32.totalorder %s34, 0
      %p264 = por %p262, %p263
      %p265 = scmp.ne.s32.totalorder %s251, %s252
      %p266 = scmp.eq.s32.totalorder %s35, 1
      %p267 = por %p265, %p266
      %p269 = scmp.ne.s32.totalorder %s252, %s268
      %p270 = scmp.eq.s32.totalorder %s35, 0
      %p271 = por %p269, %p270
      %p272 = scmp.le.s32.totalorder 1, %s29
      %p273 = scmp.lt.s32.totalorder %s29, 3
      %p274 = pnand %p272, %p273
      %p275 = pneg %p274
      // Predicated region
      $region9: #{transformer_decoder_layer.4} parent=5 // pred_check
        _
      $region10: #{transformer_decoder_layer.4} parent=5 // pred_check_branch
        %277 = sbr.rel (%p274) target = $region12
      $region11: #{transformer_decoder_layer.4} parent=5 // pred_region
        %s278 = ssub.s32 %s29, 1
        // Predicated region
        $region13: #{transformer_decoder_layer.4} parent=11 // pred_check
          %p279 = pneg %p154
        $region14: #{transformer_decoder_layer.4} parent=11 // pred_check_branch
          %281 = sbr.rel (%p279) target = $region16
        $region15: #{transformer_decoder_layer.4} parent=11 // pred_region
          %s283 = ssub.s32 512, 512
          %284 = vsyncadd [#allocation10], %s283
          %s285 = sshll.u32 [#allocation11], 4
          %s286 = int_to_ptr.vmem [resolvable:$true] %s285
          %291 = dma.hbm_to_vmem [thread:$0]  %s4, 512, %s286, [#allocation10], 128, 128, 8
        $region16: #{transformer_decoder_layer.4} parent=11 // pred_fallthru
          _
        // Predicated region
        $region17: #{transformer_decoder_layer.4} parent=11 // pred_check
          %p292 = pneg %p175
        $region18: #{transformer_decoder_layer.4} parent=11 // pred_check_branch
          %294 = sbr.rel (%p292) target = $region20
        $region19: #{transformer_decoder_layer.4} parent=11 // pred_region
          %s296 = ssub.s32 512, 512
          %297 = vsyncadd [#allocation13], %s296
          %s298 = sshll.u32 [#allocation12], 4
          %s299 = int_to_ptr.vmem [resolvable:$true] %s298
          %304 = dma.hbm_to_vmem [thread:$0]  %s5, 512, %s299, [#allocation13], 128, 128, 8
        $region20: #{transformer_decoder_layer.4} parent=11 // pred_fallthru
          _
        // Predicated region
        $region21: #{transformer_decoder_layer.4} parent=11 // pred_check
          %p305 = pneg %p196
        $region22: #{transformer_decoder_layer.4} parent=11 // pred_check_branch
          %307 = sbr.rel (%p305) target = $region24
        $region23: #{transformer_decoder_layer.4} parent=11 // pred_region
          %s309 = ssub.s32 512, 512
          %310 = vsyncadd [#allocation13], %s309
          %s311 = sshll.u32 [#allocation14], 4
          %s312 = int_to_ptr.vmem [resolvable:$true] %s311
          %317 = dma.hbm_to_vmem [thread:$0]  %s6, 512, %s312, [#allocation13], 128, 128, 8
        $region24: #{transformer_decoder_layer.4} parent=11 // pred_fallthru
          _
        // Predicated region
        $region25: #{transformer_decoder_layer.4} parent=11 // pred_check
          %p318 = pneg %p217
        $region26: #{transformer_decoder_layer.4} parent=11 // pred_check_branch
          %320 = sbr.rel (%p318) target = $region28
        $region27: #{transformer_decoder_layer.4} parent=11 // pred_region
          %s322 = ssub.s32 512, 512
          %323 = vsyncadd [#allocation16], %s322
          %s324 = sshll.u32 [#allocation15], 4
          %s325 = int_to_ptr.vmem [resolvable:$true] %s324
          %330 = dma.hbm_to_vmem [thread:$0]  %s7, 512, %s325, [#allocation16], 128, 128, 8
        $region28: #{transformer_decoder_layer.4} parent=11 // pred_fallthru
          _
        // Predicated region
        $region29: #{transformer_decoder_layer.4} parent=11 // pred_check
          %p331 = pneg %p238
        $region30: #{transformer_decoder_layer.4} parent=11 // pred_check_branch
          %333 = sbr.rel (%p331) target = $region32
        $region31: #{transformer_decoder_layer.4} parent=11 // pred_region
          %s335 = ssub.s32 128, 128
          %336 = vsyncadd [#allocation16], %s335
          %s338 = sshll.u32 [#allocation17], 4
          %s339 = int_to_ptr.vmem [resolvable:$true] %s338
          %341 = dma.hbm_to_vmem [thread:$0]  %s8, 128, %s339, [#allocation16]
        $region32: #{transformer_decoder_layer.4} parent=11 // pred_fallthru
          _
      $region12: #{transformer_decoder_layer.4} parent=5 // pred_fallthru
        _
      %p342 = scmp.lt.s32.totalorder %s29, 2
      // Predicated region
      $region33: #{transformer_decoder_layer.4} parent=5 // pred_check
        %p343 = pneg %p342
      $region34: #{transformer_decoder_layer.4} parent=5 // pred_check_branch
        %345 = sbr.rel (%p343) target = $region36
      $region35: #{transformer_decoder_layer.4} parent=5 // pred_region
        // Predicated region
        $region37: #{transformer_decoder_layer.4} parent=35 // pred_check
          %p346 = pneg %p49
        $region38: #{transformer_decoder_layer.4} parent=35 // pred_check_branch
          %348 = sbr.rel (%p346) target = $region40
        $region39: #{transformer_decoder_layer.4} parent=35 // pred_region
          %s349 = sand.u32 %s39, 1
          %s350 = scalar_lea.sflag [#allocation4], %s349
          %s351 = sand.u32 %s39, 1
          %s352 = smul.addr %s351, 8
          %s353 = scalar_lea.vmem [#allocation3], %s352
          %s355 = ssub.s32 128, 128
          %356 = vsyncadd %s350, %s355
          %s357 = smul.addr %s29, 128
          %s358 = scalar_lea.hbm %s0, %s357
          %s360 = sshll.u32 %s353, 4
          %s361 = int_to_ptr.vmem [resolvable:$true] %s360
          %363 = dma.hbm_to_vmem [thread:$0]  %s358, 128, %s361, %s350
        $region40: #{transformer_decoder_layer.4} parent=35 // pred_fallthru
          _
        // Predicated region
        $region41: #{transformer_decoder_layer.4} parent=35 // pred_check
          %p364 = pneg %p75
        $region42: #{transformer_decoder_layer.4} parent=35 // pred_check_branch
          %366 = sbr.rel (%p364) target = $region44
        $region43: #{transformer_decoder_layer.4} parent=35 // pred_region
          %s367 = sand.u32 %s29, 1
          %s368 = scalar_lea.sflag [#allocation7], %s367
          %s369 = sand.u32 %s65, 1
          %s370 = smul.addr %s369, 8
          %s371 = scalar_lea.vmem [#allocation6], %s370
          %s373 = ssub.s32 128, 128
          %374 = vsyncadd %s368, %s373
          %s375 = smul.addr %s29, 128
          %s376 = scalar_lea.hbm %s1, %s375
          %s378 = sshll.u32 %s371, 4
          %s379 = int_to_ptr.vmem [resolvable:$true] %s378
          %381 = dma.hbm_to_vmem [thread:$0]  %s376, 128, %s379, %s368
        $region44: #{transformer_decoder_layer.4} parent=35 // pred_fallthru
          _
        // Predicated region
        $region45: #{transformer_decoder_layer.4} parent=35 // pred_check
          %p382 = pneg %p101
        $region46: #{transformer_decoder_layer.4} parent=35 // pred_check_branch
          %384 = sbr.rel (%p382) target = $region48
        $region47: #{transformer_decoder_layer.4} parent=35 // pred_region
          %s385 = sand.u32 %s29, 1
          %s386 = scalar_lea.sflag [#allocation7], %s385
          %s387 = sand.u32 %s91, 1
          %s388 = smul.addr %s387, 16
          %s389 = scalar_lea.vmem [#allocation8], %s388
          %s391 = ssub.s32 256, 256
          %392 = vsyncadd %s386, %s391
          %s393 = smul.addr %s29, 2
          %s394 = smul.addr %s393, 128
          %s395 = scalar_lea.hbm %s2, %s394
          %s396 = sshll.u32 %s389, 4
          %s397 = int_to_ptr.vmem [resolvable:$true] %s396
          %402 = dma.hbm_to_vmem [thread:$0]  %s395, 256, %s397, %s386, 128, 128, 8
        $region48: #{transformer_decoder_layer.4} parent=35 // pred_fallthru
          _
        // Predicated region
        $region49: #{transformer_decoder_layer.4} parent=35 // pred_check
          %p403 = pneg %p127
        $region50: #{transformer_decoder_layer.4} parent=35 // pred_check_branch
          %405 = sbr.rel (%p403) target = $region52
        $region51: #{transformer_decoder_layer.4} parent=35 // pred_region
          %s406 = sand.u32 %s29, 1
          %s407 = scalar_lea.sflag [#allocation10], %s406
          %s408 = sand.u32 %s117, 1
          %s409 = smul.addr %s408, 16
          %s410 = scalar_lea.vmem [#allocation9], %s409
          %s412 = ssub.s32 256, 256
          %413 = vsyncadd %s407, %s412
          %s414 = smul.addr %s29, 2
          %s415 = smul.addr %s414, 128
          %s416 = scalar_lea.hbm %s3, %s415
          %s417 = sshll.u32 %s410, 4
          %s418 = int_to_ptr.vmem [resolvable:$true] %s417
          %423 = dma.hbm_to_vmem [thread:$0]  %s416, 256, %s418, %s407, 128, 128, 8
        $region52: #{transformer_decoder_layer.4} parent=35 // pred_fallthru
          _
      $region36: #{transformer_decoder_layer.4} parent=5 // pred_fallthru
        _
      %p424 = scmp.le.s32.totalorder 1, %s29
      %p425 = scmp.lt.s32.totalorder %s29, 3
      %p426 = pnand %p424, %p425
      %p427 = pneg %p426
      // Predicated region
      $region53: #{transformer_decoder_layer.4} parent=5 // pred_check
        _
      $region54: #{transformer_decoder_layer.4} parent=5 // pred_check_branch
        %429 = sbr.rel (%p426) target = $region56
      $region55: #{transformer_decoder_layer.4} parent=5 // pred_region
        %s430 = ssub.s32 %s29, 1
        %s431 = sand.u32 %s42, 1
        %s432 = scalar_lea.sflag [#allocation4], %s431
        %s433 = sand.u32 %s42, 1
        %s434 = smul.addr %s433, 8
        %s435 = scalar_lea.vmem [#allocation3], %s434
        // Predicated region
        $region57: #{transformer_decoder_layer.4} parent=55 // pred_check
          %p436 = pneg %p55
        $region58: #{transformer_decoder_layer.4} parent=55 // pred_check_branch
          %438 = sbr.rel (%p436) target = $region60
        $region59: #{transformer_decoder_layer.4} parent=55 // pred_region
          %439 = dma.done %s432, 128
        $region60: #{transformer_decoder_layer.4} parent=55 // pred_fallthru
          _
        %s440 = sand.u32 %s34, 1
        %s441 = scalar_lea.sflag [#allocation7], %s440
        %s442 = sand.u32 %s68, 1
        %s443 = smul.addr %s442, 8
        %s444 = scalar_lea.vmem [#allocation6], %s443
        // Predicated region
        $region61: #{transformer_decoder_layer.4} parent=55 // pred_check
          %p445 = pneg %p81
        $region62: #{transformer_decoder_layer.4} parent=55 // pred_check_branch
          %447 = sbr.rel (%p445) target = $region64
        $region63: #{transformer_decoder_layer.4} parent=55 // pred_region
          %448 = dma.done %s441, 128
        $region64: #{transformer_decoder_layer.4} parent=55 // pred_fallthru
          _
        %s449 = sand.u32 %s34, 1
        %s450 = scalar_lea.sflag [#allocation7], %s449
        %s451 = sand.u32 %s94, 1
        %s452 = smul.addr %s451, 16
        %s453 = scalar_lea.vmem [#allocation8], %s452
        // Predicated region
        $region65: #{transformer_decoder_layer.4} parent=55 // pred_check
          %p454 = pneg %p107
        $region66: #{transformer_decoder_layer.4} parent=55 // pred_check_branch
          %456 = sbr.rel (%p454) target = $region68
        $region67: #{transformer_decoder_layer.4} parent=55 // pred_region
          %457 = dma.done %s450, 256
        $region68: #{transformer_decoder_layer.4} parent=55 // pred_fallthru
          _
        %s458 = sand.u32 %s34, 1
        %s459 = scalar_lea.sflag [#allocation10], %s458
        %s460 = sand.u32 %s120, 1
        %s461 = smul.addr %s460, 16
        %s462 = scalar_lea.vmem [#allocation9], %s461
        // Predicated region
        $region69: #{transformer_decoder_layer.4} parent=55 // pred_check
          %p463 = pneg %p133
        $region70: #{transformer_decoder_layer.4} parent=55 // pred_check_branch
          %465 = sbr.rel (%p463) target = $region72
        $region71: #{transformer_decoder_layer.4} parent=55 // pred_region
          %466 = dma.done %s459, 256
        $region72: #{transformer_decoder_layer.4} parent=55 // pred_fallthru
          _
        // Predicated region
        $region73: #{transformer_decoder_layer.4} parent=55 // pred_check
          %p467 = pneg %p154
        $region74: #{transformer_decoder_layer.4} parent=55 // pred_check_branch
          %469 = sbr.rel (%p467) target = $region76
        $region75: #{transformer_decoder_layer.4} parent=55 // pred_region
          %470 = dma.done [#allocation10], 512
        $region76: #{transformer_decoder_layer.4} parent=55 // pred_fallthru
          _
        // Predicated region
        $region77: #{transformer_decoder_layer.4} parent=55 // pred_check
          %p471 = pneg %p175
        $region78: #{transformer_decoder_layer.4} parent=55 // pred_check_branch
          %473 = sbr.rel (%p471) target = $region80
        $region79: #{transformer_decoder_layer.4} parent=55 // pred_region
          %474 = dma.done [#allocation13], 512
        $region80: #{transformer_decoder_layer.4} parent=55 // pred_fallthru
          _
        // Predicated region
        $region81: #{transformer_decoder_layer.4} parent=55 // pred_check
          %p475 = pneg %p196
        $region82: #{transformer_decoder_layer.4} parent=55 // pred_check_branch
          %477 = sbr.rel (%p475) target = $region84
        $region83: #{transformer_decoder_layer.4} parent=55 // pred_region
          %478 = dma.done [#allocation13], 512
        $region84: #{transformer_decoder_layer.4} parent=55 // pred_fallthru
          _
        // Predicated region
        $region85: #{transformer_decoder_layer.4} parent=55 // pred_check
          %p479 = pneg %p217
        $region86: #{transformer_decoder_layer.4} parent=55 // pred_check_branch
          %481 = sbr.rel (%p479) target = $region88
        $region87: #{transformer_decoder_layer.4} parent=55 // pred_region
          %482 = dma.done [#allocation16], 512
        $region88: #{transformer_decoder_layer.4} parent=55 // pred_fallthru
          _
        // Predicated region
        $region89: #{transformer_decoder_layer.4} parent=55 // pred_check
          %p483 = pneg %p238
        $region90: #{transformer_decoder_layer.4} parent=55 // pred_check_branch
          %485 = sbr.rel (%p483) target = $region92
        $region91: #{transformer_decoder_layer.4} parent=55 // pred_region
          %486 = dma.done [#allocation16], 128
        $region92: #{transformer_decoder_layer.4} parent=55 // pred_fallthru
          _
        %s487 = sand.u32 %s42, 1
        %s488 = scalar_lea.sflag [#allocation4], %s487
        %s489 = sand.u32 %s42, 1
        %s490 = smul.addr %s489, 8
        %s491 = scalar_lea.vmem [#allocation3], %s490
        %p492 = pneg %p55
        %p493 = pneg %p52
        %s494 = sand.u32 %s34, 1
        %s495 = scalar_lea.sflag [#allocation7], %s494
        %s496 = sand.u32 %s68, 1
        %s497 = smul.addr %s496, 8
        %s498 = scalar_lea.vmem [#allocation6], %s497
        %p499 = pneg %p81
        %p500 = pneg %p78
        %s501 = sand.u32 %s34, 1
        %s502 = scalar_lea.sflag [#allocation7], %s501
        %s503 = sand.u32 %s94, 1
        %s504 = smul.addr %s503, 16
        %s505 = scalar_lea.vmem [#allocation8], %s504
        %p506 = pneg %p107
        %p507 = pneg %p104
        %s508 = sand.u32 %s34, 1
        %s509 = scalar_lea.sflag [#allocation10], %s508
        %s510 = sand.u32 %s120, 1
        %s511 = smul.addr %s510, 16
        %s512 = scalar_lea.vmem [#allocation9], %s511
        %p513 = pneg %p133
        %p514 = pneg %p130
        %p515 = pneg %p154
        %p516 = pneg %p151
        %p517 = pneg %p175
        %p518 = pneg %p172
        %p519 = pneg %p196
        %p520 = pneg %p193
        %p521 = pneg %p217
        %p522 = pneg %p214
        %p523 = pneg %p238
        %p524 = pneg %p235
        %p525 = pneg %p264
        %p526 = pneg %p261
        %s527 = sand.u32 %s251, 1
        %s528 = scalar_lea.sflag [#allocation5], %s527
        %s529 = sand.u32 %s251, 1
        %s530 = smul.addr %s529, 8
        %s531 = scalar_lea.vmem [#allocation18], %s530
        %v532 = vld [vmem:[%s435] sm:$0xff]
        %v533 = vld [vmem:[%s444] sm:$0xff]
        %v534 = vadd.f32 %v532, %v533
        %v535 = vld [vmem:[%s453] sm:$0xff]
        %v536 = vld [vmem:[%s453 + $0x8] sm:$0xf]
        %v537 = vld [vmem:[%s462] sm:$0xff]
        %v538 = vld [vmem:[%s462 + $0x8] sm:$0xf]
        %v539 = vadd.f32 %v535, %v537
        %v540 = vadd.f32 %v536, %v538
        %v541 = vld [vmem:[#allocation17] sm:$0x3f]
        %v542 = vld [vmem:[#allocation11] sm:$0xff]
        %v543 = vld [vmem:[#allocation11 + $0x8] sm:$0xff]
        %v544 = vld [vmem:[#allocation11 + $0x10] sm:$0xff]
        %v545 = vld [vmem:[#allocation11 + $0x18] sm:$0xff]
        %v546 = vlaneseq
        %v547 = vshrl.u32 %v546, 7
        %v548 = vsub.s32 0, %v547
        %v549 = vrot.slane %v541, %v548
        %vm550 = vcmask 261120
        %v552 = vsel %vm550, %v534, 0
        %554 = vmatprep.subr.mxu0 0.0
        %555 = vmatpush1.msra.mxu0 %v542
        %556 = vmatprep.subr.mxu0 0.0
        %557 = vmatpush1.msra.mxu0 %v543
        %558 = vmatprep.subr.mxu0 0.0
        %559 = vmatpush1.msra.mxu0 %v544
        %560 = vmatprep.subr.mxu0 0.0
        %561 = vmatpush1.msra.mxu0 %v545
        %562 = vmatprep.subr.mxu0 0.0
        %563 = vmatpush1.msra.mxu0 0.0
        %564 = vmatprep.subr.mxu0 0.0
        %565 = vmatpush1.msra.mxu0 0.0
        %566 = vmatprep.subr.mxu0 0.0
        %567 = vmatpush1.msra.mxu0 0.0
        %568 = vmatprep.subr.mxu0 0.0
        %569 = vmatpush1.msra.mxu0 0.0
        %570 = vmatprep.subr.mxu0 0.0
        %571 = vmatpush1.msra.mxu0 0.0
        %572 = vmatprep.subr.mxu0 0.0
        %573 = vmatpush1.msra.mxu0 0.0
        %574 = vmatprep.subr.mxu0 0.0
        %575 = vmatpush1.msra.mxu0 0.0
        %576 = vmatprep.subr.mxu0 0.0
        %577 = vmatpush1.msra.mxu0 0.0
        %578 = vmatprep.subr.mxu0 0.0
        %579 = vmatpush1.msra.mxu0 0.0
        %580 = vmatprep.subr.mxu0 0.0
        %581 = vmatpush1.msra.mxu0 0.0
        %582 = vmatprep.subr.mxu0 0.0
        %583 = vmatpush1.msra.mxu0 0.0
        %584 = vmatprep.subr.mxu0 0.0
        %585 = vmatpush1.msra.mxu0 0.0
        %586 = vmatprep.subr.mxu0 0.0
        %587 = vmatpush1.msra.mxu0 0.0
        %588 = vmatprep.subr.mxu0 0.0
        %589 = vmatpush1.msra.mxu0 0.0
        %590 = vmatprep.subr.mxu0 0.0
        %591 = vmatpush1.msra.mxu0 0.0
        %592 = vmatprep.subr.mxu0 0.0
        %593 = vmatpush1.msra.mxu0 0.0
        %594 = vmatprep.subr.mxu0 0.0
        %595 = vmatpush1.msra.mxu0 0.0
        %596 = vmatprep.subr.mxu0 0.0
        %597 = vmatpush1.msra.mxu0 0.0
        %598 = vmatprep.subr.mxu0 0.0
        %599 = vmatpush1.msra.mxu0 0.0
        %600 = vmatprep.subr.mxu0 0.0
        %601 = vmatpush1.msra.mxu0 0.0
        %602 = vmatprep.subr.mxu0 0.0
        %603 = vmatpush1.msra.mxu0 0.0
        %604 = vmatprep.subr.mxu0 0.0
        %605 = vmatpush1.msra.mxu0 0.0
        %606 = vmatprep.subr.mxu0 0.0
        %607 = vmatpush1.msra.mxu0 0.0
        %608 = vmatprep.subr.mxu0 0.0
        %609 = vmatpush1.msra.mxu0 0.0
        %610 = vmatprep.subr.mxu0 0.0
        %611 = vmatpush1.msra.mxu0 0.0
        %612 = vmatprep.subr.mxu0 0.0
        %613 = vmatpush1.msra.mxu0 0.0
        %614 = vmatprep.subr.mxu0 0.0
        %615 = vmatpush1.msra.mxu0 0.0
        %616 = vmatprep.subr.mxu0 0.0
        %617 = vmatpush1.msra.mxu0 0.0
        %618 = vmatprep.mubr.f32.mxu0 0.0
        %619 = vmatmul.mubr.f32.gmra.mrb[0].mxu0 %v552
        %v620 = vpop.f32.mrb[0].mxu0
        %v621 = vadd.f32 %v549, %v620
        %v622 = vpop.f32.mrb[0].mxu0
        %623 = vdwg.mxu0
        %v624 = vmul.f32 %v621, 0.35355338
        %v625 = vld [vmem:[#allocation12] sm:$0xff]
        %v626 = vld [vmem:[#allocation12 + $0x8] sm:$0xff]
        %v627 = vld [vmem:[#allocation12 + $0x10] sm:$0xff]
        %v628 = vld [vmem:[#allocation12 + $0x18] sm:$0xff]
        %v629 = vlaneseq
        %v630 = vshrl.u32 %v629, 7
        %v631 = vsub.s32 1, %v630
        %v632 = vrot.slane %v541, %v631
        %v634 = vsel %vm550, %v539, 0
        %v637 = vsel %vm550, %v540, 0
        %639 = vmatprep.subr.mxu0 0.0
        %640 = vmatpush1.msra.mxu0 %v625
        %641 = vmatprep.subr.mxu0 0.0
        %642 = vmatpush1.msra.mxu0 %v626
        %643 = vmatprep.subr.mxu0 0.0
        %644 = vmatpush1.msra.mxu0 %v627
        %645 = vmatprep.subr.mxu0 0.0
        %646 = vmatpush1.msra.mxu0 %v628
        %647 = vmatprep.subr.mxu0 0.0
        %648 = vmatpush1.msra.mxu0 0.0
        %649 = vmatprep.subr.mxu0 0.0
        %650 = vmatpush1.msra.mxu0 0.0
        %651 = vmatprep.subr.mxu0 0.0
        %652 = vmatpush1.msra.mxu0 0.0
        %653 = vmatprep.subr.mxu0 0.0
        %654 = vmatpush1.msra.mxu0 0.0
        %655 = vmatprep.subr.mxu0 0.0
        %656 = vmatpush1.msra.mxu0 0.0
        %657 = vmatprep.subr.mxu0 0.0
        %658 = vmatpush1.msra.mxu0 0.0
        %659 = vmatprep.subr.mxu0 0.0
        %660 = vmatpush1.msra.mxu0 0.0
        %661 = vmatprep.subr.mxu0 0.0
        %662 = vmatpush1.msra.mxu0 0.0
        %663 = vmatprep.subr.mxu0 0.0
        %664 = vmatpush1.msra.mxu0 0.0
        %665 = vmatprep.subr.mxu0 0.0
        %666 = vmatpush1.msra.mxu0 0.0
        %667 = vmatprep.subr.mxu0 0.0
        %668 = vmatpush1.msra.mxu0 0.0
        %669 = vmatprep.subr.mxu0 0.0
        %670 = vmatpush1.msra.mxu0 0.0
        %671 = vmatprep.subr.mxu0 0.0
        %672 = vmatpush1.msra.mxu0 0.0
        %673 = vmatprep.subr.mxu0 0.0
        %674 = vmatpush1.msra.mxu0 0.0
        %675 = vmatprep.subr.mxu0 0.0
        %676 = vmatpush1.msra.mxu0 0.0
        %677 = vmatprep.subr.mxu0 0.0
        %678 = vmatpush1.msra.mxu0 0.0
        %679 = vmatprep.subr.mxu0 0.0
        %680 = vmatpush1.msra.mxu0 0.0
        %681 = vmatprep.subr.mxu0 0.0
        %682 = vmatpush1.msra.mxu0 0.0
        %683 = vmatprep.subr.mxu0 0.0
        %684 = vmatpush1.msra.mxu0 0.0
        %685 = vmatprep.subr.mxu0 0.0
        %686 = vmatpush1.msra.mxu0 0.0
        %687 = vmatprep.subr.mxu0 0.0
        %688 = vmatpush1.msra.mxu0 0.0
        %689 = vmatprep.subr.mxu0 0.0
        %690 = vmatpush1.msra.mxu0 0.0
        %691 = vmatprep.subr.mxu0 0.0
        %692 = vmatpush1.msra.mxu0 0.0
        %693 = vmatprep.subr.mxu0 0.0
        %694 = vmatpush1.msra.mxu0 0.0
        %695 = vmatprep.subr.mxu0 0.0
        %696 = vmatpush1.msra.mxu0 0.0
        %697 = vmatprep.subr.mxu0 0.0
        %698 = vmatpush1.msra.mxu0 0.0
        %699 = vmatprep.subr.mxu0 0.0
        %700 = vmatpush1.msra.mxu0 0.0
        %701 = vmatprep.subr.mxu0 0.0
        %702 = vmatpush1.msra.mxu0 0.0
        %703 = vmatprep.mubr.f32.mxu0 0.0
        %704 = vmatmul.mubr.f32.gmra.mrb[0].mxu0 %v634
        %v705 = vpop.f32.mrb[0].mxu0
        %v706 = vadd.f32 %v632, %v705
        %v707 = vpop.f32.mrb[0].mxu0
        %708 = vmatprep.mubr.f32.mxu0 0.0
        %709 = vmatmul.mubr.f32.gmra.mrb[0].mxu0 %v637
        %v710 = vpop.f32.mrb[0].mxu0
        %v711 = vadd.f32 %v632, %v710
        %v712 = vpop.f32.mrb[0].mxu0
        %713 = vdwg.mxu0
        %v714 = vld [vmem:[#allocation14] sm:$0xff]
        %v715 = vld [vmem:[#allocation14 + $0x8] sm:$0xff]
        %v716 = vld [vmem:[#allocation14 + $0x10] sm:$0xff]
        %v717 = vld [vmem:[#allocation14 + $0x18] sm:$0xff]
        %v718 = vlaneseq
        %v719 = vshrl.u32 %v718, 7
        %v720 = vsub.s32 2, %v719
        %v721 = vrot.slane %v541, %v720
        %v723 = vsel %vm550, %v535, 0
        %v726 = vsel %vm550, %v536, 0
        %728 = vmatprep.subr.mxu0 0.0
        %729 = vmatpush1.msra.mxu0 %v714
        %730 = vmatprep.subr.mxu0 0.0
        %731 = vmatpush1.msra.mxu0 %v715
        %732 = vmatprep.subr.mxu0 0.0
        %733 = vmatpush1.msra.mxu0 %v716
        %734 = vmatprep.subr.mxu0 0.0
        %735 = vmatpush1.msra.mxu0 %v717
        %736 = vmatprep.subr.mxu0 0.0
        %737 = vmatpush1.msra.mxu0 0.0
        %738 = vmatprep.subr.mxu0 0.0
        %739 = vmatpush1.msra.mxu0 0.0
        %740 = vmatprep.subr.mxu0 0.0
        %741 = vmatpush1.msra.mxu0 0.0
        %742 = vmatprep.subr.mxu0 0.0
        %743 = vmatpush1.msra.mxu0 0.0
        %744 = vmatprep.subr.mxu0 0.0
        %745 = vmatpush1.msra.mxu0 0.0
        %746 = vmatprep.subr.mxu0 0.0
        %747 = vmatpush1.msra.mxu0 0.0
        %748 = vmatprep.subr.mxu0 0.0
        %749 = vmatpush1.msra.mxu0 0.0
        %750 = vmatprep.subr.mxu0 0.0
        %751 = vmatpush1.msra.mxu0 0.0
        %752 = vmatprep.subr.mxu0 0.0
        %753 = vmatpush1.msra.mxu0 0.0
        %754 = vmatprep.subr.mxu0 0.0
        %755 = vmatpush1.msra.mxu0 0.0
        %756 = vmatprep.subr.mxu0 0.0
        %757 = vmatpush1.msra.mxu0 0.0
        %758 = vmatprep.subr.mxu0 0.0
        %759 = vmatpush1.msra.mxu0 0.0
        %760 = vmatprep.subr.mxu0 0.0
        %761 = vmatpush1.msra.mxu0 0.0
        %762 = vmatprep.subr.mxu0 0.0
        %763 = vmatpush1.msra.mxu0 0.0
        %764 = vmatprep.subr.mxu0 0.0
        %765 = vmatpush1.msra.mxu0 0.0
        %766 = vmatprep.subr.mxu0 0.0
        %767 = vmatpush1.msra.mxu0 0.0
        %768 = vmatprep.subr.mxu0 0.0
        %769 = vmatpush1.msra.mxu0 0.0
        %770 = vmatprep.subr.mxu0 0.0
        %771 = vmatpush1.msra.mxu0 0.0
        %772 = vmatprep.subr.mxu0 0.0
        %773 = vmatpush1.msra.mxu0 0.0
        %774 = vmatprep.subr.mxu0 0.0
        %775 = vmatpush1.msra.mxu0 0.0
        %776 = vmatprep.subr.mxu0 0.0
        %777 = vmatpush1.msra.mxu0 0.0
        %778 = vmatprep.subr.mxu0 0.0
        %779 = vmatpush1.msra.mxu0 0.0
        %780 = vmatprep.subr.mxu0 0.0
        %781 = vmatpush1.msra.mxu0 0.0
        %782 = vmatprep.subr.mxu0 0.0
        %783 = vmatpush1.msra.mxu0 0.0
        %784 = vmatprep.subr.mxu0 0.0
        %785 = vmatpush1.msra.mxu0 0.0
        %786 = vmatprep.subr.mxu0 0.0
        %787 = vmatpush1.msra.mxu0 0.0
        %788 = vmatprep.subr.mxu0 0.0
        %789 = vmatpush1.msra.mxu0 0.0
        %790 = vmatprep.subr.mxu0 0.0
        %791 = vmatpush1.msra.mxu0 0.0
        %792 = vmatprep.mubr.f32.mxu0 0.0
        %793 = vmatmul.mubr.f32.gmra.mrb[0].mxu0 %v723
        %v794 = vpop.f32.mrb[0].mxu0
        %v795 = vadd.f32 %v721, %v794
        %v796 = vpop.f32.mrb[0].mxu0
        %797 = vmatprep.mubr.f32.mxu0 0.0
        %798 = vmatmul.mubr.f32.gmra.mrb[0].mxu0 %v726
        %v799 = vpop.f32.mrb[0].mxu0
        %v800 = vadd.f32 %v721, %v799
        %v801 = vpop.f32.mrb[0].mxu0
        %802 = vdwg.mxu0
        %v803 = vld [vmem:[#allocation15] sm:$0xff]
        %v804 = vld [vmem:[#allocation15 + $0x8] sm:$0xff]
        %v805 = vld [vmem:[#allocation15 + $0x10] sm:$0xff]
        %v806 = vld [vmem:[#allocation15 + $0x18] sm:$0xff]
        %vm807 = vcmask 64512
        %v809 = vsel %vm807, %v624, 0
        %v812 = vsel %vm807, %v706, 0
        %v815 = vsel %vm807, %v711, 0
        %817 = vmatprep.subr.mxu0 0.0
        %818 = vmatpush1.xpose.msra.mxu0 %v812
        %819 = vmatprep.subr.mxu0 0.0
        %820 = vmatpush1.xpose.msra.mxu0 %v815
        %821 = vmatprep.subr.mxu0 0.0
        %822 = vmatpush1.xpose.msra.mxu0 0.0
        %823 = vmatprep.subr.mxu0 0.0
        %824 = vmatpush1.xpose.msra.mxu0 0.0
        %825 = vmatprep.subr.mxu0 0.0
        %826 = vmatpush1.xpose.msra.mxu0 0.0
        %827 = vmatprep.subr.mxu0 0.0
        %828 = vmatpush1.xpose.msra.mxu0 0.0
        %829 = vmatprep.subr.mxu0 0.0
        %830 = vmatpush1.xpose.msra.mxu0 0.0
        %831 = vmatprep.subr.mxu0 0.0
        %832 = vmatpush1.xpose.msra.mxu0 0.0
        %833 = vmatprep.subr.mxu0 0.0
        %834 = vmatpush1.xpose.msra.mxu0 0.0
        %835 = vmatprep.subr.mxu0 0.0
        %836 = vmatpush1.xpose.msra.mxu0 0.0
        %837 = vmatprep.subr.mxu0 0.0
        %838 = vmatpush1.xpose.msra.mxu0 0.0
        %839 = vmatprep.subr.mxu0 0.0
        %840 = vmatpush1.xpose.msra.mxu0 0.0
        %841 = vmatprep.subr.mxu0 0.0
        %842 = vmatpush1.xpose.msra.mxu0 0.0
        %843 = vmatprep.subr.mxu0 0.0
        %844 = vmatpush1.xpose.msra.mxu0 0.0
        %845 = vmatprep.subr.mxu0 0.0
        %846 = vmatpush1.xpose.msra.mxu0 0.0
        %847 = vmatprep.subr.mxu0 0.0
        %848 = vmatpush1.xpose.msra.mxu0 0.0
        %849 = vmatprep.subr.mxu0 0.0
        %850 = vmatpush1.xpose.msra.mxu0 0.0
        %851 = vmatprep.subr.mxu0 0.0
        %852 = vmatpush1.xpose.msra.mxu0 0.0
        %853 = vmatprep.subr.mxu0 0.0
        %854 = vmatpush1.xpose.msra.mxu0 0.0
        %855 = vmatprep.subr.mxu0 0.0
        %856 = vmatpush1.xpose.msra.mxu0 0.0
        %857 = vmatprep.subr.mxu0 0.0
        %858 = vmatpush1.xpose.msra.mxu0 0.0
        %859 = vmatprep.subr.mxu0 0.0
        %860 = vmatpush1.xpose.msra.mxu0 0.0
        %861 = vmatprep.subr.mxu0 0.0
        %862 = vmatpush1.xpose.msra.mxu0 0.0
        %863 = vmatprep.subr.mxu0 0.0
        %864 = vmatpush1.xpose.msra.mxu0 0.0
        %865 = vmatprep.subr.mxu0 0.0
        %866 = vmatpush1.xpose.msra.mxu0 0.0
        %867 = vmatprep.subr.mxu0 0.0
        %868 = vmatpush1.xpose.msra.mxu0 0.0
        %869 = vmatprep.subr.mxu0 0.0
        %870 = vmatpush1.xpose.msra.mxu0 0.0
        %871 = vmatprep.subr.mxu0 0.0
        %872 = vmatpush1.xpose.msra.mxu0 0.0
        %873 = vmatprep.subr.mxu0 0.0
        %874 = vmatpush1.xpose.msra.mxu0 0.0
        %875 = vmatprep.subr.mxu0 0.0
        %876 = vmatpush1.xpose.msra.mxu0 0.0
        %877 = vmatprep.subr.mxu0 0.0
        %878 = vmatpush1.xpose.msra.mxu0 0.0
        %879 = vmatprep.subr.mxu0 0.0
        %880 = vmatpush1.xpose.msra.mxu0 0.0
        %881 = vmatprep.mubr.f32.mxu0 0.0
        %882 = vmatmul.mubr.f32.gmra.mrb[0].mxu0 %v809
        %v883 = vpop.f32.mrb[0].mxu0
        %v884 = vadd.f32 0.0, %v883
        %v885 = vpop.f32.mrb[0].mxu0
        %886 = vdwg.mxu0
        %vm887 = vcmask 97280
        %v888 = vsel %vm887, %v884, -inf
        %889 = vmax.xlane.f32.xlu0 %v888
        %v890 = vpop.xlane.xlu0 %889
        %v891 = vsub.f32 %v884, %v890
        %v892 = vmul.f32 %v891, 1.442695
        %v893 = vpow.pop %v892
        %v894 = vsel %vm887, %v893, 0.0
        %895 = vadd.xlane.f32.xlu0 %v894
        %v896 = vpop.xlane.xlu0 %895
        %v897 = vrcp.pop %v896
        %v898 = vmul.f32 %v893, %v897
        %v900 = vsel %vm887, %v898, 0
        %vm902 = vcmask 1043456
        %v904 = vsel %vm902, %v800, 0
        %906 = vmatprep.subr.mxu0 0.0
        %907 = vmatpush1.msra.mxu0 %v795
        %908 = vmatprep.subr.mxu0 0.0
        %909 = vmatpush1.msra.mxu0 %v904
        %910 = vmatprep.subr.mxu0 0.0
        %911 = vmatpush1.msra.mxu0 0.0
        %912 = vmatprep.subr.mxu0 0.0
        %913 = vmatpush1.msra.mxu0 0.0
        %914 = vmatprep.subr.mxu0 0.0
        %915 = vmatpush1.msra.mxu0 0.0
        %916 = vmatprep.subr.mxu0 0.0
        %917 = vmatpush1.msra.mxu0 0.0
        %918 = vmatprep.subr.mxu0 0.0
        %919 = vmatpush1.msra.mxu0 0.0
        %920 = vmatprep.subr.mxu0 0.0
        %921 = vmatpush1.msra.mxu0 0.0
        %922 = vmatprep.subr.mxu0 0.0
        %923 = vmatpush1.msra.mxu0 0.0
        %924 = vmatprep.subr.mxu0 0.0
        %925 = vmatpush1.msra.mxu0 0.0
        %926 = vmatprep.subr.mxu0 0.0
        %927 = vmatpush1.msra.mxu0 0.0
        %928 = vmatprep.subr.mxu0 0.0
        %929 = vmatpush1.msra.mxu0 0.0
        %930 = vmatprep.subr.mxu0 0.0
        %931 = vmatpush1.msra.mxu0 0.0
        %932 = vmatprep.subr.mxu0 0.0
        %933 = vmatpush1.msra.mxu0 0.0
        %934 = vmatprep.subr.mxu0 0.0
        %935 = vmatpush1.msra.mxu0 0.0
        %936 = vmatprep.subr.mxu0 0.0
        %937 = vmatpush1.msra.mxu0 0.0
        %938 = vmatprep.subr.mxu0 0.0
        %939 = vmatpush1.msra.mxu0 0.0
        %940 = vmatprep.subr.mxu0 0.0
        %941 = vmatpush1.msra.mxu0 0.0
        %942 = vmatprep.subr.mxu0 0.0
        %943 = vmatpush1.msra.mxu0 0.0
        %944 = vmatprep.subr.mxu0 0.0
        %945 = vmatpush1.msra.mxu0 0.0
        %946 = vmatprep.subr.mxu0 0.0
        %947 = vmatpush1.msra.mxu0 0.0
        %948 = vmatprep.subr.mxu0 0.0
        %949 = vmatpush1.msra.mxu0 0.0
        %950 = vmatprep.subr.mxu0 0.0
        %951 = vmatpush1.msra.mxu0 0.0
        %952 = vmatprep.subr.mxu0 0.0
        %953 = vmatpush1.msra.mxu0 0.0
        %954 = vmatprep.subr.mxu0 0.0
        %955 = vmatpush1.msra.mxu0 0.0
        %956 = vmatprep.subr.mxu0 0.0
        %957 = vmatpush1.msra.mxu0 0.0
        %958 = vmatprep.subr.mxu0 0.0
        %959 = vmatpush1.msra.mxu0 0.0
        %960 = vmatprep.subr.mxu0 0.0
        %961 = vmatpush1.msra.mxu0 0.0
        %962 = vmatprep.subr.mxu0 0.0
        %963 = vmatpush1.msra.mxu0 0.0
        %964 = vmatprep.subr.mxu0 0.0
        %965 = vmatpush1.msra.mxu0 0.0
        %966 = vmatprep.subr.mxu0 0.0
        %967 = vmatpush1.msra.mxu0 0.0
        %968 = vmatprep.subr.mxu0 0.0
        %969 = vmatpush1.msra.mxu0 0.0
        %970 = vmatprep.mubr.f32.mxu0 0.0
        %971 = vmatmul.mubr.f32.gmra.mrb[0].mxu0 %v900
        %v972 = vpop.f32.mrb[0].mxu0
        %v973 = vadd.f32 0.0, %v972
        %v974 = vpop.f32.mrb[0].mxu0
        %975 = vdwg.mxu0
        %976 = vst.msk [vmem:[#allocation2] sm:$0xff] %vm807, %v973
        %977 = vrot.lane.b32.xlu0 %v624, 120
        %v978 = vpop.permute.xlu0 %977
        %979 = vrot.lane.b32.xlu0 %v706, 120
        %v980 = vpop.permute.xlu0 %979
        %981 = vrot.lane.b32.xlu0 %v711, 120
        %v982 = vpop.permute.xlu0 %981
        %v983 = vsel %vm807, %v978, 0
        %v985 = vsel %vm807, %v980, 0
        %v987 = vsel %vm807, %v982, 0
        %989 = vmatprep.subr.mxu0 0.0
        %990 = vmatpush1.xpose.msra.mxu0 %v985
        %991 = vmatprep.subr.mxu0 0.0
        %992 = vmatpush1.xpose.msra.mxu0 %v987
        %993 = vmatprep.subr.mxu0 0.0
        %994 = vmatpush1.xpose.msra.mxu0 0.0
        %995 = vmatprep.subr.mxu0 0.0
        %996 = vmatpush1.xpose.msra.mxu0 0.0
        %997 = vmatprep.subr.mxu0 0.0
        %998 = vmatpush1.xpose.msra.mxu0 0.0
        %999 = vmatprep.subr.mxu0 0.0
        %1000 = vmatpush1.xpose.msra.mxu0 0.0
        %1001 = vmatprep.subr.mxu0 0.0
        %1002 = vmatpush1.xpose.msra.mxu0 0.0
        %1003 = vmatprep.subr.mxu0 0.0
        %1004 = vmatpush1.xpose.msra.mxu0 0.0
        %1005 = vmatprep.subr.mxu0 0.0
        %1006 = vmatpush1.xpose.msra.mxu0 0.0
        %1007 = vmatprep.subr.mxu0 0.0
        %1008 = vmatpush1.xpose.msra.mxu0 0.0
        %1009 = vmatprep.subr.mxu0 0.0
        %1010 = vmatpush1.xpose.msra.mxu0 0.0
        %1011 = vmatprep.subr.mxu0 0.0
        %1012 = vmatpush1.xpose.msra.mxu0 0.0
        %1013 = vmatprep.subr.mxu0 0.0
        %1014 = vmatpush1.xpose.msra.mxu0 0.0
        %1015 = vmatprep.subr.mxu0 0.0
        %1016 = vmatpush1.xpose.msra.mxu0 0.0
        %1017 = vmatprep.subr.mxu0 0.0
        %1018 = vmatpush1.xpose.msra.mxu0 0.0
        %1019 = vmatprep.subr.mxu0 0.0
        %1020 = vmatpush1.xpose.msra.mxu0 0.0
        %1021 = vmatprep.subr.mxu0 0.0
        %1022 = vmatpush1.xpose.msra.mxu0 0.0
        %1023 = vmatprep.subr.mxu0 0.0
        %1024 = vmatpush1.xpose.msra.mxu0 0.0
        %1025 = vmatprep.subr.mxu0 0.0
        %1026 = vmatpush1.xpose.msra.mxu0 0.0
        %1027 = vmatprep.subr.mxu0 0.0
        %1028 = vmatpush1.xpose.msra.mxu0 0.0
        %1029 = vmatprep.subr.mxu0 0.0
        %1030 = vmatpush1.xpose.msra.mxu0 0.0
        %1031 = vmatprep.subr.mxu0 0.0
        %1032 = vmatpush1.xpose.msra.mxu0 0.0
        %1033 = vmatprep.subr.mxu0 0.0
        %1034 = vmatpush1.xpose.msra.mxu0 0.0
        %1035 = vmatprep.subr.mxu0 0.0
        %1036 = vmatpush1.xpose.msra.mxu0 0.0
        %1037 = vmatprep.subr.mxu0 0.0
        %1038 = vmatpush1.xpose.msra.mxu0 0.0
        %1039 = vmatprep.subr.mxu0 0.0
        %1040 = vmatpush1.xpose.msra.mxu0 0.0
        %1041 = vmatprep.subr.mxu0 0.0
        %1042 = vmatpush1.xpose.msra.mxu0 0.0
        %1043 = vmatprep.subr.mxu0 0.0
        %1044 = vmatpush1.xpose.msra.mxu0 0.0
        %1045 = vmatprep.subr.mxu0 0.0
        %1046 = vmatpush1.xpose.msra.mxu0 0.0
        %1047 = vmatprep.subr.mxu0 0.0
        %1048 = vmatpush1.xpose.msra.mxu0 0.0
        %1049 = vmatprep.subr.mxu0 0.0
        %1050 = vmatpush1.xpose.msra.mxu0 0.0
        %1051 = vmatprep.subr.mxu0 0.0
        %1052 = vmatpush1.xpose.msra.mxu0 0.0
        %1053 = vmatprep.mubr.f32.mxu0 0.0
        %1054 = vmatmul.mubr.f32.gmra.mrb[0].mxu0 %v983
        %v1055 = vpop.f32.mrb[0].mxu0
        %v1056 = vadd.f32 0.0, %v1055
        %v1057 = vpop.f32.mrb[0].mxu0
        %1058 = vdwg.mxu0
        %v1059 = vsel %vm887, %v1056, -inf
        %1060 = vmax.xlane.f32.xlu0 %v1059
        %v1061 = vpop.xlane.xlu0 %1060
        %v1062 = vsub.f32 %v1056, %v1061
        %v1063 = vmul.f32 %v1062, 1.442695
        %v1064 = vpow.pop %v1063
        %v1065 = vsel %vm887, %v1064, 0.0
        %1066 = vadd.xlane.f32.xlu0 %v1065
        %v1067 = vpop.xlane.xlu0 %1066
        %v1068 = vrcp.pop %v1067
        %v1069 = vmul.f32 %v1064, %v1068
        %1071 = vrot.lane.b32.xlu0 %v795, 120
        %v1072 = vpop.permute.xlu0 %1071
        %1073 = vrot.lane.b32.xlu0 %v800, 120
        %v1074 = vpop.permute.xlu0 %1073
        %v1077 = vsel %vm887, %v1069, 0
        %v1079 = vsel %vm902, %v1074, 0
        %1081 = vmatprep.subr.mxu0 0.0
        %1082 = vmatpush1.msra.mxu0 %v1072
        %1083 = vmatprep.subr.mxu0 0.0
        %1084 = vmatpush1.msra.mxu0 %v1079
        %1085 = vmatprep.subr.mxu0 0.0
        %1086 = vmatpush1.msra.mxu0 0.0
        %1087 = vmatprep.subr.mxu0 0.0
        %1088 = vmatpush1.msra.mxu0 0.0
        %1089 = vmatprep.subr.mxu0 0.0
        %1090 = vmatpush1.msra.mxu0 0.0
        %1091 = vmatprep.subr.mxu0 0.0
        %1092 = vmatpush1.msra.mxu0 0.0
        %1093 = vmatprep.subr.mxu0 0.0
        %1094 = vmatpush1.msra.mxu0 0.0
        %1095 = vmatprep.subr.mxu0 0.0
        %1096 = vmatpush1.msra.mxu0 0.0
        %1097 = vmatprep.subr.mxu0 0.0
        %1098 = vmatpush1.msra.mxu0 0.0
        %1099 = vmatprep.subr.mxu0 0.0
        %1100 = vmatpush1.msra.mxu0 0.0
        %1101 = vmatprep.subr.mxu0 0.0
        %1102 = vmatpush1.msra.mxu0 0.0
        %1103 = vmatprep.subr.mxu0 0.0
        %1104 = vmatpush1.msra.mxu0 0.0
        %1105 = vmatprep.subr.mxu0 0.0
        %1106 = vmatpush1.msra.mxu0 0.0
        %1107 = vmatprep.subr.mxu0 0.0
        %1108 = vmatpush1.msra.mxu0 0.0
        %1109 = vmatprep.subr.mxu0 0.0
        %1110 = vmatpush1.msra.mxu0 0.0
        %1111 = vmatprep.subr.mxu0 0.0
        %1112 = vmatpush1.msra.mxu0 0.0
        %1113 = vmatprep.subr.mxu0 0.0
        %1114 = vmatpush1.msra.mxu0 0.0
        %1115 = vmatprep.subr.mxu0 0.0
        %1116 = vmatpush1.msra.mxu0 0.0
        %1117 = vmatprep.subr.mxu0 0.0
        %1118 = vmatpush1.msra.mxu0 0.0
        %1119 = vmatprep.subr.mxu0 0.0
        %1120 = vmatpush1.msra.mxu0 0.0
        %1121 = vmatprep.subr.mxu0 0.0
        %1122 = vmatpush1.msra.mxu0 0.0
        %1123 = vmatprep.subr.mxu0 0.0
        %1124 = vmatpush1.msra.mxu0 0.0
        %1125 = vmatprep.subr.mxu0 0.0
        %1126 = vmatpush1.msra.mxu0 0.0
        %1127 = vmatprep.subr.mxu0 0.0
        %1128 = vmatpush1.msra.mxu0 0.0
        %1129 = vmatprep.subr.mxu0 0.0
        %1130 = vmatpush1.msra.mxu0 0.0
        %1131 = vmatprep.subr.mxu0 0.0
        %1132 = vmatpush1.msra.mxu0 0.0
        %1133 = vmatprep.subr.mxu0 0.0
        %1134 = vmatpush1.msra.mxu0 0.0
        %1135 = vmatprep.subr.mxu0 0.0
        %1136 = vmatpush1.msra.mxu0 0.0
        %1137 = vmatprep.subr.mxu0 0.0
        %1138 = vmatpush1.msra.mxu0 0.0
        %1139 = vmatprep.subr.mxu0 0.0
        %1140 = vmatpush1.msra.mxu0 0.0
        %1141 = vmatprep.subr.mxu0 0.0
        %1142 = vmatpush1.msra.mxu0 0.0
        %1143 = vmatprep.subr.mxu0 0.0
        %1144 = vmatpush1.msra.mxu0 0.0
        %1145 = vmatprep.mubr.f32.mxu0 0.0
        %1146 = vmatmul.mubr.f32.gmra.mrb[0].mxu0 %v1077
        %v1147 = vpop.f32.mrb[0].mxu0
        %v1148 = vadd.f32 0.0, %v1147
        %v1149 = vpop.f32.mrb[0].mxu0
        %1150 = vdwg.mxu0
        %1152 = vrot.lane.b32.xlu0 %v1148, 8
        %v1153 = vpop.permute.xlu0 %1152
        %vm1155 = vcmask 130112
        %1156 = vst.msk [vmem:[#allocation2] sm:$0xff] %vm1155, %v1153
        %1157 = vrot.lane.b32.xlu0 %v624, 112
        %v1158 = vpop.permute.xlu0 %1157
        %1159 = vrot.lane.b32.xlu0 %v706, 112
        %v1160 = vpop.permute.xlu0 %1159
        %1161 = vrot.lane.b32.xlu0 %v711, 112
        %v1162 = vpop.permute.xlu0 %1161
        %v1163 = vsel %vm807, %v1158, 0
        %v1165 = vsel %vm807, %v1160, 0
        %v1167 = vsel %vm807, %v1162, 0
        %1169 = vmatprep.subr.mxu0 0.0
        %1170 = vmatpush1.xpose.msra.mxu0 %v1165
        %1171 = vmatprep.subr.mxu0 0.0
        %1172 = vmatpush1.xpose.msra.mxu0 %v1167
        %1173 = vmatprep.subr.mxu0 0.0
        %1174 = vmatpush1.xpose.msra.mxu0 0.0
        %1175 = vmatprep.subr.mxu0 0.0
        %1176 = vmatpush1.xpose.msra.mxu0 0.0
        %1177 = vmatprep.subr.mxu0 0.0
        %1178 = vmatpush1.xpose.msra.mxu0 0.0
        %1179 = vmatprep.subr.mxu0 0.0
        %1180 = vmatpush1.xpose.msra.mxu0 0.0
        %1181 = vmatprep.subr.mxu0 0.0
        %1182 = vmatpush1.xpose.msra.mxu0 0.0
        %1183 = vmatprep.subr.mxu0 0.0
        %1184 = vmatpush1.xpose.msra.mxu0 0.0
        %1185 = vmatprep.subr.mxu0 0.0
        %1186 = vmatpush1.xpose.msra.mxu0 0.0
        %1187 = vmatprep.subr.mxu0 0.0
        %1188 = vmatpush1.xpose.msra.mxu0 0.0
        %1189 = vmatprep.subr.mxu0 0.0
        %1190 = vmatpush1.xpose.msra.mxu0 0.0
        %1191 = vmatprep.subr.mxu0 0.0
        %1192 = vmatpush1.xpose.msra.mxu0 0.0
        %1193 = vmatprep.subr.mxu0 0.0
        %1194 = vmatpush1.xpose.msra.mxu0 0.0
        %1195 = vmatprep.subr.mxu0 0.0
        %1196 = vmatpush1.xpose.msra.mxu0 0.0
        %1197 = vmatprep.subr.mxu0 0.0
        %1198 = vmatpush1.xpose.msra.mxu0 0.0
        %1199 = vmatprep.subr.mxu0 0.0
        %1200 = vmatpush1.xpose.msra.mxu0 0.0
        %1201 = vmatprep.subr.mxu0 0.0
        %1202 = vmatpush1.xpose.msra.mxu0 0.0
        %1203 = vmatprep.subr.mxu0 0.0
        %1204 = vmatpush1.xpose.msra.mxu0 0.0
        %1205 = vmatprep.subr.mxu0 0.0
        %1206 = vmatpush1.xpose.msra.mxu0 0.0
        %1207 = vmatprep.subr.mxu0 0.0
        %1208 = vmatpush1.xpose.msra.mxu0 0.0
        %1209 = vmatprep.subr.mxu0 0.0
        %1210 = vmatpush1.xpose.msra.mxu0 0.0
        %1211 = vmatprep.subr.mxu0 0.0
        %1212 = vmatpush1.xpose.msra.mxu0 0.0
        %1213 = vmatprep.subr.mxu0 0.0
        %1214 = vmatpush1.xpose.msra.mxu0 0.0
        %1215 = vmatprep.subr.mxu0 0.0
        %1216 = vmatpush1.xpose.msra.mxu0 0.0
        %1217 = vmatprep.subr.mxu0 0.0
        %1218 = vmatpush1.xpose.msra.mxu0 0.0
        %1219 = vmatprep.subr.mxu0 0.0
        %1220 = vmatpush1.xpose.msra.mxu0 0.0
        %1221 = vmatprep.subr.mxu0 0.0
        %1222 = vmatpush1.xpose.msra.mxu0 0.0
        %1223 = vmatprep.subr.mxu0 0.0
        %1224 = vmatpush1.xpose.msra.mxu0 0.0
        %1225 = vmatprep.subr.mxu0 0.0
        %1226 = vmatpush1.xpose.msra.mxu0 0.0
        %1227 = vmatprep.subr.mxu0 0.0
        %1228 = vmatpush1.xpose.msra.mxu0 0.0
        %1229 = vmatprep.subr.mxu0 0.0
        %1230 = vmatpush1.xpose.msra.mxu0 0.0
        %1231 = vmatprep.subr.mxu0 0.0
        %1232 = vmatpush1.xpose.msra.mxu0 0.0
        %1233 = vmatprep.mubr.f32.mxu0 0.0
        %1234 = vmatmul.mubr.f32.gmra.mrb[0].mxu0 %v1163
        %v1235 = vpop.f32.mrb[0].mxu0
        %v1236 = vadd.f32 0.0, %v1235
        %v1237 = vpop.f32.mrb[0].mxu0
        %1238 = vdwg.mxu0
        %v1239 = vsel %vm887, %v1236, -inf
        %1240 = vmax.xlane.f32.xlu0 %v1239
        %v1241 = vpop.xlane.xlu0 %1240
        %v1242 = vsub.f32 %v1236, %v1241
        %v1243 = vmul.f32 %v1242, 1.442695
        %v1244 = vpow.pop %v1243
        %v1245 = vsel %vm887, %v1244, 0.0
        %1246 = vadd.xlane.f32.xlu0 %v1245
        %v1247 = vpop.xlane.xlu0 %1246
        %v1248 = vrcp.pop %v1247
        %v1249 = vmul.f32 %v1244, %v1248
        %1250 = vrot.lane.b32.xlu0 %v795, 112
        %v1251 = vpop.permute.xlu0 %1250
        %1252 = vrot.lane.b32.xlu0 %v800, 112
        %v1253 = vpop.permute.xlu0 %1252
        %v1256 = vsel %vm887, %v1249, 0
        %v1258 = vsel %vm902, %v1253, 0
        %1260 = vmatprep.subr.mxu0 0.0
        %1261 = vmatpush1.msra.mxu0 %v1251
        %1262 = vmatprep.subr.mxu0 0.0
        %1263 = vmatpush1.msra.mxu0 %v1258
        %1264 = vmatprep.subr.mxu0 0.0
        %1265 = vmatpush1.msra.mxu0 0.0
        %1266 = vmatprep.subr.mxu0 0.0
        %1267 = vmatpush1.msra.mxu0 0.0
        %1268 = vmatprep.subr.mxu0 0.0
        %1269 = vmatpush1.msra.mxu0 0.0
        %1270 = vmatprep.subr.mxu0 0.0
        %1271 = vmatpush1.msra.mxu0 0.0
        %1272 = vmatprep.subr.mxu0 0.0
        %1273 = vmatpush1.msra.mxu0 0.0
        %1274 = vmatprep.subr.mxu0 0.0
        %1275 = vmatpush1.msra.mxu0 0.0
        %1276 = vmatprep.subr.mxu0 0.0
        %1277 = vmatpush1.msra.mxu0 0.0
        %1278 = vmatprep.subr.mxu0 0.0
        %1279 = vmatpush1.msra.mxu0 0.0
        %1280 = vmatprep.subr.mxu0 0.0
        %1281 = vmatpush1.msra.mxu0 0.0
        %1282 = vmatprep.subr.mxu0 0.0
        %1283 = vmatpush1.msra.mxu0 0.0
        %1284 = vmatprep.subr.mxu0 0.0
        %1285 = vmatpush1.msra.mxu0 0.0
        %1286 = vmatprep.subr.mxu0 0.0
        %1287 = vmatpush1.msra.mxu0 0.0
        %1288 = vmatprep.subr.mxu0 0.0
        %1289 = vmatpush1.msra.mxu0 0.0
        %1290 = vmatprep.subr.mxu0 0.0
        %1291 = vmatpush1.msra.mxu0 0.0
        %1292 = vmatprep.subr.mxu0 0.0
        %1293 = vmatpush1.msra.mxu0 0.0
        %1294 = vmatprep.subr.mxu0 0.0
        %1295 = vmatpush1.msra.mxu0 0.0
        %1296 = vmatprep.subr.mxu0 0.0
        %1297 = vmatpush1.msra.mxu0 0.0
        %1298 = vmatprep.subr.mxu0 0.0
        %1299 = vmatpush1.msra.mxu0 0.0
        %1300 = vmatprep.subr.mxu0 0.0
        %1301 = vmatpush1.msra.mxu0 0.0
        %1302 = vmatprep.subr.mxu0 0.0
        %1303 = vmatpush1.msra.mxu0 0.0
        %1304 = vmatprep.subr.mxu0 0.0
        %1305 = vmatpush1.msra.mxu0 0.0
        %1306 = vmatprep.subr.mxu0 0.0
        %1307 = vmatpush1.msra.mxu0 0.0
        %1308 = vmatprep.subr.mxu0 0.0
        %1309 = vmatpush1.msra.mxu0 0.0
        %1310 = vmatprep.subr.mxu0 0.0
        %1311 = vmatpush1.msra.mxu0 0.0
        %1312 = vmatprep.subr.mxu0 0.0
        %1313 = vmatpush1.msra.mxu0 0.0
        %1314 = vmatprep.subr.mxu0 0.0
        %1315 = vmatpush1.msra.mxu0 0.0
        %1316 = vmatprep.subr.mxu0 0.0
        %1317 = vmatpush1.msra.mxu0 0.0
        %1318 = vmatprep.subr.mxu0 0.0
        %1319 = vmatpush1.msra.mxu0 0.0
        %1320 = vmatprep.subr.mxu0 0.0
        %1321 = vmatpush1.msra.mxu0 0.0
        %1322 = vmatprep.subr.mxu0 0.0
        %1323 = vmatpush1.msra.mxu0 0.0
        %1324 = vmatprep.mubr.f32.mxu0 0.0
        %1325 = vmatmul.mubr.f32.gmra.mrb[0].mxu0 %v1256
        %v1326 = vpop.f32.mrb[0].mxu0
        %v1327 = vadd.f32 0.0, %v1326
        %v1328 = vpop.f32.mrb[0].mxu0
        %1329 = vdwg.mxu0
        %1331 = vrot.lane.b32.xlu0 %v1327, 16
        %v1332 = vpop.permute.xlu0 %1331
        %vm1334 = vcmask 195712
        %1335 = vst.msk [vmem:[#allocation2] sm:$0xff] %vm1334, %v1332
        %1336 = vrot.lane.b32.xlu0 %v624, 104
        %v1337 = vpop.permute.xlu0 %1336
        %1338 = vrot.lane.b32.xlu0 %v706, 104
        %v1339 = vpop.permute.xlu0 %1338
        %1340 = vrot.lane.b32.xlu0 %v711, 104
        %v1341 = vpop.permute.xlu0 %1340
        %v1342 = vsel %vm807, %v1337, 0
        %v1344 = vsel %vm807, %v1339, 0
        %v1346 = vsel %vm807, %v1341, 0
        %1348 = vmatprep.subr.mxu0 0.0
        %1349 = vmatpush1.xpose.msra.mxu0 %v1344
        %1350 = vmatprep.subr.mxu0 0.0
        %1351 = vmatpush1.xpose.msra.mxu0 %v1346
        %1352 = vmatprep.subr.mxu0 0.0
        %1353 = vmatpush1.xpose.msra.mxu0 0.0
        %1354 = vmatprep.subr.mxu0 0.0
        %1355 = vmatpush1.xpose.msra.mxu0 0.0
        %1356 = vmatprep.subr.mxu0 0.0
        %1357 = vmatpush1.xpose.msra.mxu0 0.0
        %1358 = vmatprep.subr.mxu0 0.0
        %1359 = vmatpush1.xpose.msra.mxu0 0.0
        %1360 = vmatprep.subr.mxu0 0.0
        %1361 = vmatpush1.xpose.msra.mxu0 0.0
        %1362 = vmatprep.subr.mxu0 0.0
        %1363 = vmatpush1.xpose.msra.mxu0 0.0
        %1364 = vmatprep.subr.mxu0 0.0
        %1365 = vmatpush1.xpose.msra.mxu0 0.0
        %1366 = vmatprep.subr.mxu0 0.0
        %1367 = vmatpush1.xpose.msra.mxu0 0.0
        %1368 = vmatprep.subr.mxu0 0.0
        %1369 = vmatpush1.xpose.msra.mxu0 0.0
        %1370 = vmatprep.subr.mxu0 0.0
        %1371 = vmatpush1.xpose.msra.mxu0 0.0
        %1372 = vmatprep.subr.mxu0 0.0
        %1373 = vmatpush1.xpose.msra.mxu0 0.0
        %1374 = vmatprep.subr.mxu0 0.0
        %1375 = vmatpush1.xpose.msra.mxu0 0.0
        %1376 = vmatprep.subr.mxu0 0.0
        %1377 = vmatpush1.xpose.msra.mxu0 0.0
        %1378 = vmatprep.subr.mxu0 0.0
        %1379 = vmatpush1.xpose.msra.mxu0 0.0
        %1380 = vmatprep.subr.mxu0 0.0
        %1381 = vmatpush1.xpose.msra.mxu0 0.0
        %1382 = vmatprep.subr.mxu0 0.0
        %1383 = vmatpush1.xpose.msra.mxu0 0.0
        %1384 = vmatprep.subr.mxu0 0.0
        %1385 = vmatpush1.xpose.msra.mxu0 0.0
        %1386 = vmatprep.subr.mxu0 0.0
        %1387 = vmatpush1.xpose.msra.mxu0 0.0
        %1388 = vmatprep.subr.mxu0 0.0
        %1389 = vmatpush1.xpose.msra.mxu0 0.0
        %1390 = vmatprep.subr.mxu0 0.0
        %1391 = vmatpush1.xpose.msra.mxu0 0.0
        %1392 = vmatprep.subr.mxu0 0.0
        %1393 = vmatpush1.xpose.msra.mxu0 0.0
        %1394 = vmatprep.subr.mxu0 0.0
        %1395 = vmatpush1.xpose.msra.mxu0 0.0
        %1396 = vmatprep.subr.mxu0 0.0
        %1397 = vmatpush1.xpose.msra.mxu0 0.0
        %1398 = vmatprep.subr.mxu0 0.0
        %1399 = vmatpush1.xpose.msra.mxu0 0.0
        %1400 = vmatprep.subr.mxu0 0.0
        %1401 = vmatpush1.xpose.msra.mxu0 0.0
        %1402 = vmatprep.subr.mxu0 0.0
        %1403 = vmatpush1.xpose.msra.mxu0 0.0
        %1404 = vmatprep.subr.mxu0 0.0
        %1405 = vmatpush1.xpose.msra.mxu0 0.0
        %1406 = vmatprep.subr.mxu0 0.0
        %1407 = vmatpush1.xpose.msra.mxu0 0.0
        %1408 = vmatprep.subr.mxu0 0.0
        %1409 = vmatpush1.xpose.msra.mxu0 0.0
        %1410 = vmatprep.subr.mxu0 0.0
        %1411 = vmatpush1.xpose.msra.mxu0 0.0
        %1412 = vmatprep.mubr.f32.mxu0 0.0
        %1413 = vmatmul.mubr.f32.gmra.mrb[0].mxu0 %v1342
        %v1414 = vpop.f32.mrb[0].mxu0
        %v1415 = vadd.f32 0.0, %v1414
        %v1416 = vpop.f32.mrb[0].mxu0
        %1417 = vdwg.mxu0
        %v1418 = vsel %vm887, %v1415, -inf
        %1419 = vmax.xlane.f32.xlu0 %v1418
        %v1420 = vpop.xlane.xlu0 %1419
        %v1421 = vsub.f32 %v1415, %v1420
        %v1422 = vmul.f32 %v1421, 1.442695
        %v1423 = vpow.pop %v1422
        %v1424 = vsel %vm887, %v1423, 0.0
        %1425 = vadd.xlane.f32.xlu0 %v1424
        %v1426 = vpop.xlane.xlu0 %1425
        %v1427 = vrcp.pop %v1426
        %v1428 = vmul.f32 %v1423, %v1427
        %1429 = vrot.lane.b32.xlu0 %v795, 104
        %v1430 = vpop.permute.xlu0 %1429
        %1431 = vrot.lane.b32.xlu0 %v800, 104
        %v1432 = vpop.permute.xlu0 %1431
        %v1435 = vsel %vm887, %v1428, 0
        %v1437 = vsel %vm902, %v1432, 0
        %1439 = vmatprep.subr.mxu0 0.0
        %1440 = vmatpush1.msra.mxu0 %v1430
        %1441 = vmatprep.subr.mxu0 0.0
        %1442 = vmatpush1.msra.mxu0 %v1437
        %1443 = vmatprep.subr.mxu0 0.0
        %1444 = vmatpush1.msra.mxu0 0.0
        %1445 = vmatprep.subr.mxu0 0.0
        %1446 = vmatpush1.msra.mxu0 0.0
        %1447 = vmatprep.subr.mxu0 0.0
        %1448 = vmatpush1.msra.mxu0 0.0
        %1449 = vmatprep.subr.mxu0 0.0
        %1450 = vmatpush1.msra.mxu0 0.0
        %1451 = vmatprep.subr.mxu0 0.0
        %1452 = vmatpush1.msra.mxu0 0.0
        %1453 = vmatprep.subr.mxu0 0.0
        %1454 = vmatpush1.msra.mxu0 0.0
        %1455 = vmatprep.subr.mxu0 0.0
        %1456 = vmatpush1.msra.mxu0 0.0
        %1457 = vmatprep.subr.mxu0 0.0
        %1458 = vmatpush1.msra.mxu0 0.0
        %1459 = vmatprep.subr.mxu0 0.0
        %1460 = vmatpush1.msra.mxu0 0.0
        %1461 = vmatprep.subr.mxu0 0.0
        %1462 = vmatpush1.msra.mxu0 0.0
        %1463 = vmatprep.subr.mxu0 0.0
        %1464 = vmatpush1.msra.mxu0 0.0
        %1465 = vmatprep.subr.mxu0 0.0
        %1466 = vmatpush1.msra.mxu0 0.0
        %1467 = vmatprep.subr.mxu0 0.0
        %1468 = vmatpush1.msra.mxu0 0.0
        %1469 = vmatprep.subr.mxu0 0.0
        %1470 = vmatpush1.msra.mxu0 0.0
        %1471 = vmatprep.subr.mxu0 0.0
        %1472 = vmatpush1.msra.mxu0 0.0
        %1473 = vmatprep.subr.mxu0 0.0
        %1474 = vmatpush1.msra.mxu0 0.0
        %1475 = vmatprep.subr.mxu0 0.0
        %1476 = vmatpush1.msra.mxu0 0.0
        %1477 = vmatprep.subr.mxu0 0.0
        %1478 = vmatpush1.msra.mxu0 0.0
        %1479 = vmatprep.subr.mxu0 0.0
        %1480 = vmatpush1.msra.mxu0 0.0
        %1481 = vmatprep.subr.mxu0 0.0
        %1482 = vmatpush1.msra.mxu0 0.0
        %1483 = vmatprep.subr.mxu0 0.0
        %1484 = vmatpush1.msra.mxu0 0.0
        %1485 = vmatprep.subr.mxu0 0.0
        %1486 = vmatpush1.msra.mxu0 0.0
        %1487 = vmatprep.subr.mxu0 0.0
        %1488 = vmatpush1.msra.mxu0 0.0
        %1489 = vmatprep.subr.mxu0 0.0
        %1490 = vmatpush1.msra.mxu0 0.0
        %1491 = vmatprep.subr.mxu0 0.0
        %1492 = vmatpush1.msra.mxu0 0.0
        %1493 = vmatprep.subr.mxu0 0.0
        %1494 = vmatpush1.msra.mxu0 0.0
        %1495 = vmatprep.subr.mxu0 0.0
        %1496 = vmatpush1.msra.mxu0 0.0
        %1497 = vmatprep.subr.mxu0 0.0
        %1498 = vmatpush1.msra.mxu0 0.0
        %1499 = vmatprep.subr.mxu0 0.0
        %1500 = vmatpush1.msra.mxu0 0.0
        %1501 = vmatprep.subr.mxu0 0.0
        %1502 = vmatpush1.msra.mxu0 0.0
        %1503 = vmatprep.mubr.f32.mxu0 0.0
        %1504 = vmatmul.mubr.f32.gmra.mrb[0].mxu0 %v1435
        %v1505 = vpop.f32.mrb[0].mxu0
        %v1506 = vadd.f32 0.0, %v1505
        %v1507 = vpop.f32.mrb[0].mxu0
        %1508 = vdwg.mxu0
        %1510 = vrot.lane.b32.xlu0 %v1506, 24
        %v1511 = vpop.permute.xlu0 %1510
        %vm1513 = vcmask 261312
        %1514 = vst.msk [vmem:[#allocation2] sm:$0xff] %vm1513, %v1511
        %v1515 = vld [vmem:[#allocation2] sm:$0xff]
        %v1516 = vlaneseq
        %v1517 = vshrl.u32 %v1516, 7
        %v1518 = vsub.s32 3, %v1517
        %v1519 = vrot.slane %v541, %v1518
        %v1521 = vsel %vm550, %v1515, 0
        %1523 = vmatprep.subr.mxu0 0.0
        %1524 = vmatpush1.msra.mxu0 %v803
        %1525 = vmatprep.subr.mxu0 0.0
        %1526 = vmatpush1.msra.mxu0 %v804
        %1527 = vmatprep.subr.mxu0 0.0
        %1528 = vmatpush1.msra.mxu0 %v805
        %1529 = vmatprep.subr.mxu0 0.0
        %1530 = vmatpush1.msra.mxu0 %v806
        %1531 = vmatprep.subr.mxu0 0.0
        %1532 = vmatpush1.msra.mxu0 0.0
        %1533 = vmatprep.subr.mxu0 0.0
        %1534 = vmatpush1.msra.mxu0 0.0
        %1535 = vmatprep.subr.mxu0 0.0
        %1536 = vmatpush1.msra.mxu0 0.0
        %1537 = vmatprep.subr.mxu0 0.0
        %1538 = vmatpush1.msra.mxu0 0.0
        %1539 = vmatprep.subr.mxu0 0.0
        %1540 = vmatpush1.msra.mxu0 0.0
        %1541 = vmatprep.subr.mxu0 0.0
        %1542 = vmatpush1.msra.mxu0 0.0
        %1543 = vmatprep.subr.mxu0 0.0
        %1544 = vmatpush1.msra.mxu0 0.0
        %1545 = vmatprep.subr.mxu0 0.0
        %1546 = vmatpush1.msra.mxu0 0.0
        %1547 = vmatprep.subr.mxu0 0.0
        %1548 = vmatpush1.msra.mxu0 0.0
        %1549 = vmatprep.subr.mxu0 0.0
        %1550 = vmatpush1.msra.mxu0 0.0
        %1551 = vmatprep.subr.mxu0 0.0
        %1552 = vmatpush1.msra.mxu0 0.0
        %1553 = vmatprep.subr.mxu0 0.0
        %1554 = vmatpush1.msra.mxu0 0.0
        %1555 = vmatprep.subr.mxu0 0.0
        %1556 = vmatpush1.msra.mxu0 0.0
        %1557 = vmatprep.subr.mxu0 0.0
        %1558 = vmatpush1.msra.mxu0 0.0
        %1559 = vmatprep.subr.mxu0 0.0
        %1560 = vmatpush1.msra.mxu0 0.0
        %1561 = vmatprep.subr.mxu0 0.0
        %1562 = vmatpush1.msra.mxu0 0.0
        %1563 = vmatprep.subr.mxu0 0.0
        %1564 = vmatpush1.msra.mxu0 0.0
        %1565 = vmatprep.subr.mxu0 0.0
        %1566 = vmatpush1.msra.mxu0 0.0
        %1567 = vmatprep.subr.mxu0 0.0
        %1568 = vmatpush1.msra.mxu0 0.0
        %1569 = vmatprep.subr.mxu0 0.0
        %1570 = vmatpush1.msra.mxu0 0.0
        %1571 = vmatprep.subr.mxu0 0.0
        %1572 = vmatpush1.msra.mxu0 0.0
        %1573 = vmatprep.subr.mxu0 0.0
        %1574 = vmatpush1.msra.mxu0 0.0
        %1575 = vmatprep.subr.mxu0 0.0
        %1576 = vmatpush1.msra.mxu0 0.0
        %1577 = vmatprep.subr.mxu0 0.0
        %1578 = vmatpush1.msra.mxu0 0.0
        %1579 = vmatprep.subr.mxu0 0.0
        %1580 = vmatpush1.msra.mxu0 0.0
        %1581 = vmatprep.subr.mxu0 0.0
        %1582 = vmatpush1.msra.mxu0 0.0
        %1583 = vmatprep.subr.mxu0 0.0
        %1584 = vmatpush1.msra.mxu0 0.0
        %1585 = vmatprep.subr.mxu0 0.0
        %1586 = vmatpush1.msra.mxu0 0.0
        %1587 = vmatprep.mubr.f32.mxu0 0.0
        %1588 = vmatmul.mubr.f32.gmra.mrb[0].mxu0 %v1521
        %v1589 = vpop.f32.mrb[0].mxu0
        %v1590 = vadd.f32 %v1519, %v1589
        %v1591 = vpop.f32.mrb[0].mxu0
        %1592 = vdwg.mxu0
        %v1593 = vadd.f32 %v532, %v1590
        %v1594 = vsel %vm550, %v1593, 0.0
        %1595 = vadd.xlane.f32.xlu0 %v1594
        %v1596 = vpop.xlane.xlu0 %1595
        %v1597 = vrcp.pop 32.0
        %v1598 = vmul.f32 %v1596, %v1597
        %v1599 = vmul.f32 %v1593, %v1593
        %v1600 = vsel %vm550, %v1599, 0.0
        %1601 = vadd.xlane.f32.xlu0 %v1600
        %v1602 = vpop.xlane.xlu0 %1601
        %v1603 = vmul.f32 %v1602, %v1597
        %v1604 = vmul.f32 %v1598, %v1598
        %v1605 = vsub.f32 %v1603, %v1604
        %v1606 = vsub.f32 %v1593, %v1598
        %v1607 = vadd.f32 %v1605, 1e-05
        %v1608 = vrsqrt.pop %v1607
        %v1609 = vmul.f32 %v1606, %v1608
        %v1610 = vlaneseq
        %v1611 = vshrl.u32 %v1610, 7
        %v1612 = vsub.s32 4, %v1611
        %v1613 = vrot.slane %v541, %v1612
        %v1614 = vmul.f32 %v1609, %v1613
        %v1615 = vlaneseq
        %v1616 = vshrl.u32 %v1615, 7
        %v1617 = vsub.s32 5, %v1616
        %v1618 = vrot.slane %v541, %v1617
        %v1619 = vadd.f32 %v1614, %v1618
        %1620 = vst.msk [vmem:[%s531] sm:$0xff] %vm550, %v1619
        %s1621 = sand.u32 %s251, 1
        %s1622 = scalar_lea.sflag [#allocation5], %s1621
        %s1623 = sand.u32 %s251, 1
        %s1624 = smul.addr %s1623, 8
        %s1625 = scalar_lea.vmem [#allocation18], %s1624
        // Predicated region
        $region93: #{transformer_decoder_layer.4} parent=55 // pred_check
          %p1626 = pneg %p261
        $region94: #{transformer_decoder_layer.4} parent=55 // pred_check_branch
          %1628 = sbr.rel (%p1626) target = $region96
        $region95: #{transformer_decoder_layer.4} parent=55 // pred_region
          %s1630 = ssub.s32 128, 128
          %1631 = vsyncadd %s1622, %s1630
          %s1632 = smul.addr %s34, 128
          %s1633 = scalar_lea.hbm %s9, %s1632
          %s1635 = sshll.u32 %s1625, 4
          %s1636 = int_to_ptr.vmem [resolvable:$true] %s1635
          %1638 = dma.vmem_to_hbm [thread:$0]  %s1636, 128, %s1633, %s1622
        $region96: #{transformer_decoder_layer.4} parent=55 // pred_fallthru
          _
      $region56: #{transformer_decoder_layer.4} parent=5 // pred_fallthru
        _
      %p1639 = scmp.le.s32.totalorder 2, %s29
      // Predicated region
      $region97: #{transformer_decoder_layer.4} parent=5 // pred_check
        %p1640 = pneg %p1639
      $region98: #{transformer_decoder_layer.4} parent=5 // pred_check_branch
        %1642 = sbr.rel (%p1640) target = $region100
      $region99: #{transformer_decoder_layer.4} parent=5 // pred_region
        %s1643 = ssub.s32 %s29, 2
        // Predicated region
        $region101: #{transformer_decoder_layer.4} parent=99 // pred_check
          %p1644 = pneg %p267
        $region102: #{transformer_decoder_layer.4} parent=99 // pred_check_branch
          %1646 = sbr.rel (%p1644) target = $region104
        $region103: #{transformer_decoder_layer.4} parent=99 // pred_region
          %s1647 = sand.u32 %s252, 1
          %s1648 = scalar_lea.sflag [#allocation5], %s1647
          %s1649 = sand.u32 %s252, 1
          %s1650 = smul.addr %s1649, 8
          %s1651 = scalar_lea.vmem [#allocation18], %s1650
          %1652 = dma.done %s1648, 128
        $region104: #{transformer_decoder_layer.4} parent=99 // pred_fallthru
          _
      $region100: #{transformer_decoder_layer.4} parent=5 // pred_fallthru
        _
    $region6: #{transformer_decoder_layer.4} parent=1 // loop_footer
      %s33 = sadd.s32 1, %s29
    $region7: #{transformer_decoder_layer.4} parent=1 // loop_footer_branch
      %28 = sbr.rel target = $region3
    $region8: #{transformer_decoder_layer.4} parent=1 // loop_exit
      _
    %1653 = vsyncpa [#allocation4], 1
    %s1654 = scalar_lea.sflag [#allocation4], 1
    %1655 = vsyncpa %s1654, 1
    %1656 = vsyncpa [#allocation7], 1
    %s1657 = scalar_lea.sflag [#allocation7], 1
    %1658 = vsyncpa %s1657, 1
    %1659 = vsyncpa [#allocation10], 1
    %s1660 = scalar_lea.sflag [#allocation10], 1
    %1661 = vsyncpa %s1660, 1
    %1662 = vsyncpa [#allocation13], 1
    %1663 = vsyncpa [#allocation16], 1
    %1664 = vsyncpa [#allocation5], 1
    %s1665 = scalar_lea.sflag [#allocation5], 1
    %1666 = vsyncpa %s1665, 1

// kernel: transformer_decoder_layer.3
$region0: #{transformer_decoder_layer.3}
  #allocation0 [shape = 'u32[]', space=smem, size = 0x4, offset = 0x4, fixed_abs, tag = 'smem constant byte address 0x4 - core index']
  #allocation1 [shape = 'u32[144,128]{1,0:T(1,128)}', space=vmem, size = 0x12000, scoped, tag = 'internal scratch']
  #allocation2 [shape = 'f32[8,32]{1,0:T(8,128)}', space=vmem, size = 0x1000, scoped, tag = 'scratch operand']
  %s0 = inlined_call_operand.hbm [shape: f32[2,8,32], index: 0, kind: input, shape index: {}]
  %s1 = inlined_call_operand.hbm [shape: f32[2,8,32], index: 1, kind: input, shape index: {}]
  %s2 = inlined_call_operand.hbm [shape: f32[32,64], index: 2, kind: input, shape index: {}]
  %s3 = inlined_call_operand.hbm [shape: f32[32,32], index: 3, kind: input, shape index: {}]
  %s4 = inlined_call_operand.hbm [shape: f32[32,32], index: 4, kind: input, shape index: {}]
  %s5 = inlined_call_operand.hbm [shape: f32[6,32], index: 5, kind: input, shape index: {}]
  %s6 = inlined_call_operand.hbm [shape: f32[2,8,32], index: 6, kind: output, shape index: {}]
  %s7 = sld [smem:[#allocation0]]
  $region81: #{transformer_decoder_layer.3} parent=0
    _
  %s9 = ssub.s32 1, %s7
  %s10 = scalar_select 0, %s9, %s7
  $region1: #{transformer_decoder_layer.3} parent=0
    #allocation3 [shape = 'u8[8192]{0}', space=vmem, size = 0x2000, scoped, tag = 'input window, operand 0']
    #allocation4 [shape = 's32[2]{0}', space=sflag, size = 0x8, scoped, tag = 'scoped memory for transformer_decoder_layer.3']
    #allocation5 [shape = 's32[2]{0}', space=sflag, size = 0x8, scoped, tag = 'scoped memory for transformer_decoder_layer.3']
    #allocation6 [shape = 'u8[8192]{0}', space=vmem, size = 0x2000, scoped, tag = 'input window, operand 1']
    #allocation7 [shape = 's32[2]{0}', space=sflag, size = 0x8, scoped, tag = 'scoped memory for transformer_decoder_layer.3']
    #allocation8 [shape = 'u8[16384]{0}', space=vmem, size = 0x4000, scoped, tag = 'input window, operand 2, single buffered']
    #allocation9 [shape = 'u8[16384]{0}', space=vmem, size = 0x4000, scoped, tag = 'input window, operand 3, single buffered']
    #allocation10 [shape = 's32[1]{0}', space=sflag, size = 0x4, scoped, tag = 'scoped memory for transformer_decoder_layer.3']
    #allocation11 [shape = 'u8[16384]{0}', space=vmem, size = 0x4000, scoped, tag = 'input window, operand 4, single buffered']
    #allocation12 [shape = 'u8[4096]{0}', space=vmem, size = 0x1000, scoped, tag = 'input window, operand 5, single buffered']
    #allocation13 [shape = 's32[1]{0}', space=sflag, size = 0x4, scoped, tag = 'scoped memory for transformer_decoder_layer.3']
    #allocation14 [shape = 'u8[8192]{0}', space=vmem, size = 0x2000, scoped, tag = 'output window, operand 0']
    %11 = vsyncpa [#allocation4], 0
    %s12 = scalar_lea.sflag [#allocation4], 1
    %13 = vsyncpa %s12, 0
    %14 = vsyncpa [#allocation7], 0
    %s15 = scalar_lea.sflag [#allocation7], 1
    %16 = vsyncpa %s15, 0
    %17 = vsyncpa [#allocation10], 0
    %18 = vsyncpa [#allocation13], 0
    %19 = vsyncpa [#allocation5], 0
    %s20 = scalar_lea.sflag [#allocation5], 1
    %21 = vsyncpa %s20, 0
    loop: start=0, step=1, limit=4
    $region2: #{transformer_decoder_layer.3} parent=1 // loop_pre_header
      _
    $region3: #{transformer_decoder_layer.3} parent=1 // loop_header
      %s23 = sphi 0, %s27
      %p24 = scmp.ge.s32.totalorder %s23, 4
      %s33 = sphi 0, %s35
      %s36 = sphi 0, %s33
      %s37 = sphi 0, %s36
      %s53 = sphi 0, %s37
      %s59 = sphi 0, %s61
      %s62 = sphi 0, %s59
      %s63 = sphi 0, %s62
      %s79 = sphi 0, %s63
      %s83 = sphi 0, %s83
      %s85 = sphi 0, %s83
      %s86 = sphi 0, %s85
      %s100 = sphi 0, %s86
      %s104 = sphi 0, %s104
      %s106 = sphi 0, %s104
      %s107 = sphi 0, %s106
      %s121 = sphi 0, %s107
      %s125 = sphi 0, %s125
      %s127 = sphi 0, %s125
      %s128 = sphi 0, %s127
      %s142 = sphi 0, %s128
      %s146 = sphi 0, %s146
      %s148 = sphi 0, %s146
      %s149 = sphi 0, %s148
      %s163 = sphi 0, %s149
      %s169 = sphi 0, %s171
      %s172 = sphi 0, %s169
      %s173 = sphi 0, %s172
      %s189 = sphi 0, %s173
    $region4: #{transformer_decoder_layer.3} parent=1 // loop_header_branch
      %26 = sbr.rel (%p24) target = $region8
    $region5: #{transformer_decoder_layer.3} parent=1 // loop_body
      %s28 = ssub.s32 %s23, 1
      %s29 = ssub.s32 %s23, 2
      %s30 = sadd.s32 %s23, 1
      %s31 = ssub.s32 %s23, %s30
      %p32 = scmp.eq.s32.totalorder %s31, 0
      %s34 = sadd.s32 %s33, 1
      %s35 = scalar_select %p32, %s33, %s34
      %p38 = pneg %p32
      %p39 = scmp.eq.s32.totalorder %s23, 1
      %p40 = por %p38, %p39
      %p41 = scmp.ne.s32.totalorder %s33, %s36
      %p42 = scmp.eq.s32.totalorder %s23, 0
      %p43 = por %p41, %p42
      %p44 = scmp.ne.s32.totalorder %s33, %s36
      %p45 = scmp.eq.s32.totalorder %s28, 1
      %p46 = por %p44, %p45
      %p47 = scmp.ne.s32.totalorder %s36, %s37
      %p48 = scmp.eq.s32.totalorder %s28, 0
      %p49 = por %p47, %p48
      %p50 = scmp.ne.s32.totalorder %s36, %s37
      %p51 = scmp.eq.s32.totalorder %s29, 1
      %p52 = por %p50, %p51
      %p54 = scmp.ne.s32.totalorder %s37, %s53
      %p55 = scmp.eq.s32.totalorder %s29, 0
      %p56 = por %p54, %p55
      %s57 = ssub.s32 %s23, %s30
      %p58 = scmp.eq.s32.totalorder %s57, 0
      %s60 = sadd.s32 %s59, 1
      %s61 = scalar_select %p58, %s59, %s60
      %p64 = pneg %p58
      %p65 = scmp.eq.s32.totalorder %s23, 1
      %p66 = por %p64, %p65
      %p67 = scmp.ne.s32.totalorder %s59, %s62
      %p68 = scmp.eq.s32.totalorder %s23, 0
      %p69 = por %p67, %p68
      %p70 = scmp.ne.s32.totalorder %s59, %s62
      %p71 = scmp.eq.s32.totalorder %s28, 1
      %p72 = por %p70, %p71
      %p73 = scmp.ne.s32.totalorder %s62, %s63
      %p74 = scmp.eq.s32.totalorder %s28, 0
      %p75 = por %p73, %p74
      %p76 = scmp.ne.s32.totalorder %s62, %s63
      %p77 = scmp.eq.s32.totalorder %s29, 1
      %p78 = por %p76, %p77
      %p80 = scmp.ne.s32.totalorder %s63, %s79
      %p81 = scmp.eq.s32.totalorder %s29, 0
      %p82 = por %p80, %p81
      %s84 = sadd.s32 %s83, 1
      %p87 = scmp.eq.s32.totalorder %s23, 1
      %p88 = scmp.ne.s32.totalorder %s83, %s85
      %p89 = scmp.eq.s32.totalorder %s23, 0
      %p90 = por %p88, %p89
      %p91 = scmp.ne.s32.totalorder %s83, %s85
      %p92 = scmp.eq.s32.totalorder %s28, 1
      %p93 = por %p91, %p92
      %p94 = scmp.ne.s32.totalorder %s85, %s86
      %p95 = scmp.eq.s32.totalorder %s28, 0
      %p96 = por %p94, %p95
      %p97 = scmp.ne.s32.totalorder %s85, %s86
      %p98 = scmp.eq.s32.totalorder %s29, 1
      %p99 = por %p97, %p98
      %p101 = scmp.ne.s32.totalorder %s86, %s100
      %p102 = scmp.eq.s32.totalorder %s29, 0
      %p103 = por %p101, %p102
      %s105 = sadd.s32 %s104, 1
      %p108 = scmp.eq.s32.totalorder %s23, 1
      %p109 = scmp.ne.s32.totalorder %s104, %s106
      %p110 = scmp.eq.s32.totalorder %s23, 0
      %p111 = por %p109, %p110
      %p112 = scmp.ne.s32.totalorder %s104, %s106
      %p113 = scmp.eq.s32.totalorder %s28, 1
      %p114 = por %p112, %p113
      %p115 = scmp.ne.s32.totalorder %s106, %s107
      %p116 = scmp.eq.s32.totalorder %s28, 0
      %p117 = por %p115, %p116
      %p118 = scmp.ne.s32.totalorder %s106, %s107
      %p119 = scmp.eq.s32.totalorder %s29, 1
      %p120 = por %p118, %p119
      %p122 = scmp.ne.s32.totalorder %s107, %s121
      %p123 = scmp.eq.s32.totalorder %s29, 0
      %p124 = por %p122, %p123
      %s126 = sadd.s32 %s125, 1
      %p129 = scmp.eq.s32.totalorder %s23, 1
      %p130 = scmp.ne.s32.totalorder %s125, %s127
      %p131 = scmp.eq.s32.totalorder %s23, 0
      %p132 = por %p130, %p131
      %p133 = scmp.ne.s32.totalorder %s125, %s127
      %p134 = scmp.eq.s32.totalorder %s28, 1
      %p135 = por %p133, %p134
      %p136 = scmp.ne.s32.totalorder %s127, %s128
      %p137 = scmp.eq.s32.totalorder %s28, 0
      %p138 = por %p136, %p137
      %p139 = scmp.ne.s32.totalorder %s127, %s128
      %p140 = scmp.eq.s32.totalorder %s29, 1
      %p141 = por %p139, %p140
      %p143 = scmp.ne.s32.totalorder %s128, %s142
      %p144 = scmp.eq.s32.totalorder %s29, 0
      %p145 = por %p143, %p144
      %s147 = sadd.s32 %s146, 1
      %p150 = scmp.eq.s32.totalorder %s23, 1
      %p151 = scmp.ne.s32.totalorder %s146, %s148
      %p152 = scmp.eq.s32.totalorder %s23, 0
      %p153 = por %p151, %p152
      %p154 = scmp.ne.s32.totalorder %s146, %s148
      %p155 = scmp.eq.s32.totalorder %s28, 1
      %p156 = por %p154, %p155
      %p157 = scmp.ne.s32.totalorder %s148, %s149
      %p158 = scmp.eq.s32.totalorder %s28, 0
      %p159 = por %p157, %p158
      %p160 = scmp.ne.s32.totalorder %s148, %s149
      %p161 = scmp.eq.s32.totalorder %s29, 1
      %p162 = por %p160, %p161
      %p164 = scmp.ne.s32.totalorder %s149, %s163
      %p165 = scmp.eq.s32.totalorder %s29, 0
      %p166 = por %p164, %p165
      %s167 = ssub.s32 %s23, %s30
      %p168 = scmp.eq.s32.totalorder %s167, 0
      %s170 = sadd.s32 %s169, 1
      %s171 = scalar_select %p168, %s169, %s170
      %p174 = pneg %p168
      %p175 = scmp.eq.s32.totalorder %s23, 1
      %p176 = por %p174, %p175
      %p177 = scmp.ne.s32.totalorder %s169, %s172
      %p178 = scmp.eq.s32.totalorder %s23, 0
      %p179 = por %p177, %p178
      %p180 = scmp.ne.s32.totalorder %s169, %s172
      %p181 = scmp.eq.s32.totalorder %s28, 1
      %p182 = por %p180, %p181
      %p183 = scmp.ne.s32.totalorder %s172, %s173
      %p184 = scmp.eq.s32.totalorder %s28, 0
      %p185 = por %p183, %p184
      %p186 = scmp.ne.s32.totalorder %s172, %s173
      %p187 = scmp.eq.s32.totalorder %s29, 1
      %p188 = por %p186, %p187
      %p190 = scmp.ne.s32.totalorder %s173, %s189
      %p191 = scmp.eq.s32.totalorder %s29, 0
      %p192 = por %p190, %p191
      %p193 = scmp.le.s32.totalorder 1, %s23
      %p194 = scmp.lt.s32.totalorder %s23, 3
      %p195 = pnand %p193, %p194
      %p196 = pneg %p195
      // Predicated region
      $region9: #{transformer_decoder_layer.3} parent=5 // pred_check
        _
      $region10: #{transformer_decoder_layer.3} parent=5 // pred_check_branch
        %198 = sbr.rel (%p195) target = $region12
      $region11: #{transformer_decoder_layer.3} parent=5 // pred_region
        %s199 = ssub.s32 %s23, 1
        // Predicated region
        $region13: #{transformer_decoder_layer.3} parent=11 // pred_check
          %p200 = pneg %p96
        $region14: #{transformer_decoder_layer.3} parent=11 // pred_check_branch
          %202 = sbr.rel (%p200) target = $region16
        $region15: #{transformer_decoder_layer.3} parent=11 // pred_region
          %s204 = ssub.s32 512, 512
          %205 = vsyncadd [#allocation7], %s204
          %s206 = sshll.u32 [#allocation8], 4
          %s207 = int_to_ptr.vmem [resolvable:$true] %s206
          %212 = dma.hbm_to_vmem [thread:$0]  %s2, 512, %s207, [#allocation7], 128, 128, 8
        $region16: #{transformer_decoder_layer.3} parent=11 // pred_fallthru
          _
        // Predicated region
        $region17: #{transformer_decoder_layer.3} parent=11 // pred_check
          %p213 = pneg %p117
        $region18: #{transformer_decoder_layer.3} parent=11 // pred_check_branch
          %215 = sbr.rel (%p213) target = $region20
        $region19: #{transformer_decoder_layer.3} parent=11 // pred_region
          %s217 = ssub.s32 512, 512
          %218 = vsyncadd [#allocation10], %s217
          %s219 = sshll.u32 [#allocation9], 4
          %s220 = int_to_ptr.vmem [resolvable:$true] %s219
          %225 = dma.hbm_to_vmem [thread:$0]  %s3, 512, %s220, [#allocation10], 128, 128, 8
        $region20: #{transformer_decoder_layer.3} parent=11 // pred_fallthru
          _
        // Predicated region
        $region21: #{transformer_decoder_layer.3} parent=11 // pred_check
          %p226 = pneg %p138
        $region22: #{transformer_decoder_layer.3} parent=11 // pred_check_branch
          %228 = sbr.rel (%p226) target = $region24
        $region23: #{transformer_decoder_layer.3} parent=11 // pred_region
          %s230 = ssub.s32 512, 512
          %231 = vsyncadd [#allocation10], %s230
          %s232 = sshll.u32 [#allocation11], 4
          %s233 = int_to_ptr.vmem [resolvable:$true] %s232
          %238 = dma.hbm_to_vmem [thread:$0]  %s4, 512, %s233, [#allocation10], 128, 128, 8
        $region24: #{transformer_decoder_layer.3} parent=11 // pred_fallthru
          _
        // Predicated region
        $region25: #{transformer_decoder_layer.3} parent=11 // pred_check
          %p239 = pneg %p159
        $region26: #{transformer_decoder_layer.3} parent=11 // pred_check_branch
          %241 = sbr.rel (%p239) target = $region28
        $region27: #{transformer_decoder_layer.3} parent=11 // pred_region
          %s243 = ssub.s32 128, 128
          %244 = vsyncadd [#allocation13], %s243
          %s246 = sshll.u32 [#allocation12], 4
          %s247 = int_to_ptr.vmem [resolvable:$true] %s246
          %249 = dma.hbm_to_vmem [thread:$0]  %s5, 128, %s247, [#allocation13]
        $region28: #{transformer_decoder_layer.3} parent=11 // pred_fallthru
          _
      $region12: #{transformer_decoder_layer.3} parent=5 // pred_fallthru
        _
      %p250 = scmp.lt.s32.totalorder %s23, 2
      // Predicated region
      $region29: #{transformer_decoder_layer.3} parent=5 // pred_check
        %p251 = pneg %p250
      $region30: #{transformer_decoder_layer.3} parent=5 // pred_check_branch
        %253 = sbr.rel (%p251) target = $region32
      $region31: #{transformer_decoder_layer.3} parent=5 // pred_region
        // Predicated region
        $region33: #{transformer_decoder_layer.3} parent=31 // pred_check
          %p254 = pneg %p43
        $region34: #{transformer_decoder_layer.3} parent=31 // pred_check_branch
          %256 = sbr.rel (%p254) target = $region36
        $region35: #{transformer_decoder_layer.3} parent=31 // pred_region
          %s257 = sand.u32 %s33, 1
          %s258 = scalar_lea.sflag [#allocation4], %s257
          %s259 = sand.u32 %s33, 1
          %s260 = smul.addr %s259, 8
          %s261 = scalar_lea.vmem [#allocation3], %s260
          %s263 = ssub.s32 128, 128
          %264 = vsyncadd %s258, %s263
          %s265 = smul.addr %s23, 128
          %s266 = scalar_lea.hbm %s0, %s265
          %s268 = sshll.u32 %s261, 4
          %s269 = int_to_ptr.vmem [resolvable:$true] %s268
          %271 = dma.hbm_to_vmem [thread:$0]  %s266, 128, %s269, %s258
        $region36: #{transformer_decoder_layer.3} parent=31 // pred_fallthru
          _
        // Predicated region
        $region37: #{transformer_decoder_layer.3} parent=31 // pred_check
          %p272 = pneg %p69
        $region38: #{transformer_decoder_layer.3} parent=31 // pred_check_branch
          %274 = sbr.rel (%p272) target = $region40
        $region39: #{transformer_decoder_layer.3} parent=31 // pred_region
          %s275 = sand.u32 %s23, 1
          %s276 = scalar_lea.sflag [#allocation7], %s275
          %s277 = sand.u32 %s59, 1
          %s278 = smul.addr %s277, 8
          %s279 = scalar_lea.vmem [#allocation6], %s278
          %s281 = ssub.s32 128, 128
          %282 = vsyncadd %s276, %s281
          %s283 = smul.addr %s23, 128
          %s284 = scalar_lea.hbm %s1, %s283
          %s286 = sshll.u32 %s279, 4
          %s287 = int_to_ptr.vmem [resolvable:$true] %s286
          %289 = dma.hbm_to_vmem [thread:$0]  %s284, 128, %s287, %s276
        $region40: #{transformer_decoder_layer.3} parent=31 // pred_fallthru
          _
      $region32: #{transformer_decoder_layer.3} parent=5 // pred_fallthru
        _
      %p290 = scmp.le.s32.totalorder 1, %s23
      %p291 = scmp.lt.s32.totalorder %s23, 3
      %p292 = pnand %p290, %p291
      %p293 = pneg %p292
      // Predicated region
      $region41: #{transformer_decoder_layer.3} parent=5 // pred_check
        _
      $region42: #{transformer_decoder_layer.3} parent=5 // pred_check_branch
        %295 = sbr.rel (%p292) target = $region44
      $region43: #{transformer_decoder_layer.3} parent=5 // pred_region
        %s296 = ssub.s32 %s23, 1
        %s297 = sand.u32 %s36, 1
        %s298 = scalar_lea.sflag [#allocation4], %s297
        %s299 = sand.u32 %s36, 1
        %s300 = smul.addr %s299, 8
        %s301 = scalar_lea.vmem [#allocation3], %s300
        // Predicated region
        $region45: #{transformer_decoder_layer.3} parent=43 // pred_check
          %p302 = pneg %p49
        $region46: #{transformer_decoder_layer.3} parent=43 // pred_check_branch
          %304 = sbr.rel (%p302) target = $region48
        $region47: #{transformer_decoder_layer.3} parent=43 // pred_region
          %305 = dma.done %s298, 128
        $region48: #{transformer_decoder_layer.3} parent=43 // pred_fallthru
          _
        %s306 = sand.u32 %s28, 1
        %s307 = scalar_lea.sflag [#allocation7], %s306
        %s308 = sand.u32 %s62, 1
        %s309 = smul.addr %s308, 8
        %s310 = scalar_lea.vmem [#allocation6], %s309
        // Predicated region
        $region49: #{transformer_decoder_layer.3} parent=43 // pred_check
          %p311 = pneg %p75
        $region50: #{transformer_decoder_layer.3} parent=43 // pred_check_branch
          %313 = sbr.rel (%p311) target = $region52
        $region51: #{transformer_decoder_layer.3} parent=43 // pred_region
          %314 = dma.done %s307, 128
        $region52: #{transformer_decoder_layer.3} parent=43 // pred_fallthru
          _
        // Predicated region
        $region53: #{transformer_decoder_layer.3} parent=43 // pred_check
          %p315 = pneg %p96
        $region54: #{transformer_decoder_layer.3} parent=43 // pred_check_branch
          %317 = sbr.rel (%p315) target = $region56
        $region55: #{transformer_decoder_layer.3} parent=43 // pred_region
          %318 = dma.done [#allocation7], 512
        $region56: #{transformer_decoder_layer.3} parent=43 // pred_fallthru
          _
        // Predicated region
        $region57: #{transformer_decoder_layer.3} parent=43 // pred_check
          %p319 = pneg %p117
        $region58: #{transformer_decoder_layer.3} parent=43 // pred_check_branch
          %321 = sbr.rel (%p319) target = $region60
        $region59: #{transformer_decoder_layer.3} parent=43 // pred_region
          %322 = dma.done [#allocation10], 512
        $region60: #{transformer_decoder_layer.3} parent=43 // pred_fallthru
          _
        // Predicated region
        $region61: #{transformer_decoder_layer.3} parent=43 // pred_check
          %p323 = pneg %p138
        $region62: #{transformer_decoder_layer.3} parent=43 // pred_check_branch
          %325 = sbr.rel (%p323) target = $region64
        $region63: #{transformer_decoder_layer.3} parent=43 // pred_region
          %326 = dma.done [#allocation10], 512
        $region64: #{transformer_decoder_layer.3} parent=43 // pred_fallthru
          _
        // Predicated region
        $region65: #{transformer_decoder_layer.3} parent=43 // pred_check
          %p327 = pneg %p159
        $region66: #{transformer_decoder_layer.3} parent=43 // pred_check_branch
          %329 = sbr.rel (%p327) target = $region68
        $region67: #{transformer_decoder_layer.3} parent=43 // pred_region
          %330 = dma.done [#allocation13], 128
        $region68: #{transformer_decoder_layer.3} parent=43 // pred_fallthru
          _
        %s331 = sand.u32 %s36, 1
        %s332 = scalar_lea.sflag [#allocation4], %s331
        %s333 = sand.u32 %s36, 1
        %s334 = smul.addr %s333, 8
        %s335 = scalar_lea.vmem [#allocation3], %s334
        %p336 = pneg %p49
        %p337 = pneg %p46
        %s338 = sand.u32 %s28, 1
        %s339 = scalar_lea.sflag [#allocation7], %s338
        %s340 = sand.u32 %s62, 1
        %s341 = smul.addr %s340, 8
        %s342 = scalar_lea.vmem [#allocation6], %s341
        %p343 = pneg %p75
        %p344 = pneg %p72
        %p345 = pneg %p96
        %p346 = pneg %p93
        %p347 = pneg %p117
        %p348 = pneg %p114
        %p349 = pneg %p138
        %p350 = pneg %p135
        %p351 = pneg %p159
        %p352 = pneg %p156
        %p353 = pneg %p185
        %p354 = pneg %p182
        %s355 = sand.u32 %s172, 1
        %s356 = scalar_lea.sflag [#allocation5], %s355
        %s357 = sand.u32 %s172, 1
        %s358 = smul.addr %s357, 8
        %s359 = scalar_lea.vmem [#allocation14], %s358
        %v360 = vld [vmem:[%s301] sm:$0xff]
        %v361 = vld [vmem:[%s310] sm:$0xff]
        %v362 = vadd.f32 %v360, %v361
        %v363 = vld [vmem:[#allocation12] sm:$0x3f]
        %v364 = vld [vmem:[#allocation8] sm:$0xff]
        %v365 = vld [vmem:[#allocation8 + $0x8] sm:$0xff]
        %v366 = vld [vmem:[#allocation8 + $0x10] sm:$0xff]
        %v367 = vld [vmem:[#allocation8 + $0x18] sm:$0xff]
        %vm368 = vcmask 261120
        %v370 = vsel %vm368, %v362, 0
        %372 = vmatprep.subr.mxu0 0.0
        %373 = vmatpush1.msra.mxu0 %v364
        %374 = vmatprep.subr.mxu0 0.0
        %375 = vmatpush1.msra.mxu0 %v365
        %376 = vmatprep.subr.mxu0 0.0
        %377 = vmatpush1.msra.mxu0 %v366
        %378 = vmatprep.subr.mxu0 0.0
        %379 = vmatpush1.msra.mxu0 %v367
        %380 = vmatprep.subr.mxu0 0.0
        %381 = vmatpush1.msra.mxu0 0.0
        %382 = vmatprep.subr.mxu0 0.0
        %383 = vmatpush1.msra.mxu0 0.0
        %384 = vmatprep.subr.mxu0 0.0
        %385 = vmatpush1.msra.mxu0 0.0
        %386 = vmatprep.subr.mxu0 0.0
        %387 = vmatpush1.msra.mxu0 0.0
        %388 = vmatprep.subr.mxu0 0.0
        %389 = vmatpush1.msra.mxu0 0.0
        %390 = vmatprep.subr.mxu0 0.0
        %391 = vmatpush1.msra.mxu0 0.0
        %392 = vmatprep.subr.mxu0 0.0
        %393 = vmatpush1.msra.mxu0 0.0
        %394 = vmatprep.subr.mxu0 0.0
        %395 = vmatpush1.msra.mxu0 0.0
        %396 = vmatprep.subr.mxu0 0.0
        %397 = vmatpush1.msra.mxu0 0.0
        %398 = vmatprep.subr.mxu0 0.0
        %399 = vmatpush1.msra.mxu0 0.0
        %400 = vmatprep.subr.mxu0 0.0
        %401 = vmatpush1.msra.mxu0 0.0
        %402 = vmatprep.subr.mxu0 0.0
        %403 = vmatpush1.msra.mxu0 0.0
        %404 = vmatprep.subr.mxu0 0.0
        %405 = vmatpush1.msra.mxu0 0.0
        %406 = vmatprep.subr.mxu0 0.0
        %407 = vmatpush1.msra.mxu0 0.0
        %408 = vmatprep.subr.mxu0 0.0
        %409 = vmatpush1.msra.mxu0 0.0
        %410 = vmatprep.subr.mxu0 0.0
        %411 = vmatpush1.msra.mxu0 0.0
        %412 = vmatprep.subr.mxu0 0.0
        %413 = vmatpush1.msra.mxu0 0.0
        %414 = vmatprep.subr.mxu0 0.0
        %415 = vmatpush1.msra.mxu0 0.0
        %416 = vmatprep.subr.mxu0 0.0
        %417 = vmatpush1.msra.mxu0 0.0
        %418 = vmatprep.subr.mxu0 0.0
        %419 = vmatpush1.msra.mxu0 0.0
        %420 = vmatprep.subr.mxu0 0.0
        %421 = vmatpush1.msra.mxu0 0.0
        %422 = vmatprep.subr.mxu0 0.0
        %423 = vmatpush1.msra.mxu0 0.0
        %424 = vmatprep.subr.mxu0 0.0
        %425 = vmatpush1.msra.mxu0 0.0
        %426 = vmatprep.subr.mxu0 0.0
        %427 = vmatpush1.msra.mxu0 0.0
        %428 = vmatprep.subr.mxu0 0.0
        %429 = vmatpush1.msra.mxu0 0.0
        %430 = vmatprep.subr.mxu0 0.0
        %431 = vmatpush1.msra.mxu0 0.0
        %432 = vmatprep.subr.mxu0 0.0
        %433 = vmatpush1.msra.mxu0 0.0
        %434 = vmatprep.subr.mxu0 0.0
        %435 = vmatpush1.msra.mxu0 0.0
        %436 = vmatprep.mubr.f32.mxu0 0.0
        %437 = vmatmul.mubr.f32.gmra.mrb[0].mxu0 %v370
        %v438 = vpop.f32.mrb[0].mxu0
        %v439 = vadd.f32 0.0, %v438
        %v440 = vpop.f32.mrb[0].mxu0
        %441 = vdwg.mxu0
        %v442 = vlaneseq
        %v443 = vshrl.u32 %v442, 7
        %v444 = vsub.s32 0, %v443
        %v445 = vrot.slane %v363, %v444
        %v446 = vadd.f32 %v439, %v445
        %v447 = vmul.f32 %v446, 0.35355338
        %v448 = vlaneseq
        %v449 = vshrl.u32 %v448, 7
        %v450 = vsub.s32 1, %v449
        %v451 = vrot.slane %v363, %v450
        %453 = vrot.lane.b32.xlu0 %v451, 32
        %v454 = vpop.permute.xlu0 %453
        %v456 = vadd.f32 %v439, %v454
        %v457 = vld [vmem:[#allocation9] sm:$0xff]
        %v458 = vld [vmem:[#allocation9 + $0x8] sm:$0xff]
        %v459 = vld [vmem:[#allocation9 + $0x10] sm:$0xff]
        %v460 = vld [vmem:[#allocation9 + $0x18] sm:$0xff]
        %v461 = vlaneseq
        %v462 = vshrl.u32 %v461, 7
        %v463 = vsub.s32 2, %v462
        %v464 = vrot.slane %v363, %v463
        %v466 = vsel %vm368, %v360, 0
        %468 = vmatprep.subr.mxu0 0.0
        %469 = vmatpush1.msra.mxu0 %v457
        %470 = vmatprep.subr.mxu0 0.0
        %471 = vmatpush1.msra.mxu0 %v458
        %472 = vmatprep.subr.mxu0 0.0
        %473 = vmatpush1.msra.mxu0 %v459
        %474 = vmatprep.subr.mxu0 0.0
        %475 = vmatpush1.msra.mxu0 %v460
        %476 = vmatprep.subr.mxu0 0.0
        %477 = vmatpush1.msra.mxu0 0.0
        %478 = vmatprep.subr.mxu0 0.0
        %479 = vmatpush1.msra.mxu0 0.0
        %480 = vmatprep.subr.mxu0 0.0
        %481 = vmatpush1.msra.mxu0 0.0
        %482 = vmatprep.subr.mxu0 0.0
        %483 = vmatpush1.msra.mxu0 0.0
        %484 = vmatprep.subr.mxu0 0.0
        %485 = vmatpush1.msra.mxu0 0.0
        %486 = vmatprep.subr.mxu0 0.0
        %487 = vmatpush1.msra.mxu0 0.0
        %488 = vmatprep.subr.mxu0 0.0
        %489 = vmatpush1.msra.mxu0 0.0
        %490 = vmatprep.subr.mxu0 0.0
        %491 = vmatpush1.msra.mxu0 0.0
        %492 = vmatprep.subr.mxu0 0.0
        %493 = vmatpush1.msra.mxu0 0.0
        %494 = vmatprep.subr.mxu0 0.0
        %495 = vmatpush1.msra.mxu0 0.0
        %496 = vmatprep.subr.mxu0 0.0
        %497 = vmatpush1.msra.mxu0 0.0
        %498 = vmatprep.subr.mxu0 0.0
        %499 = vmatpush1.msra.mxu0 0.0
        %500 = vmatprep.subr.mxu0 0.0
        %501 = vmatpush1.msra.mxu0 0.0
        %502 = vmatprep.subr.mxu0 0.0
        %503 = vmatpush1.msra.mxu0 0.0
        %504 = vmatprep.subr.mxu0 0.0
        %505 = vmatpush1.msra.mxu0 0.0
        %506 = vmatprep.subr.mxu0 0.0
        %507 = vmatpush1.msra.mxu0 0.0
        %508 = vmatprep.subr.mxu0 0.0
        %509 = vmatpush1.msra.mxu0 0.0
        %510 = vmatprep.subr.mxu0 0.0
        %511 = vmatpush1.msra.mxu0 0.0
        %512 = vmatprep.subr.mxu0 0.0
        %513 = vmatpush1.msra.mxu0 0.0
        %514 = vmatprep.subr.mxu0 0.0
        %515 = vmatpush1.msra.mxu0 0.0
        %516 = vmatprep.subr.mxu0 0.0
        %517 = vmatpush1.msra.mxu0 0.0
        %518 = vmatprep.subr.mxu0 0.0
        %519 = vmatpush1.msra.mxu0 0.0
        %520 = vmatprep.subr.mxu0 0.0
        %521 = vmatpush1.msra.mxu0 0.0
        %522 = vmatprep.subr.mxu0 0.0
        %523 = vmatpush1.msra.mxu0 0.0
        %524 = vmatprep.subr.mxu0 0.0
        %525 = vmatpush1.msra.mxu0 0.0
        %526 = vmatprep.subr.mxu0 0.0
        %527 = vmatpush1.msra.mxu0 0.0
        %528 = vmatprep.subr.mxu0 0.0
        %529 = vmatpush1.msra.mxu0 0.0
        %530 = vmatprep.subr.mxu0 0.0
        %531 = vmatpush1.msra.mxu0 0.0
        %532 = vmatprep.mubr.f32.mxu0 0.0
        %533 = vmatmul.mubr.f32.gmra.mrb[0].mxu0 %v466
        %v534 = vpop.f32.mrb[0].mxu0
        %v535 = vadd.f32 %v464, %v534
        %v536 = vpop.f32.mrb[0].mxu0
        %537 = vdwg.mxu0
        %v538 = vld [vmem:[#allocation11] sm:$0xff]
        %v539 = vld [vmem:[#allocation11 + $0x8] sm:$0xff]
        %v540 = vld [vmem:[#allocation11 + $0x10] sm:$0xff]
        %v541 = vld [vmem:[#allocation11 + $0x18] sm:$0xff]
        %543 = vrot.lane.b32.xlu0 %v456, 96
        %v544 = vpop.permute.xlu0 %543
        %vm545 = vcmask 64512
        %v547 = vsel %vm545, %v447, 0
        %v549 = vsel %vm545, %v544, 0
        %551 = vmatprep.subr.mxu0 0.0
        %552 = vmatpush1.xpose.msra.mxu0 %v549
        %553 = vmatprep.subr.mxu0 0.0
        %554 = vmatpush1.xpose.msra.mxu0 0.0
        %555 = vmatprep.subr.mxu0 0.0
        %556 = vmatpush1.xpose.msra.mxu0 0.0
        %557 = vmatprep.subr.mxu0 0.0
        %558 = vmatpush1.xpose.msra.mxu0 0.0
        %559 = vmatprep.subr.mxu0 0.0
        %560 = vmatpush1.xpose.msra.mxu0 0.0
        %561 = vmatprep.subr.mxu0 0.0
        %562 = vmatpush1.xpose.msra.mxu0 0.0
        %563 = vmatprep.subr.mxu0 0.0
        %564 = vmatpush1.xpose.msra.mxu0 0.0
        %565 = vmatprep.subr.mxu0 0.0
        %566 = vmatpush1.xpose.msra.mxu0 0.0
        %567 = vmatprep.subr.mxu0 0.0
        %568 = vmatpush1.xpose.msra.mxu0 0.0
        %569 = vmatprep.subr.mxu0 0.0
        %570 = vmatpush1.xpose.msra.mxu0 0.0
        %571 = vmatprep.subr.mxu0 0.0
        %572 = vmatpush1.xpose.msra.mxu0 0.0
        %573 = vmatprep.subr.mxu0 0.0
        %574 = vmatpush1.xpose.msra.mxu0 0.0
        %575 = vmatprep.subr.mxu0 0.0
        %576 = vmatpush1.xpose.msra.mxu0 0.0
        %577 = vmatprep.subr.mxu0 0.0
        %578 = vmatpush1.xpose.msra.mxu0 0.0
        %579 = vmatprep.subr.mxu0 0.0
        %580 = vmatpush1.xpose.msra.mxu0 0.0
        %581 = vmatprep.subr.mxu0 0.0
        %582 = vmatpush1.xpose.msra.mxu0 0.0
        %583 = vmatprep.subr.mxu0 0.0
        %584 = vmatpush1.xpose.msra.mxu0 0.0
        %585 = vmatprep.subr.mxu0 0.0
        %586 = vmatpush1.xpose.msra.mxu0 0.0
        %587 = vmatprep.subr.mxu0 0.0
        %588 = vmatpush1.xpose.msra.mxu0 0.0
        %589 = vmatprep.subr.mxu0 0.0
        %590 = vmatpush1.xpose.msra.mxu0 0.0
        %591 = vmatprep.subr.mxu0 0.0
        %592 = vmatpush1.xpose.msra.mxu0 0.0
        %593 = vmatprep.subr.mxu0 0.0
        %594 = vmatpush1.xpose.msra.mxu0 0.0
        %595 = vmatprep.subr.mxu0 0.0
        %596 = vmatpush1.xpose.msra.mxu0 0.0
        %597 = vmatprep.subr.mxu0 0.0
        %598 = vmatpush1.xpose.msra.mxu0 0.0
        %599 = vmatprep.subr.mxu0 0.0
        %600 = vmatpush1.xpose.msra.mxu0 0.0
        %601 = vmatprep.subr.mxu0 0.0
        %602 = vmatpush1.xpose.msra.mxu0 0.0
        %603 = vmatprep.subr.mxu0 0.0
        %604 = vmatpush1.xpose.msra.mxu0 0.0
        %605 = vmatprep.subr.mxu0 0.0
        %606 = vmatpush1.xpose.msra.mxu0 0.0
        %607 = vmatprep.subr.mxu0 0.0
        %608 = vmatpush1.xpose.msra.mxu0 0.0
        %609 = vmatprep.subr.mxu0 0.0
        %610 = vmatpush1.xpose.msra.mxu0 0.0
        %611 = vmatprep.subr.mxu0 0.0
        %612 = vmatpush1.xpose.msra.mxu0 0.0
        %613 = vmatprep.subr.mxu0 0.0
        %614 = vmatpush1.xpose.msra.mxu0 0.0
        %615 = vmatprep.mubr.f32.mxu0 0.0
        %616 = vmatmul.mubr.f32.gmra.mrb[0].mxu0 %v547
        %v617 = vpop.f32.mrb[0].mxu0
        %v618 = vadd.f32 0.0, %v617
        %v619 = vpop.f32.mrb[0].mxu0
        %620 = vdwg.mxu0
        %v621 = vsel %vm545, %v618, -inf
        %622 = vmax.xlane.f32.xlu0 %v621
        %v623 = vpop.xlane.xlu0 %622
        %v624 = vsub.f32 %v618, %v623
        %v625 = vmul.f32 %v624, 1.442695
        %v626 = vpow.pop %v625
        %v627 = vsel %vm545, %v626, 0.0
        %628 = vadd.xlane.f32.xlu0 %v627
        %v629 = vpop.xlane.xlu0 %628
        %v630 = vrcp.pop %v629
        %v631 = vmul.f32 %v626, %v630
        %v633 = vsel %vm545, %v631, 0
        %635 = vmatprep.subr.mxu0 0.0
        %636 = vmatpush1.msra.mxu0 %v535
        %637 = vmatprep.subr.mxu0 0.0
        %638 = vmatpush1.msra.mxu0 0.0
        %639 = vmatprep.subr.mxu0 0.0
        %640 = vmatpush1.msra.mxu0 0.0
        %641 = vmatprep.subr.mxu0 0.0
        %642 = vmatpush1.msra.mxu0 0.0
        %643 = vmatprep.subr.mxu0 0.0
        %644 = vmatpush1.msra.mxu0 0.0
        %645 = vmatprep.subr.mxu0 0.0
        %646 = vmatpush1.msra.mxu0 0.0
        %647 = vmatprep.subr.mxu0 0.0
        %648 = vmatpush1.msra.mxu0 0.0
        %649 = vmatprep.subr.mxu0 0.0
        %650 = vmatpush1.msra.mxu0 0.0
        %651 = vmatprep.subr.mxu0 0.0
        %652 = vmatpush1.msra.mxu0 0.0
        %653 = vmatprep.subr.mxu0 0.0
        %654 = vmatpush1.msra.mxu0 0.0
        %655 = vmatprep.subr.mxu0 0.0
        %656 = vmatpush1.msra.mxu0 0.0
        %657 = vmatprep.subr.mxu0 0.0
        %658 = vmatpush1.msra.mxu0 0.0
        %659 = vmatprep.subr.mxu0 0.0
        %660 = vmatpush1.msra.mxu0 0.0
        %661 = vmatprep.subr.mxu0 0.0
        %662 = vmatpush1.msra.mxu0 0.0
        %663 = vmatprep.subr.mxu0 0.0
        %664 = vmatpush1.msra.mxu0 0.0
        %665 = vmatprep.subr.mxu0 0.0
        %666 = vmatpush1.msra.mxu0 0.0
        %667 = vmatprep.subr.mxu0 0.0
        %668 = vmatpush1.msra.mxu0 0.0
        %669 = vmatprep.subr.mxu0 0.0
        %670 = vmatpush1.msra.mxu0 0.0
        %671 = vmatprep.subr.mxu0 0.0
        %672 = vmatpush1.msra.mxu0 0.0
        %673 = vmatprep.subr.mxu0 0.0
        %674 = vmatpush1.msra.mxu0 0.0
        %675 = vmatprep.subr.mxu0 0.0
        %676 = vmatpush1.msra.mxu0 0.0
        %677 = vmatprep.subr.mxu0 0.0
        %678 = vmatpush1.msra.mxu0 0.0
        %679 = vmatprep.subr.mxu0 0.0
        %680 = vmatpush1.msra.mxu0 0.0
        %681 = vmatprep.subr.mxu0 0.0
        %682 = vmatpush1.msra.mxu0 0.0
        %683 = vmatprep.subr.mxu0 0.0
        %684 = vmatpush1.msra.mxu0 0.0
        %685 = vmatprep.subr.mxu0 0.0
        %686 = vmatpush1.msra.mxu0 0.0
        %687 = vmatprep.subr.mxu0 0.0
        %688 = vmatpush1.msra.mxu0 0.0
        %689 = vmatprep.subr.mxu0 0.0
        %690 = vmatpush1.msra.mxu0 0.0
        %691 = vmatprep.subr.mxu0 0.0
        %692 = vmatpush1.msra.mxu0 0.0
        %693 = vmatprep.subr.mxu0 0.0
        %694 = vmatpush1.msra.mxu0 0.0
        %695 = vmatprep.subr.mxu0 0.0
        %696 = vmatpush1.msra.mxu0 0.0
        %697 = vmatprep.subr.mxu0 0.0
        %698 = vmatpush1.msra.mxu0 0.0
        %699 = vmatprep.mubr.f32.mxu0 0.0
        %700 = vmatmul.mubr.f32.gmra.mrb[0].mxu0 %v633
        %v701 = vpop.f32.mrb[0].mxu0
        %v702 = vadd.f32 0.0, %v701
        %v703 = vpop.f32.mrb[0].mxu0
        %704 = vdwg.mxu0
        %705 = vst.msk [vmem:[#allocation2] sm:$0xff] %vm545, %v702
        %706 = vrot.lane.b32.xlu0 %v447, 120
        %v707 = vpop.permute.xlu0 %706
        %708 = vrot.lane.b32.xlu0 %v456, 88
        %v709 = vpop.permute.xlu0 %708
        %v710 = vsel %vm545, %v707, 0
        %v712 = vsel %vm545, %v709, 0
        %714 = vmatprep.subr.mxu0 0.0
        %715 = vmatpush1.xpose.msra.mxu0 %v712
        %716 = vmatprep.subr.mxu0 0.0
        %717 = vmatpush1.xpose.msra.mxu0 0.0
        %718 = vmatprep.subr.mxu0 0.0
        %719 = vmatpush1.xpose.msra.mxu0 0.0
        %720 = vmatprep.subr.mxu0 0.0
        %721 = vmatpush1.xpose.msra.mxu0 0.0
        %722 = vmatprep.subr.mxu0 0.0
        %723 = vmatpush1.xpose.msra.mxu0 0.0
        %724 = vmatprep.subr.mxu0 0.0
        %725 = vmatpush1.xpose.msra.mxu0 0.0
        %726 = vmatprep.subr.mxu0 0.0
        %727 = vmatpush1.xpose.msra.mxu0 0.0
        %728 = vmatprep.subr.mxu0 0.0
        %729 = vmatpush1.xpose.msra.mxu0 0.0
        %730 = vmatprep.subr.mxu0 0.0
        %731 = vmatpush1.xpose.msra.mxu0 0.0
        %732 = vmatprep.subr.mxu0 0.0
        %733 = vmatpush1.xpose.msra.mxu0 0.0
        %734 = vmatprep.subr.mxu0 0.0
        %735 = vmatpush1.xpose.msra.mxu0 0.0
        %736 = vmatprep.subr.mxu0 0.0
        %737 = vmatpush1.xpose.msra.mxu0 0.0
        %738 = vmatprep.subr.mxu0 0.0
        %739 = vmatpush1.xpose.msra.mxu0 0.0
        %740 = vmatprep.subr.mxu0 0.0
        %741 = vmatpush1.xpose.msra.mxu0 0.0
        %742 = vmatprep.subr.mxu0 0.0
        %743 = vmatpush1.xpose.msra.mxu0 0.0
        %744 = vmatprep.subr.mxu0 0.0
        %745 = vmatpush1.xpose.msra.mxu0 0.0
        %746 = vmatprep.subr.mxu0 0.0
        %747 = vmatpush1.xpose.msra.mxu0 0.0
        %748 = vmatprep.subr.mxu0 0.0
        %749 = vmatpush1.xpose.msra.mxu0 0.0
        %750 = vmatprep.subr.mxu0 0.0
        %751 = vmatpush1.xpose.msra.mxu0 0.0
        %752 = vmatprep.subr.mxu0 0.0
        %753 = vmatpush1.xpose.msra.mxu0 0.0
        %754 = vmatprep.subr.mxu0 0.0
        %755 = vmatpush1.xpose.msra.mxu0 0.0
        %756 = vmatprep.subr.mxu0 0.0
        %757 = vmatpush1.xpose.msra.mxu0 0.0
        %758 = vmatprep.subr.mxu0 0.0
        %759 = vmatpush1.xpose.msra.mxu0 0.0
        %760 = vmatprep.subr.mxu0 0.0
        %761 = vmatpush1.xpose.msra.mxu0 0.0
        %762 = vmatprep.subr.mxu0 0.0
        %763 = vmatpush1.xpose.msra.mxu0 0.0
        %764 = vmatprep.subr.mxu0 0.0
        %765 = vmatpush1.xpose.msra.mxu0 0.0
        %766 = vmatprep.subr.mxu0 0.0
        %767 = vmatpush1.xpose.msra.mxu0 0.0
        %768 = vmatprep.subr.mxu0 0.0
        %769 = vmatpush1.xpose.msra.mxu0 0.0
        %770 = vmatprep.subr.mxu0 0.0
        %771 = vmatpush1.xpose.msra.mxu0 0.0
        %772 = vmatprep.subr.mxu0 0.0
        %773 = vmatpush1.xpose.msra.mxu0 0.0
        %774 = vmatprep.subr.mxu0 0.0
        %775 = vmatpush1.xpose.msra.mxu0 0.0
        %776 = vmatprep.subr.mxu0 0.0
        %777 = vmatpush1.xpose.msra.mxu0 0.0
        %778 = vmatprep.mubr.f32.mxu0 0.0
        %779 = vmatmul.mubr.f32.gmra.mrb[0].mxu0 %v710
        %v780 = vpop.f32.mrb[0].mxu0
        %v781 = vadd.f32 0.0, %v780
        %v782 = vpop.f32.mrb[0].mxu0
        %783 = vdwg.mxu0
        %v784 = vsel %vm545, %v781, -inf
        %785 = vmax.xlane.f32.xlu0 %v784
        %v786 = vpop.xlane.xlu0 %785
        %v787 = vsub.f32 %v781, %v786
        %v788 = vmul.f32 %v787, 1.442695
        %v789 = vpow.pop %v788
        %v790 = vsel %vm545, %v789, 0.0
        %791 = vadd.xlane.f32.xlu0 %v790
        %v792 = vpop.xlane.xlu0 %791
        %v793 = vrcp.pop %v792
        %v794 = vmul.f32 %v789, %v793
        %796 = vrot.lane.b32.xlu0 %v535, 120
        %v797 = vpop.permute.xlu0 %796
        %v800 = vsel %vm545, %v794, 0
        %802 = vmatprep.subr.mxu0 0.0
        %803 = vmatpush1.msra.mxu0 %v797
        %804 = vmatprep.subr.mxu0 0.0
        %805 = vmatpush1.msra.mxu0 0.0
        %806 = vmatprep.subr.mxu0 0.0
        %807 = vmatpush1.msra.mxu0 0.0
        %808 = vmatprep.subr.mxu0 0.0
        %809 = vmatpush1.msra.mxu0 0.0
        %810 = vmatprep.subr.mxu0 0.0
        %811 = vmatpush1.msra.mxu0 0.0
        %812 = vmatprep.subr.mxu0 0.0
        %813 = vmatpush1.msra.mxu0 0.0
        %814 = vmatprep.subr.mxu0 0.0
        %815 = vmatpush1.msra.mxu0 0.0
        %816 = vmatprep.subr.mxu0 0.0
        %817 = vmatpush1.msra.mxu0 0.0
        %818 = vmatprep.subr.mxu0 0.0
        %819 = vmatpush1.msra.mxu0 0.0
        %820 = vmatprep.subr.mxu0 0.0
        %821 = vmatpush1.msra.mxu0 0.0
        %822 = vmatprep.subr.mxu0 0.0
        %823 = vmatpush1.msra.mxu0 0.0
        %824 = vmatprep.subr.mxu0 0.0
        %825 = vmatpush1.msra.mxu0 0.0
        %826 = vmatprep.subr.mxu0 0.0
        %827 = vmatpush1.msra.mxu0 0.0
        %828 = vmatprep.subr.mxu0 0.0
        %829 = vmatpush1.msra.mxu0 0.0
        %830 = vmatprep.subr.mxu0 0.0
        %831 = vmatpush1.msra.mxu0 0.0
        %832 = vmatprep.subr.mxu0 0.0
        %833 = vmatpush1.msra.mxu0 0.0
        %834 = vmatprep.subr.mxu0 0.0
        %835 = vmatpush1.msra.mxu0 0.0
        %836 = vmatprep.subr.mxu0 0.0
        %837 = vmatpush1.msra.mxu0 0.0
        %838 = vmatprep.subr.mxu0 0.0
        %839 = vmatpush1.msra.mxu0 0.0
        %840 = vmatprep.subr.mxu0 0.0
        %841 = vmatpush1.msra.mxu0 0.0
        %842 = vmatprep.subr.mxu0 0.0
        %843 = vmatpush1.msra.mxu0 0.0
        %844 = vmatprep.subr.mxu0 0.0
        %845 = vmatpush1.msra.mxu0 0.0
        %846 = vmatprep.subr.mxu0 0.0
        %847 = vmatpush1.msra.mxu0 0.0
        %848 = vmatprep.subr.mxu0 0.0
        %849 = vmatpush1.msra.mxu0 0.0
        %850 = vmatprep.subr.mxu0 0.0
        %851 = vmatpush1.msra.mxu0 0.0
        %852 = vmatprep.subr.mxu0 0.0
        %853 = vmatpush1.msra.mxu0 0.0
        %854 = vmatprep.subr.mxu0 0.0
        %855 = vmatpush1.msra.mxu0 0.0
        %856 = vmatprep.subr.mxu0 0.0
        %857 = vmatpush1.msra.mxu0 0.0
        %858 = vmatprep.subr.mxu0 0.0
        %859 = vmatpush1.msra.mxu0 0.0
        %860 = vmatprep.subr.mxu0 0.0
        %861 = vmatpush1.msra.mxu0 0.0
        %862 = vmatprep.subr.mxu0 0.0
        %863 = vmatpush1.msra.mxu0 0.0
        %864 = vmatprep.subr.mxu0 0.0
        %865 = vmatpush1.msra.mxu0 0.0
        %866 = vmatprep.mubr.f32.mxu0 0.0
        %867 = vmatmul.mubr.f32.gmra.mrb[0].mxu0 %v800
        %v868 = vpop.f32.mrb[0].mxu0
        %v869 = vadd.f32 0.0, %v868
        %v870 = vpop.f32.mrb[0].mxu0
        %871 = vdwg.mxu0
        %873 = vrot.lane.b32.xlu0 %v869, 8
        %v874 = vpop.permute.xlu0 %873
        %vm876 = vcmask 130112
        %877 = vst.msk [vmem:[#allocation2] sm:$0xff] %vm876, %v874
        %878 = vrot.lane.b32.xlu0 %v447, 112
        %v879 = vpop.permute.xlu0 %878
        %880 = vrot.lane.b32.xlu0 %v456, 80
        %v881 = vpop.permute.xlu0 %880
        %v882 = vsel %vm545, %v879, 0
        %v884 = vsel %vm545, %v881, 0
        %886 = vmatprep.subr.mxu0 0.0
        %887 = vmatpush1.xpose.msra.mxu0 %v884
        %888 = vmatprep.subr.mxu0 0.0
        %889 = vmatpush1.xpose.msra.mxu0 0.0
        %890 = vmatprep.subr.mxu0 0.0
        %891 = vmatpush1.xpose.msra.mxu0 0.0
        %892 = vmatprep.subr.mxu0 0.0
        %893 = vmatpush1.xpose.msra.mxu0 0.0
        %894 = vmatprep.subr.mxu0 0.0
        %895 = vmatpush1.xpose.msra.mxu0 0.0
        %896 = vmatprep.subr.mxu0 0.0
        %897 = vmatpush1.xpose.msra.mxu0 0.0
        %898 = vmatprep.subr.mxu0 0.0
        %899 = vmatpush1.xpose.msra.mxu0 0.0
        %900 = vmatprep.subr.mxu0 0.0
        %901 = vmatpush1.xpose.msra.mxu0 0.0
        %902 = vmatprep.subr.mxu0 0.0
        %903 = vmatpush1.xpose.msra.mxu0 0.0
        %904 = vmatprep.subr.mxu0 0.0
        %905 = vmatpush1.xpose.msra.mxu0 0.0
        %906 = vmatprep.subr.mxu0 0.0
        %907 = vmatpush1.xpose.msra.mxu0 0.0
        %908 = vmatprep.subr.mxu0 0.0
        %909 = vmatpush1.xpose.msra.mxu0 0.0
        %910 = vmatprep.subr.mxu0 0.0
        %911 = vmatpush1.xpose.msra.mxu0 0.0
        %912 = vmatprep.subr.mxu0 0.0
        %913 = vmatpush1.xpose.msra.mxu0 0.0
        %914 = vmatprep.subr.mxu0 0.0
        %915 = vmatpush1.xpose.msra.mxu0 0.0
        %916 = vmatprep.subr.mxu0 0.0
        %917 = vmatpush1.xpose.msra.mxu0 0.0
        %918 = vmatprep.subr.mxu0 0.0
        %919 = vmatpush1.xpose.msra.mxu0 0.0
        %920 = vmatprep.subr.mxu0 0.0
        %921 = vmatpush1.xpose.msra.mxu0 0.0
        %922 = vmatprep.subr.mxu0 0.0
        %923 = vmatpush1.xpose.msra.mxu0 0.0
        %924 = vmatprep.subr.mxu0 0.0
        %925 = vmatpush1.xpose.msra.mxu0 0.0
        %926 = vmatprep.subr.mxu0 0.0
        %927 = vmatpush1.xpose.msra.mxu0 0.0
        %928 = vmatprep.subr.mxu0 0.0
        %929 = vmatpush1.xpose.msra.mxu0 0.0
        %930 = vmatprep.subr.mxu0 0.0
        %931 = vmatpush1.xpose.msra.mxu0 0.0
        %932 = vmatprep.subr.mxu0 0.0
        %933 = vmatpush1.xpose.msra.mxu0 0.0
        %934 = vmatprep.subr.mxu0 0.0
        %935 = vmatpush1.xpose.msra.mxu0 0.0
        %936 = vmatprep.subr.mxu0 0.0
        %937 = vmatpush1.xpose.msra.mxu0 0.0
        %938 = vmatprep.subr.mxu0 0.0
        %939 = vmatpush1.xpose.msra.mxu0 0.0
        %940 = vmatprep.subr.mxu0 0.0
        %941 = vmatpush1.xpose.msra.mxu0 0.0
        %942 = vmatprep.subr.mxu0 0.0
        %943 = vmatpush1.xpose.msra.mxu0 0.0
        %944 = vmatprep.subr.mxu0 0.0
        %945 = vmatpush1.xpose.msra.mxu0 0.0
        %946 = vmatprep.subr.mxu0 0.0
        %947 = vmatpush1.xpose.msra.mxu0 0.0
        %948 = vmatprep.subr.mxu0 0.0
        %949 = vmatpush1.xpose.msra.mxu0 0.0
        %950 = vmatprep.mubr.f32.mxu0 0.0
        %951 = vmatmul.mubr.f32.gmra.mrb[0].mxu0 %v882
        %v952 = vpop.f32.mrb[0].mxu0
        %v953 = vadd.f32 0.0, %v952
        %v954 = vpop.f32.mrb[0].mxu0
        %955 = vdwg.mxu0
        %v956 = vsel %vm545, %v953, -inf
        %957 = vmax.xlane.f32.xlu0 %v956
        %v958 = vpop.xlane.xlu0 %957
        %v959 = vsub.f32 %v953, %v958
        %v960 = vmul.f32 %v959, 1.442695
        %v961 = vpow.pop %v960
        %v962 = vsel %vm545, %v961, 0.0
        %963 = vadd.xlane.f32.xlu0 %v962
        %v964 = vpop.xlane.xlu0 %963
        %v965 = vrcp.pop %v964
        %v966 = vmul.f32 %v961, %v965
        %967 = vrot.lane.b32.xlu0 %v535, 112
        %v968 = vpop.permute.xlu0 %967
        %v971 = vsel %vm545, %v966, 0
        %973 = vmatprep.subr.mxu0 0.0
        %974 = vmatpush1.msra.mxu0 %v968
        %975 = vmatprep.subr.mxu0 0.0
        %976 = vmatpush1.msra.mxu0 0.0
        %977 = vmatprep.subr.mxu0 0.0
        %978 = vmatpush1.msra.mxu0 0.0
        %979 = vmatprep.subr.mxu0 0.0
        %980 = vmatpush1.msra.mxu0 0.0
        %981 = vmatprep.subr.mxu0 0.0
        %982 = vmatpush1.msra.mxu0 0.0
        %983 = vmatprep.subr.mxu0 0.0
        %984 = vmatpush1.msra.mxu0 0.0
        %985 = vmatprep.subr.mxu0 0.0
        %986 = vmatpush1.msra.mxu0 0.0
        %987 = vmatprep.subr.mxu0 0.0
        %988 = vmatpush1.msra.mxu0 0.0
        %989 = vmatprep.subr.mxu0 0.0
        %990 = vmatpush1.msra.mxu0 0.0
        %991 = vmatprep.subr.mxu0 0.0
        %992 = vmatpush1.msra.mxu0 0.0
        %993 = vmatprep.subr.mxu0 0.0
        %994 = vmatpush1.msra.mxu0 0.0
        %995 = vmatprep.subr.mxu0 0.0
        %996 = vmatpush1.msra.mxu0 0.0
        %997 = vmatprep.subr.mxu0 0.0
        %998 = vmatpush1.msra.mxu0 0.0
        %999 = vmatprep.subr.mxu0 0.0
        %1000 = vmatpush1.msra.mxu0 0.0
        %1001 = vmatprep.subr.mxu0 0.0
        %1002 = vmatpush1.msra.mxu0 0.0
        %1003 = vmatprep.subr.mxu0 0.0
        %1004 = vmatpush1.msra.mxu0 0.0
        %1005 = vmatprep.subr.mxu0 0.0
        %1006 = vmatpush1.msra.mxu0 0.0
        %1007 = vmatprep.subr.mxu0 0.0
        %1008 = vmatpush1.msra.mxu0 0.0
        %1009 = vmatprep.subr.mxu0 0.0
        %1010 = vmatpush1.msra.mxu0 0.0
        %1011 = vmatprep.subr.mxu0 0.0
        %1012 = vmatpush1.msra.mxu0 0.0
        %1013 = vmatprep.subr.mxu0 0.0
        %1014 = vmatpush1.msra.mxu0 0.0
        %1015 = vmatprep.subr.mxu0 0.0
        %1016 = vmatpush1.msra.mxu0 0.0
        %1017 = vmatprep.subr.mxu0 0.0
        %1018 = vmatpush1.msra.mxu0 0.0
        %1019 = vmatprep.subr.mxu0 0.0
        %1020 = vmatpush1.msra.mxu0 0.0
        %1021 = vmatprep.subr.mxu0 0.0
        %1022 = vmatpush1.msra.mxu0 0.0
        %1023 = vmatprep.subr.mxu0 0.0
        %1024 = vmatpush1.msra.mxu0 0.0
        %1025 = vmatprep.subr.mxu0 0.0
        %1026 = vmatpush1.msra.mxu0 0.0
        %1027 = vmatprep.subr.mxu0 0.0
        %1028 = vmatpush1.msra.mxu0 0.0
        %1029 = vmatprep.subr.mxu0 0.0
        %1030 = vmatpush1.msra.mxu0 0.0
        %1031 = vmatprep.subr.mxu0 0.0
        %1032 = vmatpush1.msra.mxu0 0.0
        %1033 = vmatprep.subr.mxu0 0.0
        %1034 = vmatpush1.msra.mxu0 0.0
        %1035 = vmatprep.subr.mxu0 0.0
        %1036 = vmatpush1.msra.mxu0 0.0
        %1037 = vmatprep.mubr.f32.mxu0 0.0
        %1038 = vmatmul.mubr.f32.gmra.mrb[0].mxu0 %v971
        %v1039 = vpop.f32.mrb[0].mxu0
        %v1040 = vadd.f32 0.0, %v1039
        %v1041 = vpop.f32.mrb[0].mxu0
        %1042 = vdwg.mxu0
        %1044 = vrot.lane.b32.xlu0 %v1040, 16
        %v1045 = vpop.permute.xlu0 %1044
        %vm1047 = vcmask 195712
        %1048 = vst.msk [vmem:[#allocation2] sm:$0xff] %vm1047, %v1045
        %1049 = vrot.lane.b32.xlu0 %v447, 104
        %v1050 = vpop.permute.xlu0 %1049
        %1051 = vrot.lane.b32.xlu0 %v456, 72
        %v1052 = vpop.permute.xlu0 %1051
        %v1053 = vsel %vm545, %v1050, 0
        %v1055 = vsel %vm545, %v1052, 0
        %1057 = vmatprep.subr.mxu0 0.0
        %1058 = vmatpush1.xpose.msra.mxu0 %v1055
        %1059 = vmatprep.subr.mxu0 0.0
        %1060 = vmatpush1.xpose.msra.mxu0 0.0
        %1061 = vmatprep.subr.mxu0 0.0
        %1062 = vmatpush1.xpose.msra.mxu0 0.0
        %1063 = vmatprep.subr.mxu0 0.0
        %1064 = vmatpush1.xpose.msra.mxu0 0.0
        %1065 = vmatprep.subr.mxu0 0.0
        %1066 = vmatpush1.xpose.msra.mxu0 0.0
        %1067 = vmatprep.subr.mxu0 0.0
        %1068 = vmatpush1.xpose.msra.mxu0 0.0
        %1069 = vmatprep.subr.mxu0 0.0
        %1070 = vmatpush1.xpose.msra.mxu0 0.0
        %1071 = vmatprep.subr.mxu0 0.0
        %1072 = vmatpush1.xpose.msra.mxu0 0.0
        %1073 = vmatprep.subr.mxu0 0.0
        %1074 = vmatpush1.xpose.msra.mxu0 0.0
        %1075 = vmatprep.subr.mxu0 0.0
        %1076 = vmatpush1.xpose.msra.mxu0 0.0
        %1077 = vmatprep.subr.mxu0 0.0
        %1078 = vmatpush1.xpose.msra.mxu0 0.0
        %1079 = vmatprep.subr.mxu0 0.0
        %1080 = vmatpush1.xpose.msra.mxu0 0.0
        %1081 = vmatprep.subr.mxu0 0.0
        %1082 = vmatpush1.xpose.msra.mxu0 0.0
        %1083 = vmatprep.subr.mxu0 0.0
        %1084 = vmatpush1.xpose.msra.mxu0 0.0
        %1085 = vmatprep.subr.mxu0 0.0
        %1086 = vmatpush1.xpose.msra.mxu0 0.0
        %1087 = vmatprep.subr.mxu0 0.0
        %1088 = vmatpush1.xpose.msra.mxu0 0.0
        %1089 = vmatprep.subr.mxu0 0.0
        %1090 = vmatpush1.xpose.msra.mxu0 0.0
        %1091 = vmatprep.subr.mxu0 0.0
        %1092 = vmatpush1.xpose.msra.mxu0 0.0
        %1093 = vmatprep.subr.mxu0 0.0
        %1094 = vmatpush1.xpose.msra.mxu0 0.0
        %1095 = vmatprep.subr.mxu0 0.0
        %1096 = vmatpush1.xpose.msra.mxu0 0.0
        %1097 = vmatprep.subr.mxu0 0.0
        %1098 = vmatpush1.xpose.msra.mxu0 0.0
        %1099 = vmatprep.subr.mxu0 0.0
        %1100 = vmatpush1.xpose.msra.mxu0 0.0
        %1101 = vmatprep.subr.mxu0 0.0
        %1102 = vmatpush1.xpose.msra.mxu0 0.0
        %1103 = vmatprep.subr.mxu0 0.0
        %1104 = vmatpush1.xpose.msra.mxu0 0.0
        %1105 = vmatprep.subr.mxu0 0.0
        %1106 = vmatpush1.xpose.msra.mxu0 0.0
        %1107 = vmatprep.subr.mxu0 0.0
        %1108 = vmatpush1.xpose.msra.mxu0 0.0
        %1109 = vmatprep.subr.mxu0 0.0
        %1110 = vmatpush1.xpose.msra.mxu0 0.0
        %1111 = vmatprep.subr.mxu0 0.0
        %1112 = vmatpush1.xpose.msra.mxu0 0.0
        %1113 = vmatprep.subr.mxu0 0.0
        %1114 = vmatpush1.xpose.msra.mxu0 0.0
        %1115 = vmatprep.subr.mxu0 0.0
        %1116 = vmatpush1.xpose.msra.mxu0 0.0
        %1117 = vmatprep.subr.mxu0 0.0
        %1118 = vmatpush1.xpose.msra.mxu0 0.0
        %1119 = vmatprep.subr.mxu0 0.0
        %1120 = vmatpush1.xpose.msra.mxu0 0.0
        %1121 = vmatprep.mubr.f32.mxu0 0.0
        %1122 = vmatmul.mubr.f32.gmra.mrb[0].mxu0 %v1053
        %v1123 = vpop.f32.mrb[0].mxu0
        %v1124 = vadd.f32 0.0, %v1123
        %v1125 = vpop.f32.mrb[0].mxu0
        %1126 = vdwg.mxu0
        %v1127 = vsel %vm545, %v1124, -inf
        %1128 = vmax.xlane.f32.xlu0 %v1127
        %v1129 = vpop.xlane.xlu0 %1128
        %v1130 = vsub.f32 %v1124, %v1129
        %v1131 = vmul.f32 %v1130, 1.442695
        %v1132 = vpow.pop %v1131
        %v1133 = vsel %vm545, %v1132, 0.0
        %1134 = vadd.xlane.f32.xlu0 %v1133
        %v1135 = vpop.xlane.xlu0 %1134
        %v1136 = vrcp.pop %v1135
        %v1137 = vmul.f32 %v1132, %v1136
        %1138 = vrot.lane.b32.xlu0 %v535, 104
        %v1139 = vpop.permute.xlu0 %1138
        %v1142 = vsel %vm545, %v1137, 0
        %1144 = vmatprep.subr.mxu0 0.0
        %1145 = vmatpush1.msra.mxu0 %v1139
        %1146 = vmatprep.subr.mxu0 0.0
        %1147 = vmatpush1.msra.mxu0 0.0
        %1148 = vmatprep.subr.mxu0 0.0
        %1149 = vmatpush1.msra.mxu0 0.0
        %1150 = vmatprep.subr.mxu0 0.0
        %1151 = vmatpush1.msra.mxu0 0.0
        %1152 = vmatprep.subr.mxu0 0.0
        %1153 = vmatpush1.msra.mxu0 0.0
        %1154 = vmatprep.subr.mxu0 0.0
        %1155 = vmatpush1.msra.mxu0 0.0
        %1156 = vmatprep.subr.mxu0 0.0
        %1157 = vmatpush1.msra.mxu0 0.0
        %1158 = vmatprep.subr.mxu0 0.0
        %1159 = vmatpush1.msra.mxu0 0.0
        %1160 = vmatprep.subr.mxu0 0.0
        %1161 = vmatpush1.msra.mxu0 0.0
        %1162 = vmatprep.subr.mxu0 0.0
        %1163 = vmatpush1.msra.mxu0 0.0
        %1164 = vmatprep.subr.mxu0 0.0
        %1165 = vmatpush1.msra.mxu0 0.0
        %1166 = vmatprep.subr.mxu0 0.0
        %1167 = vmatpush1.msra.mxu0 0.0
        %1168 = vmatprep.subr.mxu0 0.0
        %1169 = vmatpush1.msra.mxu0 0.0
        %1170 = vmatprep.subr.mxu0 0.0
        %1171 = vmatpush1.msra.mxu0 0.0
        %1172 = vmatprep.subr.mxu0 0.0
        %1173 = vmatpush1.msra.mxu0 0.0
        %1174 = vmatprep.subr.mxu0 0.0
        %1175 = vmatpush1.msra.mxu0 0.0
        %1176 = vmatprep.subr.mxu0 0.0
        %1177 = vmatpush1.msra.mxu0 0.0
        %1178 = vmatprep.subr.mxu0 0.0
        %1179 = vmatpush1.msra.mxu0 0.0
        %1180 = vmatprep.subr.mxu0 0.0
        %1181 = vmatpush1.msra.mxu0 0.0
        %1182 = vmatprep.subr.mxu0 0.0
        %1183 = vmatpush1.msra.mxu0 0.0
        %1184 = vmatprep.subr.mxu0 0.0
        %1185 = vmatpush1.msra.mxu0 0.0
        %1186 = vmatprep.subr.mxu0 0.0
        %1187 = vmatpush1.msra.mxu0 0.0
        %1188 = vmatprep.subr.mxu0 0.0
        %1189 = vmatpush1.msra.mxu0 0.0
        %1190 = vmatprep.subr.mxu0 0.0
        %1191 = vmatpush1.msra.mxu0 0.0
        %1192 = vmatprep.subr.mxu0 0.0
        %1193 = vmatpush1.msra.mxu0 0.0
        %1194 = vmatprep.subr.mxu0 0.0
        %1195 = vmatpush1.msra.mxu0 0.0
        %1196 = vmatprep.subr.mxu0 0.0
        %1197 = vmatpush1.msra.mxu0 0.0
        %1198 = vmatprep.subr.mxu0 0.0
        %1199 = vmatpush1.msra.mxu0 0.0
        %1200 = vmatprep.subr.mxu0 0.0
        %1201 = vmatpush1.msra.mxu0 0.0
        %1202 = vmatprep.subr.mxu0 0.0
        %1203 = vmatpush1.msra.mxu0 0.0
        %1204 = vmatprep.subr.mxu0 0.0
        %1205 = vmatpush1.msra.mxu0 0.0
        %1206 = vmatprep.subr.mxu0 0.0
        %1207 = vmatpush1.msra.mxu0 0.0
        %1208 = vmatprep.mubr.f32.mxu0 0.0
        %1209 = vmatmul.mubr.f32.gmra.mrb[0].mxu0 %v1142
        %v1210 = vpop.f32.mrb[0].mxu0
        %v1211 = vadd.f32 0.0, %v1210
        %v1212 = vpop.f32.mrb[0].mxu0
        %1213 = vdwg.mxu0
        %1215 = vrot.lane.b32.xlu0 %v1211, 24
        %v1216 = vpop.permute.xlu0 %1215
        %vm1218 = vcmask 261312
        %1219 = vst.msk [vmem:[#allocation2] sm:$0xff] %vm1218, %v1216
        %v1220 = vld [vmem:[#allocation2] sm:$0xff]
        %v1221 = vlaneseq
        %v1222 = vshrl.u32 %v1221, 7
        %v1223 = vsub.s32 3, %v1222
        %v1224 = vrot.slane %v363, %v1223
        %v1226 = vsel %vm368, %v1220, 0
        %1228 = vmatprep.subr.mxu0 0.0
        %1229 = vmatpush1.msra.mxu0 %v538
        %1230 = vmatprep.subr.mxu0 0.0
        %1231 = vmatpush1.msra.mxu0 %v539
        %1232 = vmatprep.subr.mxu0 0.0
        %1233 = vmatpush1.msra.mxu0 %v540
        %1234 = vmatprep.subr.mxu0 0.0
        %1235 = vmatpush1.msra.mxu0 %v541
        %1236 = vmatprep.subr.mxu0 0.0
        %1237 = vmatpush1.msra.mxu0 0.0
        %1238 = vmatprep.subr.mxu0 0.0
        %1239 = vmatpush1.msra.mxu0 0.0
        %1240 = vmatprep.subr.mxu0 0.0
        %1241 = vmatpush1.msra.mxu0 0.0
        %1242 = vmatprep.subr.mxu0 0.0
        %1243 = vmatpush1.msra.mxu0 0.0
        %1244 = vmatprep.subr.mxu0 0.0
        %1245 = vmatpush1.msra.mxu0 0.0
        %1246 = vmatprep.subr.mxu0 0.0
        %1247 = vmatpush1.msra.mxu0 0.0
        %1248 = vmatprep.subr.mxu0 0.0
        %1249 = vmatpush1.msra.mxu0 0.0
        %1250 = vmatprep.subr.mxu0 0.0
        %1251 = vmatpush1.msra.mxu0 0.0
        %1252 = vmatprep.subr.mxu0 0.0
        %1253 = vmatpush1.msra.mxu0 0.0
        %1254 = vmatprep.subr.mxu0 0.0
        %1255 = vmatpush1.msra.mxu0 0.0
        %1256 = vmatprep.subr.mxu0 0.0
        %1257 = vmatpush1.msra.mxu0 0.0
        %1258 = vmatprep.subr.mxu0 0.0
        %1259 = vmatpush1.msra.mxu0 0.0
        %1260 = vmatprep.subr.mxu0 0.0
        %1261 = vmatpush1.msra.mxu0 0.0
        %1262 = vmatprep.subr.mxu0 0.0
        %1263 = vmatpush1.msra.mxu0 0.0
        %1264 = vmatprep.subr.mxu0 0.0
        %1265 = vmatpush1.msra.mxu0 0.0
        %1266 = vmatprep.subr.mxu0 0.0
        %1267 = vmatpush1.msra.mxu0 0.0
        %1268 = vmatprep.subr.mxu0 0.0
        %1269 = vmatpush1.msra.mxu0 0.0
        %1270 = vmatprep.subr.mxu0 0.0
        %1271 = vmatpush1.msra.mxu0 0.0
        %1272 = vmatprep.subr.mxu0 0.0
        %1273 = vmatpush1.msra.mxu0 0.0
        %1274 = vmatprep.subr.mxu0 0.0
        %1275 = vmatpush1.msra.mxu0 0.0
        %1276 = vmatprep.subr.mxu0 0.0
        %1277 = vmatpush1.msra.mxu0 0.0
        %1278 = vmatprep.subr.mxu0 0.0
        %1279 = vmatpush1.msra.mxu0 0.0
        %1280 = vmatprep.subr.mxu0 0.0
        %1281 = vmatpush1.msra.mxu0 0.0
        %1282 = vmatprep.subr.mxu0 0.0
        %1283 = vmatpush1.msra.mxu0 0.0
        %1284 = vmatprep.subr.mxu0 0.0
        %1285 = vmatpush1.msra.mxu0 0.0
        %1286 = vmatprep.subr.mxu0 0.0
        %1287 = vmatpush1.msra.mxu0 0.0
        %1288 = vmatprep.subr.mxu0 0.0
        %1289 = vmatpush1.msra.mxu0 0.0
        %1290 = vmatprep.subr.mxu0 0.0
        %1291 = vmatpush1.msra.mxu0 0.0
        %1292 = vmatprep.mubr.f32.mxu0 0.0
        %1293 = vmatmul.mubr.f32.gmra.mrb[0].mxu0 %v1226
        %v1294 = vpop.f32.mrb[0].mxu0
        %v1295 = vadd.f32 %v1224, %v1294
        %v1296 = vpop.f32.mrb[0].mxu0
        %1297 = vdwg.mxu0
        %v1298 = vadd.f32 %v360, %v1295
        %v1299 = vsel %vm368, %v1298, 0.0
        %1300 = vadd.xlane.f32.xlu0 %v1299
        %v1301 = vpop.xlane.xlu0 %1300
        %v1302 = vrcp.pop 32.0
        %v1303 = vmul.f32 %v1301, %v1302
        %v1304 = vmul.f32 %v1298, %v1298
        %v1305 = vsel %vm368, %v1304, 0.0
        %1306 = vadd.xlane.f32.xlu0 %v1305
        %v1307 = vpop.xlane.xlu0 %1306
        %v1308 = vmul.f32 %v1307, %v1302
        %v1309 = vmul.f32 %v1303, %v1303
        %v1310 = vsub.f32 %v1308, %v1309
        %v1311 = vsub.f32 %v1298, %v1303
        %v1312 = vadd.f32 %v1310, 1e-05
        %v1313 = vrsqrt.pop %v1312
        %v1314 = vmul.f32 %v1311, %v1313
        %v1315 = vlaneseq
        %v1316 = vshrl.u32 %v1315, 7
        %v1317 = vsub.s32 4, %v1316
        %v1318 = vrot.slane %v363, %v1317
        %v1319 = vmul.f32 %v1314, %v1318
        %v1320 = vlaneseq
        %v1321 = vshrl.u32 %v1320, 7
        %v1322 = vsub.s32 5, %v1321
        %v1323 = vrot.slane %v363, %v1322
        %v1324 = vadd.f32 %v1319, %v1323
        %1325 = vst.msk [vmem:[%s359] sm:$0xff] %vm368, %v1324
        %s1326 = sand.u32 %s172, 1
        %s1327 = scalar_lea.sflag [#allocation5], %s1326
        %s1328 = sand.u32 %s172, 1
        %s1329 = smul.addr %s1328, 8
        %s1330 = scalar_lea.vmem [#allocation14], %s1329
        // Predicated region
        $region69: #{transformer_decoder_layer.3} parent=43 // pred_check
          %p1331 = pneg %p182
        $region70: #{transformer_decoder_layer.3} parent=43 // pred_check_branch
          %1333 = sbr.rel (%p1331) target = $region72
        $region71: #{transformer_decoder_layer.3} parent=43 // pred_region
          %s1335 = ssub.s32 128, 128
          %1336 = vsyncadd %s1327, %s1335
          %s1337 = smul.addr %s28, 128
          %s1338 = scalar_lea.hbm %s6, %s1337
          %s1340 = sshll.u32 %s1330, 4
          %s1341 = int_to_ptr.vmem [resolvable:$true] %s1340
          %1343 = dma.vmem_to_hbm [thread:$0]  %s1341, 128, %s1338, %s1327
        $region72: #{transformer_decoder_layer.3} parent=43 // pred_fallthru
          _
      $region44: #{transformer_decoder_layer.3} parent=5 // pred_fallthru
        _
      %p1344 = scmp.le.s32.totalorder 2, %s23
      // Predicated region
      $region73: #{transformer_decoder_layer.3} parent=5 // pred_check
        %p1345 = pneg %p1344
      $region74: #{transformer_decoder_layer.3} parent=5 // pred_check_branch
        %1347 = sbr.rel (%p1345) target = $region76
      $region75: #{transformer_decoder_layer.3} parent=5 // pred_region
        %s1348 = ssub.s32 %s23, 2
        // Predicated region
        $region77: #{transformer_decoder_layer.3} parent=75 // pred_check
          %p1349 = pneg %p188
        $region78: #{transformer_decoder_layer.3} parent=75 // pred_check_branch
          %1351 = sbr.rel (%p1349) target = $region80
        $region79: #{transformer_decoder_layer.3} parent=75 // pred_region
          %s1352 = sand.u32 %s173, 1
          %s1353 = scalar_lea.sflag [#allocation5], %s1352
          %s1354 = sand.u32 %s173, 1
          %s1355 = smul.addr %s1354, 8
          %s1356 = scalar_lea.vmem [#allocation14], %s1355
          %1357 = dma.done %s1353, 128
        $region80: #{transformer_decoder_layer.3} parent=75 // pred_fallthru
          _
      $region76: #{transformer_decoder_layer.3} parent=5 // pred_fallthru
        _
    $region6: #{transformer_decoder_layer.3} parent=1 // loop_footer
      %s27 = sadd.s32 1, %s23
    $region7: #{transformer_decoder_layer.3} parent=1 // loop_footer_branch
      %22 = sbr.rel target = $region3
    $region8: #{transformer_decoder_layer.3} parent=1 // loop_exit
      _
    %1358 = vsyncpa [#allocation4], 1
    %s1359 = scalar_lea.sflag [#allocation4], 1
    %1360 = vsyncpa %s1359, 1
    %1361 = vsyncpa [#allocation7], 1
    %s1362 = scalar_lea.sflag [#allocation7], 1
    %1363 = vsyncpa %s1362, 1
    %1364 = vsyncpa [#allocation10], 1
    %1365 = vsyncpa [#allocation13], 1
    %1366 = vsyncpa [#allocation5], 1
    %s1367 = scalar_lea.sflag [#allocation5], 1
    %1368 = vsyncpa %s1367, 1

</llo_original>
